<compile_context>
chip_gen: v7x
topology: tpu7x:2x2x1
jax: 0.10.0
libtpu: 0.0.40
codegen_flags: <defaults>
</compile_context>

<pallas_src>
import functools

import jax
import jax.numpy as jnp
from jax.experimental import pallas as pl
from jax.experimental.pallas import tpu as pltpu

_LANE = 128
_SUBLANE = 8
_GATE_REORDER = (0, 1, 3, 2)    # PyTorch (i, f, g, o) -> (i, f, o, g)


def _round_up(n, m):
    return ((n + m - 1) // m) * m


# ---------------------------------------------------------------------------
# Fused Pallas kernel: all LSTM layers + FC head in one invocation.
# ---------------------------------------------------------------------------
def _fused_lstm_fc_kernel(x_ref, wih_ref, whh_ref, b_ref, wfc_ref, bfc_ref,
                          out_ref, gates_scr, hseq_scr, h_scr, c_scr,
                          *, seq_len, batch_p, feat_p, num_layers):
    T, Bp, P, L = seq_len, batch_p, feat_p, num_layers

    for layer in range(L):
        layer_in = x_ref[...] if layer == 0 else hseq_scr[...]

        # Hoisted input projection for every timestep at once:
        #   (T*Bp, P) @ (P, 4P) + bias  ->  MXU sees M = T*Bp rows, not Bp,
        # and the bias add disappears from the sequential loop.
        gates_scr[...] = (
            jnp.dot(layer_in, wih_ref[layer],
                    preferred_element_type=jnp.float32)
            + b_ref[layer]
        )

        h_scr[...] = jnp.zeros_like(h_scr)
        c_scr[...] = jnp.zeros_like(c_scr)
        w_hh = whh_ref[layer]                                   # (P, 4P)

        for t in range(T):                       # sequential recurrence only
            g_pre = gates_scr[t * Bp:(t + 1) * Bp, :] + jnp.dot(
                h_scr[...], w_hh, preferred_element_type=jnp.float32)

            # Gate layout (i, f, o | g): one sigmoid over 3P contiguous lanes,
            # one tanh over P lanes, all slices 128-lane aligned.
            sig = jax.nn.sigmoid(g_pre[:, :3 * P])
            i_g = sig[:, 0 * P:1 * P]
            f_g = sig[:, 1 * P:2 * P]
            o_g = sig[:, 2 * P:3 * P]
            g_g = jnp.tanh(g_pre[:, 3 * P:])

            c_new = f_g * c_scr[...] + i_g * g_g
            h_new = o_g * jnp.tanh(c_new)
            c_scr[...] = c_new
            h_scr[...] = h_new
            if layer < L - 1:        # last layer only needs h at t == T-1
                hseq_scr[t * Bp:(t + 1) * Bp, :] = h_new

    # FC head on out[:, -1, :] == last-layer hidden state at the final step.
    out_ref[...] = (
        jnp.dot(h_scr[...], wfc_ref[...], preferred_element_type=jnp.float32)
        + bfc_ref[...]
    )


# ---------------------------------------------------------------------------
# Weight preparation (transpose, gate-reorder, tile padding)
# ---------------------------------------------------------------------------
def _prep_gate_matrix(w, hidden, feat_p):
    """w: (4H, in_dim) PyTorch layout -> (feat_p, 4*feat_p), gate order (i,f,o,g)."""
    H = hidden
    in_dim = w.shape[1]
    w = w.reshape(4, H, in_dim)[jnp.array(_GATE_REORDER)]
    w = jnp.pad(w, ((0, 0), (0, feat_p - H), (0, feat_p - in_dim)))
    return jnp.transpose(w, (2, 0, 1)).reshape(feat_p, 4 * feat_p)


def _prep_gate_bias(b_ih, b_hh, hidden, feat_p):
    H = hidden
    b = (b_ih + b_hh).reshape(4, H)[jnp.array(_GATE_REORDER)]
    b = jnp.pad(b, ((0, 0), (0, feat_p - H)))
    return b.reshape(1, 4 * feat_p)


# ---------------------------------------------------------------------------
# Model forward (eval semantics of LSTMModel.forward)
# ---------------------------------------------------------------------------
def lstm_model_forward(x, params):
    """x: (B, T, input_dim) batch-first, like nn.LSTM(batch_first=True).

    Implements: out, _ = lstm(x, (zeros, zeros)); out = fc(out[:, -1, :]).
    # TODO(synk): inter-layer dropout (p=0.4, training mode only) not implemented.
    """
    x = x.astype(jnp.float32)
    B, T, D = x.shape
    layers = params["lstm"]
    L = len(layers)
    H = layers[0]["w_hh"].shape[1]
    O = params["fc_w"].shape[0]

    P = _round_up(max(D, H), _LANE)      # shared feature (lane) padding
    Bp = _round_up(B, _SUBLANE)          # sublane padding
    OP = _round_up(O, _LANE)             # lane-dense FC output

    # Time-major, batch- and lane-padded input: (T*Bp, P).  Padded gate
    # columns carry zero weights/bias, so padded h/c lanes stay exactly 0.
    x_tm = jnp.transpose(x, (1, 0, 2))
    x_tm = jnp.pad(x_tm, ((0, 0), (0, Bp - B), (0, P - D)))
    x_tm = x_tm.reshape(T * Bp, P)

    wih = jnp.stack([_prep_gate_matrix(l["w_ih"], H, P) for l in layers])
    whh = jnp.stack([_prep_gate_matrix(l["w_hh"], H, P) for l in layers])
    bias = jnp.stack([_prep_gate_bias(l["b_ih"], l["b_hh"], H, P)
                      for l in layers])

    wfc = jnp.pad(jnp.transpose(params["fc_w"]), ((0, P - H), (0, OP - O)))
    bfc = jnp.pad(params["fc_b"], (0, OP - O)).reshape(1, OP)

    kernel = functools.partial(_fused_lstm_fc_kernel,
                               seq_len=T, batch_p=Bp, feat_p=P, num_layers=L)

    out_p = pl.pallas_call(
        kernel,
        out_shape=jax.ShapeDtypeStruct((Bp, OP), jnp.float32),
        in_specs=[
            pl.BlockSpec((T * Bp, P), lambda: (0, 0)),
            pl.BlockSpec((L, P, 4 * P), lambda: (0, 0, 0)),
            pl.BlockSpec((L, P, 4 * P), lambda: (0, 0, 0)),
            pl.BlockSpec((L, 1, 4 * P), lambda: (0, 0, 0)),
            pl.BlockSpec((P, OP), lambda: (0, 0)),
            pl.BlockSpec((1, OP), lambda: (0, 0)),
        ],
        out_specs=pl.BlockSpec((Bp, OP), lambda: (0, 0)),
        scratch_shapes=[
            pltpu.VMEM((T * Bp, 4 * P), jnp.float32),   # hoisted gate pre-acts
            pltpu.VMEM((T * Bp, P), jnp.float32),       # inter-layer hidden seq
            pltpu.VMEM((Bp, P), jnp.float32),           # h state
            pltpu.VMEM((Bp, P), jnp.float32),           # c state
        ],
        compiler_params=pltpu.CompilerParams(
            vmem_limit_bytes=32 * 1024 * 1024,
        ),
    )(x_tm, wih, whh, bias, wfc, bfc)

    return out_p[:B, :O]


# ---------------------------------------------------------------------------
# Pure-JAX reference (for correctness check)
# ---------------------------------------------------------------------------
def _reference_forward(x, params):
    x = x.astype(jnp.float32)
    B = x.shape[0]
    h_seq = jnp.transpose(x, (1, 0, 2))                       # (T, B, D)
    for layer in params["lstm"]:
        w_ih, w_hh = layer["w_ih"], layer["w_hh"]
        bias = layer["b_ih"] + layer["b_hh"]
        H = w_hh.shape[1]
        h = jnp.zeros((B, H), jnp.float32)
        c = jnp.zeros((B, H), jnp.float32)
        outs = []
        for t in range(h_seq.shape[0]):
            gates = h_seq[t] @ w_ih.T + h @ w_hh.T + bias
            i = jax.nn.sigmoid(gates[:, 0 * H:1 * H])
            f = jax.nn.sigmoid(gates[:, 1 * H:2 * H])
            g = jnp.tanh(gates[:, 2 * H:3 * H])
            o = jax.nn.sigmoid(gates[:, 3 * H:4 * H])
            c = f * c + i * g
            h = o * jnp.tanh(c)
            outs.append(h)
        h_seq = jnp.stack(outs)
    return h_seq[-1] @ params["fc_w"].T + params["fc_b"]


# ---------------------------------------------------------------------------
# Deterministic parameter init (PyTorch-style uniform(-1/sqrt(H), 1/sqrt(H)))
# ---------------------------------------------------------------------------
def init_params(key, input_dim, hidden_dim, num_layers, output_dim):
    bound = 1.0 / jnp.sqrt(jnp.float32(hidden_dim))
    layers = []
    for l in range(num_layers):
        in_d = input_dim if l == 0 else hidden_dim
        key, k1, k2, k3, k4 = jax.random.split(key, 5)
        layers.append({
            "w_ih": jax.random.uniform(k1, (4 * hidden_dim, in_d),
                                       jnp.float32, -bound, bound),
            "w_hh": jax.random.uniform(k2, (4 * hidden_dim, hidden_dim),
                                       jnp.float32, -bound, bound),
            "b_ih": jax.random.uniform(k3, (4 * hidden_dim,),
                                       jnp.float32, -bound, bound),
            "b_hh": jax.random.uniform(k4, (4 * hidden_dim,),
                                       jnp.float32, -bound, bound),
        })
    key, kw, kb = jax.random.split(key, 3)
    fc_w = jax.random.uniform(kw, (output_dim, hidden_dim),
                              jnp.float32, -bound, bound)
    fc_b = jax.random.uniform(kb, (output_dim,),
                              jnp.float32, -bound, bound)
    return {"lstm": layers, "fc_w": fc_w, "fc_b": fc_b}


# ---------------------------------------------------------------------------
if __name__ == "__main__":
    batch, seq, input_dim = 2, 8, 16
    hidden_dim, num_layers, output_dim = 32, 2, 4

    params = init_params(jax.random.PRNGKey(42),
                         input_dim, hidden_dim, num_layers, output_dim)
    x = jax.random.normal(jax.random.PRNGKey(0),
                          (batch, seq, input_dim), dtype=jnp.float32)

    out = lstm_model_forward(x, params)
    jax.block_until_ready(out)
    assert out.shape == (batch, output_dim), out.shape

    ref = _reference_forward(x, params)
    err = float(jnp.max(jnp.abs(out - ref)))
    assert err < 1e-2, f"max abs err vs reference: {err}"
    print("KERNEL_OK")
</pallas_src>

<mosaic_0001>
module attributes {stable_mosaic.version = 11 : i64} {
  func.func @_fused_lstm_fc_kernel(%arg0: memref<64x128xf32, #tpu.memory_space<vmem>>, %arg1: memref<2x128x512xf32, #tpu.memory_space<vmem>>, %arg2: memref<2x128x512xf32, #tpu.memory_space<vmem>>, %arg3: memref<2x1x512xf32, #tpu.memory_space<vmem>>, %arg4: memref<128x128xf32, #tpu.memory_space<vmem>>, %arg5: memref<1x128xf32, #tpu.memory_space<vmem>>, %arg6: memref<8x128xf32, #tpu.memory_space<vmem>>, %arg7: memref<64x512xf32, #tpu.memory_space<vmem>>, %arg8: memref<64x128xf32, #tpu.memory_space<vmem>>, %arg9: memref<8x128xf32, #tpu.memory_space<vmem>>, %arg10: memref<8x128xf32, #tpu.memory_space<vmem>>) attributes {dimension_semantics = [], scalar_prefetch = 0 : i64, scratch_operands = 4 : i64, tpu.core_type = #tpu.core_type<tc>} {
    %c0 = arith.constant 0 : index
    %c0_0 = arith.constant 0 : index
    %0 = vector.load %arg0[%c0, %c0_0] : memref<64x128xf32, #tpu.memory_space<vmem>>, vector<64x128xf32>
    %c0_1 = arith.constant 0 : index
    %c0_2 = arith.constant 0 : index
    %c0_3 = arith.constant 0 : index
    %1 = vector.load %arg1[%c0_1, %c0_2, %c0_3] : memref<2x128x512xf32, #tpu.memory_space<vmem>>, vector<1x128x512xf32>
    %2 = vector.shape_cast %1 : vector<1x128x512xf32> to vector<128x512xf32>
    %cst = arith.constant dense<0.000000e+00> : vector<64x512xf32>
    %3 = tpu.matmul %0, %2, %cst {dimension_numbers = #tpu.dot_dimension_numbers<[1], [0], [0], [1], [0, 0, 1, 1], [], []>} : vector<64x128xf32>, vector<128x512xf32>, vector<64x512xf32> -> vector<64x512xf32>
    %c0_4 = arith.constant 0 : index
    %c0_5 = arith.constant 0 : index
    %c0_6 = arith.constant 0 : index
    %4 = vector.load %arg3[%c0_4, %c0_5, %c0_6] : memref<2x1x512xf32, #tpu.memory_space<vmem>>, vector<1x1x512xf32>
    %5 = vector.shape_cast %4 : vector<1x1x512xf32> to vector<1x512xf32>
    %6 = vector.broadcast %5 : vector<1x512xf32> to vector<64x512xf32>
    %7 = arith.addf %3, %6 : vector<64x512xf32>
    %c0_7 = arith.constant 0 : index
    %c0_8 = arith.constant 0 : index
    %8 = vector.load %arg7[%c0_7, %c0_8] : memref<64x512xf32, #tpu.memory_space<vmem>>, vector<64x512xf32>
    tpu.vector_store %arg7[%c0_7, %c0_8], %7 {strides = array<i32>} : memref<64x512xf32, #tpu.memory_space<vmem>>, vector<64x512xf32>,
    %cst_9 = arith.constant 0.000000e+00 : f32
    %9 = vector.broadcast %cst_9 : f32 to vector<8x128xf32>
    %c0_10 = arith.constant 0 : index
    %c0_11 = arith.constant 0 : index
    %10 = vector.load %arg9[%c0_10, %c0_11] : memref<8x128xf32, #tpu.memory_space<vmem>>, vector<8x128xf32>
    tpu.vector_store %arg9[%c0_10, %c0_11], %9 {strides = array<i32>} : memref<8x128xf32, #tpu.memory_space<vmem>>, vector<8x128xf32>,
    %cst_12 = arith.constant 0.000000e+00 : f32
    %11 = vector.broadcast %cst_12 : f32 to vector<8x128xf32>
    %c0_13 = arith.constant 0 : index
    %c0_14 = arith.constant 0 : index
    %12 = vector.load %arg10[%c0_13, %c0_14] : memref<8x128xf32, #tpu.memory_space<vmem>>, vector<8x128xf32>
    tpu.vector_store %arg10[%c0_13, %c0_14], %11 {strides = array<i32>} : memref<8x128xf32, #tpu.memory_space<vmem>>, vector<8x128xf32>,
    %c0_15 = arith.constant 0 : index
    %c0_16 = arith.constant 0 : index
    %c0_17 = arith.constant 0 : index
    %13 = vector.load %arg2[%c0_15, %c0_16, %c0_17] : memref<2x128x512xf32, #tpu.memory_space<vmem>>, vector<1x128x512xf32>
    %14 = vector.shape_cast %13 : vector<1x128x512xf32> to vector<128x512xf32>
    %c0_18 = arith.constant 0 : index
    %c0_19 = arith.constant 0 : index
    %15 = vector.load %arg7[%c0_18, %c0_19] : memref<64x512xf32, #tpu.memory_space<vmem>>, vector<8x512xf32>
    %c0_20 = arith.constant 0 : index
    %c0_21 = arith.constant 0 : index
    %16 = vector.load %arg9[%c0_20, %c0_21] : memref<8x128xf32, #tpu.memory_space<vmem>>, vector<8x128xf32>
    %cst_22 = arith.constant dense<0.000000e+00> : vector<8x512xf32>
    %17 = tpu.matmul %16, %14, %cst_22 {dimension_numbers = #tpu.dot_dimension_numbers<[1], [0], [0], [1], [0, 0, 1, 1], [], []>} : vector<8x128xf32>, vector<128x512xf32>, vector<8x512xf32> -> vector<8x512xf32>
    %18 = arith.addf %15, %17 : vector<8x512xf32>
    %19 = vector.extract_strided_slice %18 {offsets = [0, 0], sizes = [8, 384], strides = [1, 1]} : vector<8x512xf32> to vector<8x384xf32>
    %20 = arith.negf %19 : vector<8x384xf32>
    %21 = math.exp %20 : vector<8x384xf32>
    %cst_23 = arith.constant 1.000000e+00 : f32
    %22 = vector.broadcast %cst_23 : f32 to vector<8x384xf32>
    %23 = arith.addf %22, %21 : vector<8x384xf32>
    %24 = arith.divf %22, %23 : vector<8x384xf32>
    %25 = vector.extract_strided_slice %24 {offsets = [0, 0], sizes = [8, 128], strides = [1, 1]} : vector<8x384xf32> to vector<8x128xf32>
    %26 = vector.extract_strided_slice %24 {offsets = [0, 128], sizes = [8, 128], strides = [1, 1]} : vector<8x384xf32> to vector<8x128xf32>
    %27 = vector.extract_strided_slice %24 {offsets = [0, 256], sizes = [8, 128], strides = [1, 1]} : vector<8x384xf32> to vector<8x128xf32>
    %28 = vector.extract_strided_slice %18 {offsets = [0, 384], sizes = [8, 128], strides = [1, 1]} : vector<8x512xf32> to vector<8x128xf32>
    %29 = math.tanh %28 : vector<8x128xf32>
    %c0_24 = arith.constant 0 : index
    %c0_25 = arith.constant 0 : index
    %30 = vector.load %arg10[%c0_24, %c0_25] : memref<8x128xf32, #tpu.memory_space<vmem>>, vector<8x128xf32>
    %31 = arith.mulf %26, %30 : vector<8x128xf32>
    %32 = arith.mulf %25, %29 : vector<8x128xf32>
    %33 = arith.addf %31, %32 : vector<8x128xf32>
    %34 = math.tanh %33 : vector<8x128xf32>
    %35 = arith.mulf %27, %34 : vector<8x128xf32>
    %c0_26 = arith.constant 0 : index
    %c0_27 = arith.constant 0 : index
    %36 = vector.load %arg10[%c0_26, %c0_27] : memref<8x128xf32, #tpu.memory_space<vmem>>, vector<8x128xf32>
    tpu.vector_store %arg10[%c0_26, %c0_27], %33 {strides = array<i32>} : memref<8x128xf32, #tpu.memory_space<vmem>>, vector<8x128xf32>,
    %c0_28 = arith.constant 0 : index
    %c0_29 = arith.constant 0 : index
    %37 = vector.load %arg9[%c0_28, %c0_29] : memref<8x128xf32, #tpu.memory_space<vmem>>, vector<8x128xf32>
    tpu.vector_store %arg9[%c0_28, %c0_29], %35 {strides = array<i32>} : memref<8x128xf32, #tpu.memory_space<vmem>>, vector<8x128xf32>,
    %c0_30 = arith.constant 0 : index
    %c0_31 = arith.constant 0 : index
    %38 = vector.load %arg8[%c0_30, %c0_31] : memref<64x128xf32, #tpu.memory_space<vmem>>, vector<8x128xf32>
    tpu.vector_store %arg8[%c0_30, %c0_31], %35 {strides = array<i32>} : memref<64x128xf32, #tpu.memory_space<vmem>>, vector<8x128xf32>,
    %c8 = arith.constant 8 : index
    %c0_32 = arith.constant 0 : index
    %39 = vector.load %arg7[%c8, %c0_32] : memref<64x512xf32, #tpu.memory_space<vmem>>, vector<8x512xf32>
    %c0_33 = arith.constant 0 : index
    %c0_34 = arith.constant 0 : index
    %40 = vector.load %arg9[%c0_33, %c0_34] : memref<8x128xf32, #tpu.memory_space<vmem>>, vector<8x128xf32>
    %cst_35 = arith.constant dense<0.000000e+00> : vector<8x512xf32>
    %41 = tpu.matmul %40, %14, %cst_35 {dimension_numbers = #tpu.dot_dimension_numbers<[1], [0], [0], [1], [0, 0, 1, 1], [], []>} : vector<8x128xf32>, vector<128x512xf32>, vector<8x512xf32> -> vector<8x512xf32>
    %42 = arith.addf %39, %41 : vector<8x512xf32>
    %43 = vector.extract_strided_slice %42 {offsets = [0, 0], sizes = [8, 384], strides = [1, 1]} : vector<8x512xf32> to vector<8x384xf32>
    %44 = arith.negf %43 : vector<8x384xf32>
    %45 = math.exp %44 : vector<8x384xf32>
    %cst_36 = arith.constant 1.000000e+00 : f32
    %46 = vector.broadcast %cst_36 : f32 to vector<8x384xf32>
    %47 = arith.addf %46, %45 : vector<8x384xf32>
    %48 = arith.divf %46, %47 : vector<8x384xf32>
    %49 = vector.extract_strided_slice %48 {offsets = [0, 0], sizes = [8, 128], strides = [1, 1]} : vector<8x384xf32> to vector<8x128xf32>
    %50 = vector.extract_strided_slice %48 {offsets = [0, 128], sizes = [8, 128], strides = [1, 1]} : vector<8x384xf32> to vector<8x128xf32>
    %51 = vector.extract_strided_slice %48 {offsets = [0, 256], sizes = [8, 128], strides = [1, 1]} : vector<8x384xf32> to vector<8x128xf32>
    %52 = vector.extract_strided_slice %42 {offsets = [0, 384], sizes = [8, 128], strides = [1, 1]} : vector<8x512xf32> to vector<8x128xf32>
    %53 = math.tanh %52 : vector<8x128xf32>
    %c0_37 = arith.constant 0 : index
    %c0_38 = arith.constant 0 : index
    %54 = vector.load %arg10[%c0_37, %c0_38] : memref<8x128xf32, #tpu.memory_space<vmem>>, vector<8x128xf32>
    %55 = arith.mulf %50, %54 : vector<8x128xf32>
    %56 = arith.mulf %49, %53 : vector<8x128xf32>
    %57 = arith.addf %55, %56 : vector<8x128xf32>
    %58 = math.tanh %57 : vector<8x128xf32>
    %59 = arith.mulf %51, %58 : vector<8x128xf32>
    %c0_39 = arith.constant 0 : index
    %c0_40 = arith.constant 0 : index
    %60 = vector.load %arg10[%c0_39, %c0_40] : memref<8x128xf32, #tpu.memory_space<vmem>>, vector<8x128xf32>
    tpu.vector_store %arg10[%c0_39, %c0_40], %57 {strides = array<i32>} : memref<8x128xf32, #tpu.memory_space<vmem>>, vector<8x128xf32>,
    %c0_41 = arith.constant 0 : index
    %c0_42 = arith.constant 0 : index
    %61 = vector.load %arg9[%c0_41, %c0_42] : memref<8x128xf32, #tpu.memory_space<vmem>>, vector<8x128xf32>
    tpu.vector_store %arg9[%c0_41, %c0_42], %59 {strides = array<i32>} : memref<8x128xf32, #tpu.memory_space<vmem>>, vector<8x128xf32>,
    %c8_43 = arith.constant 8 : index
    %c0_44 = arith.constant 0 : index
    %62 = vector.load %arg8[%c8_43, %c0_44] : memref<64x128xf32, #tpu.memory_space<vmem>>, vector<8x128xf32>
    tpu.vector_store %arg8[%c8_43, %c0_44], %59 {strides = array<i32>} : memref<64x128xf32, #tpu.memory_space<vmem>>, vector<8x128xf32>,
    %c16 = arith.constant 16 : index
    %c0_45 = arith.constant 0 : index
    %63 = vector.load %arg7[%c16, %c0_45] : memref<64x512xf32, #tpu.memory_space<vmem>>, vector<8x512xf32>
    %c0_46 = arith.constant 0 : index
    %c0_47 = arith.constant 0 : index
    %64 = vector.load %arg9[%c0_46, %c0_47] : memref<8x128xf32, #tpu.memory_space<vmem>>, vector<8x128xf32>
    %cst_48 = arith.constant dense<0.000000e+00> : vector<8x512xf32>
    %65 = tpu.matmul %64, %14, %cst_48 {dimension_numbers = #tpu.dot_dimension_numbers<[1], [0], [0], [1], [0, 0, 1, 1], [], []>} : vector<8x128xf32>, vector<128x512xf32>, vector<8x512xf32> -> vector<8x512xf32>
    %66 = arith.addf %63, %65 : vector<8x512xf32>
    %67 = vector.extract_strided_slice %66 {offsets = [0, 0], sizes = [8, 384], strides = [1, 1]} : vector<8x512xf32> to vector<8x384xf32>
    %68 = arith.negf %67 : vector<8x384xf32>
    %69 = math.exp %68 : vector<8x384xf32>
    %cst_49 = arith.constant 1.000000e+00 : f32
    %70 = vector.broadcast %cst_49 : f32 to vector<8x384xf32>
    %71 = arith.addf %70, %69 : vector<8x384xf32>
    %72 = arith.divf %70, %71 : vector<8x384xf32>
    %73 = vector.extract_strided_slice %72 {offsets = [0, 0], sizes = [8, 128], strides = [1, 1]} : vector<8x384xf32> to vector<8x128xf32>
    %74 = vector.extract_strided_slice %72 {offsets = [0, 128], sizes = [8, 128], strides = [1, 1]} : vector<8x384xf32> to vector<8x128xf32>
    %75 = vector.extract_strided_slice %72 {offsets = [0, 256], sizes = [8, 128], strides = [1, 1]} : vector<8x384xf32> to vector<8x128xf32>
    %76 = vector.extract_strided_slice %66 {offsets = [0, 384], sizes = [8, 128], strides = [1, 1]} : vector<8x512xf32> to vector<8x128xf32>
    %77 = math.tanh %76 : vector<8x128xf32>
    %c0_50 = arith.constant 0 : index
    %c0_51 = arith.constant 0 : index
    %78 = vector.load %arg10[%c0_50, %c0_51] : memref<8x128xf32, #tpu.memory_space<vmem>>, vector<8x128xf32>
    %79 = arith.mulf %74, %78 : vector<8x128xf32>
    %80 = arith.mulf %73, %77 : vector<8x128xf32>
    %81 = arith.addf %79, %80 : vector<8x128xf32>
    %82 = math.tanh %81 : vector<8x128xf32>
    %83 = arith.mulf %75, %82 : vector<8x128xf32>
    %c0_52 = arith.constant 0 : index
    %c0_53 = arith.constant 0 : index
    %84 = vector.load %arg10[%c0_52, %c0_53] : memref<8x128xf32, #tpu.memory_space<vmem>>, vector<8x128xf32>
    tpu.vector_store %arg10[%c0_52, %c0_53], %81 {strides = array<i32>} : memref<8x128xf32, #tpu.memory_space<vmem>>, vector<8x128xf32>,
    %c0_54 = arith.constant 0 : index
    %c0_55 = arith.constant 0 : index
    %85 = vector.load %arg9[%c0_54, %c0_55] : memref<8x128xf32, #tpu.memory_space<vmem>>, vector<8x128xf32>
    tpu.vector_store %arg9[%c0_54, %c0_55], %83 {strides = array<i32>} : memref<8x128xf32, #tpu.memory_space<vmem>>, vector<8x128xf32>,
    %c16_56 = arith.constant 16 : index
    %c0_57 = arith.constant 0 : index
    %86 = vector.load %arg8[%c16_56, %c0_57] : memref<64x128xf32, #tpu.memory_space<vmem>>, vector<8x128xf32>
    tpu.vector_store %arg8[%c16_56, %c0_57], %83 {strides = array<i32>} : memref<64x128xf32, #tpu.memory_space<vmem>>, vector<8x128xf32>,
    %c24 = arith.constant 24 : index
    %c0_58 = arith.constant 0 : index
    %87 = vector.load %arg7[%c24, %c0_58] : memref<64x512xf32, #tpu.memory_space<vmem>>, vector<8x512xf32>
    %c0_59 = arith.constant 0 : index
    %c0_60 = arith.constant 0 : index
    %88 = vector.load %arg9[%c0_59, %c0_60] : memref<8x128xf32, #tpu.memory_space<vmem>>, vector<8x128xf32>
    %cst_61 = arith.constant dense<0.000000e+00> : vector<8x512xf32>
    %89 = tpu.matmul %88, %14, %cst_61 {dimension_numbers = #tpu.dot_dimension_numbers<[1], [0], [0], [1], [0, 0, 1, 1], [], []>} : vector<8x128xf32>, vector<128x512xf32>, vector<8x512xf32> -> vector<8x512xf32>
    %90 = arith.addf %87, %89 : vector<8x512xf32>
    %91 = vector.extract_strided_slice %90 {offsets = [0, 0], sizes = [8, 384], strides = [1, 1]} : vector<8x512xf32> to vector<8x384xf32>
    %92 = arith.negf %91 : vector<8x384xf32>
    %93 = math.exp %92 : vector<8x384xf32>
    %cst_62 = arith.constant 1.000000e+00 : f32
    %94 = vector.broadcast %cst_62 : f32 to vector<8x384xf32>
    %95 = arith.addf %94, %93 : vector<8x384xf32>
    %96 = arith.divf %94, %95 : vector<8x384xf32>
    %97 = vector.extract_strided_slice %96 {offsets = [0, 0], sizes = [8, 128], strides = [1, 1]} : vector<8x384xf32> to vector<8x128xf32>
    %98 = vector.extract_strided_slice %96 {offsets = [0, 128], sizes = [8, 128], strides = [1, 1]} : vector<8x384xf32> to vector<8x128xf32>
    %99 = vector.extract_strided_slice %96 {offsets = [0, 256], sizes = [8, 128], strides = [1, 1]} : vector<8x384xf32> to vector<8x128xf32>
    %100 = vector.extract_strided_slice %90 {offsets = [0, 384], sizes = [8, 128], strides = [1, 1]} : vector<8x512xf32> to vector<8x128xf32>
    %101 = math.tanh %100 : vector<8x128xf32>
    %c0_63 = arith.constant 0 : index
    %c0_64 = arith.constant 0 : index
    %102 = vector.load %arg10[%c0_63, %c0_64] : memref<8x128xf32, #tpu.memory_space<vmem>>, vector<8x128xf32>
    %103 = arith.mulf %98, %102 : vector<8x128xf32>
    %104 = arith.mulf %97, %101 : vector<8x128xf32>
    %105 = arith.addf %103, %104 : vector<8x128xf32>
    %106 = math.tanh %105 : vector<8x128xf32>
    %107 = arith.mulf %99, %106 : vector<8x128xf32>
    %c0_65 = arith.constant 0 : index
    %c0_66 = arith.constant 0 : index
    %108 = vector.load %arg10[%c0_65, %c0_66] : memref<8x128xf32, #tpu.memory_space<vmem>>, vector<8x128xf32>
    tpu.vector_store %arg10[%c0_65, %c0_66], %105 {strides = array<i32>} : memref<8x128xf32, #tpu.memory_space<vmem>>, vector<8x128xf32>,
    %c0_67 = arith.constant 0 : index
    %c0_68 = arith.constant 0 : index
    %109 = vector.load %arg9[%c0_67, %c0_68] : memref<8x128xf32, #tpu.memory_space<vmem>>, vector<8x128xf32>
    tpu.vector_store %arg9[%c0_67, %c0_68], %107 {strides = array<i32>} : memref<8x128xf32, #tpu.memory_space<vmem>>, vector<8x128xf32>,
    %c24_69 = arith.constant 24 : index
    %c0_70 = arith.constant 0 : index
    %110 = vector.load %arg8[%c24_69, %c0_70] : memref<64x128xf32, #tpu.memory_space<vmem>>, vector<8x128xf32>
    tpu.vector_store %arg8[%c24_69, %c0_70], %107 {strides = array<i32>} : memref<64x128xf32, #tpu.memory_space<vmem>>, vector<8x128xf32>,
    %c32 = arith.constant 32 : index
    %c0_71 = arith.constant 0 : index
    %111 = vector.load %arg7[%c32, %c0_71] : memref<64x512xf32, #tpu.memory_space<vmem>>, vector<8x512xf32>
    %c0_72 = arith.constant 0 : index
    %c0_73 = arith.constant 0 : index
    %112 = vector.load %arg9[%c0_72, %c0_73] : memref<8x128xf32, #tpu.memory_space<vmem>>, vector<8x128xf32>
    %cst_74 = arith.constant dense<0.000000e+00> : vector<8x512xf32>
    %113 = tpu.matmul %112, %14, %cst_74 {dimension_numbers = #tpu.dot_dimension_numbers<[1], [0], [0], [1], [0, 0, 1, 1], [], []>} : vector<8x128xf32>, vector<128x512xf32>, vector<8x512xf32> -> vector<8x512xf32>
    %114 = arith.addf %111, %113 : vector<8x512xf32>
    %115 = vector.extract_strided_slice %114 {offsets = [0, 0], sizes = [8, 384], strides = [1, 1]} : vector<8x512xf32> to vector<8x384xf32>
    %116 = arith.negf %115 : vector<8x384xf32>
    %117 = math.exp %116 : vector<8x384xf32>
    %cst_75 = arith.constant 1.000000e+00 : f32
    %118 = vector.broadcast %cst_75 : f32 to vector<8x384xf32>
    %119 = arith.addf %118, %117 : vector<8x384xf32>
    %120 = arith.divf %118, %119 : vector<8x384xf32>
    %121 = vector.extract_strided_slice %120 {offsets = [0, 0], sizes = [8, 128], strides = [1, 1]} : vector<8x384xf32> to vector<8x128xf32>
    %122 = vector.extract_strided_slice %120 {offsets = [0, 128], sizes = [8, 128], strides = [1, 1]} : vector<8x384xf32> to vector<8x128xf32>
    %123 = vector.extract_strided_slice %120 {offsets = [0, 256], sizes = [8, 128], strides = [1, 1]} : vector<8x384xf32> to vector<8x128xf32>
    %124 = vector.extract_strided_slice %114 {offsets = [0, 384], sizes = [8, 128], strides = [1, 1]} : vector<8x512xf32> to vector<8x128xf32>
    %125 = math.tanh %124 : vector<8x128xf32>
    %c0_76 = arith.constant 0 : index
    %c0_77 = arith.constant 0 : index
    %126 = vector.load %arg10[%c0_76, %c0_77] : memref<8x128xf32, #tpu.memory_space<vmem>>, vector<8x128xf32>
    %127 = arith.mulf %122, %126 : vector<8x128xf32>
    %128 = arith.mulf %121, %125 : vector<8x128xf32>
    %129 = arith.addf %127, %128 : vector<8x128xf32>
    %130 = math.tanh %129 : vector<8x128xf32>
    %131 = arith.mulf %123, %130 : vector<8x128xf32>
    %c0_78 = arith.constant 0 : index
    %c0_79 = arith.constant 0 : index
    %132 = vector.load %arg10[%c0_78, %c0_79] : memref<8x128xf32, #tpu.memory_space<vmem>>, vector<8x128xf32>
    tpu.vector_store %arg10[%c0_78, %c0_79], %129 {strides = array<i32>} : memref<8x128xf32, #tpu.memory_space<vmem>>, vector<8x128xf32>,
    %c0_80 = arith.constant 0 : index
    %c0_81 = arith.constant 0 : index
    %133 = vector.load %arg9[%c0_80, %c0_81] : memref<8x128xf32, #tpu.memory_space<vmem>>, vector<8x128xf32>
    tpu.vector_store %arg9[%c0_80, %c0_81], %131 {strides = array<i32>} : memref<8x128xf32, #tpu.memory_space<vmem>>, vector<8x128xf32>,
    %c32_82 = arith.constant 32 : index
    %c0_83 = arith.constant 0 : index
    %134 = vector.load %arg8[%c32_82, %c0_83] : memref<64x128xf32, #tpu.memory_space<vmem>>, vector<8x128xf32>
    tpu.vector_store %arg8[%c32_82, %c0_83], %131 {strides = array<i32>} : memref<64x128xf32, #tpu.memory_space<vmem>>, vector<8x128xf32>,
    %c40 = arith.constant 40 : index
    %c0_84 = arith.constant 0 : index
    %135 = vector.load %arg7[%c40, %c0_84] : memref<64x512xf32, #tpu.memory_space<vmem>>, vector<8x512xf32>
    %c0_85 = arith.constant 0 : index
    %c0_86 = arith.constant 0 : index
    %136 = vector.load %arg9[%c0_85, %c0_86] : memref<8x128xf32, #tpu.memory_space<vmem>>, vector<8x128xf32>
    %cst_87 = arith.constant dense<0.000000e+00> : vector<8x512xf32>
    %137 = tpu.matmul %136, %14, %cst_87 {dimension_numbers = #tpu.dot_dimension_numbers<[1], [0], [0], [1], [0, 0, 1, 1], [], []>} : vector<8x128xf32>, vector<128x512xf32>, vector<8x512xf32> -> vector<8x512xf32>
    %138 = arith.addf %135, %137 : vector<8x512xf32>
    %139 = vector.extract_strided_slice %138 {offsets = [0, 0], sizes = [8, 384], strides = [1, 1]} : vector<8x512xf32> to vector<8x384xf32>
    %140 = arith.negf %139 : vector<8x384xf32>
    %141 = math.exp %140 : vector<8x384xf32>
    %cst_88 = arith.constant 1.000000e+00 : f32
    %142 = vector.broadcast %cst_88 : f32 to vector<8x384xf32>
    %143 = arith.addf %142, %141 : vector<8x384xf32>
    %144 = arith.divf %142, %143 : vector<8x384xf32>
    %145 = vector.extract_strided_slice %144 {offsets = [0, 0], sizes = [8, 128], strides = [1, 1]} : vector<8x384xf32> to vector<8x128xf32>
    %146 = vector.extract_strided_slice %144 {offsets = [0, 128], sizes = [8, 128], strides = [1, 1]} : vector<8x384xf32> to vector<8x128xf32>
    %147 = vector.extract_strided_slice %144 {offsets = [0, 256], sizes = [8, 128], strides = [1, 1]} : vector<8x384xf32> to vector<8x128xf32>
    %148 = vector.extract_strided_slice %138 {offsets = [0, 384], sizes = [8, 128], strides = [1, 1]} : vector<8x512xf32> to vector<8x128xf32>
    %149 = math.tanh %148 : vector<8x128xf32>
    %c0_89 = arith.constant 0 : index
    %c0_90 = arith.constant 0 : index
    %150 = vector.load %arg10[%c0_89, %c0_90] : memref<8x128xf32, #tpu.memory_space<vmem>>, vector<8x128xf32>
    %151 = arith.mulf %146, %150 : vector<8x128xf32>
    %152 = arith.mulf %145, %149 : vector<8x128xf32>
    %153 = arith.addf %151, %152 : vector<8x128xf32>
    %154 = math.tanh %153 : vector<8x128xf32>
    %155 = arith.mulf %147, %154 : vector<8x128xf32>
    %c0_91 = arith.constant 0 : index
    %c0_92 = arith.constant 0 : index
    %156 = vector.load %arg10[%c0_91, %c0_92] : memref<8x128xf32, #tpu.memory_space<vmem>>, vector<8x128xf32>
    tpu.vector_store %arg10[%c0_91, %c0_92], %153 {strides = array<i32>} : memref<8x128xf32, #tpu.memory_space<vmem>>, vector<8x128xf32>,
    %c0_93 = arith.constant 0 : index
    %c0_94 = arith.constant 0 : index
    %157 = vector.load %arg9[%c0_93, %c0_94] : memref<8x128xf32, #tpu.memory_space<vmem>>, vector<8x128xf32>
    tpu.vector_store %arg9[%c0_93, %c0_94], %155 {strides = array<i32>} : memref<8x128xf32, #tpu.memory_space<vmem>>, vector<8x128xf32>,
    %c40_95 = arith.constant 40 : index
    %c0_96 = arith.constant 0 : index
    %158 = vector.load %arg8[%c40_95, %c0_96] : memref<64x128xf32, #tpu.memory_space<vmem>>, vector<8x128xf32>
    tpu.vector_store %arg8[%c40_95, %c0_96], %155 {strides = array<i32>} : memref<64x128xf32, #tpu.memory_space<vmem>>, vector<8x128xf32>,
    %c48 = arith.constant 48 : index
    %c0_97 = arith.constant 0 : index
    %159 = vector.load %arg7[%c48, %c0_97] : memref<64x512xf32, #tpu.memory_space<vmem>>, vector<8x512xf32>
    %c0_98 = arith.constant 0 : index
    %c0_99 = arith.constant 0 : index
    %160 = vector.load %arg9[%c0_98, %c0_99] : memref<8x128xf32, #tpu.memory_space<vmem>>, vector<8x128xf32>
    %cst_100 = arith.constant dense<0.000000e+00> : vector<8x512xf32>
    %161 = tpu.matmul %160, %14, %cst_100 {dimension_numbers = #tpu.dot_dimension_numbers<[1], [0], [0], [1], [0, 0, 1, 1], [], []>} : vector<8x128xf32>, vector<128x512xf32>, vector<8x512xf32> -> vector<8x512xf32>
    %162 = arith.addf %159, %161 : vector<8x512xf32>
    %163 = vector.extract_strided_slice %162 {offsets = [0, 0], sizes = [8, 384], strides = [1, 1]} : vector<8x512xf32> to vector<8x384xf32>
    %164 = arith.negf %163 : vector<8x384xf32>
    %165 = math.exp %164 : vector<8x384xf32>
    %cst_101 = arith.constant 1.000000e+00 : f32
    %166 = vector.broadcast %cst_101 : f32 to vector<8x384xf32>
    %167 = arith.addf %166, %165 : vector<8x384xf32>
    %168 = arith.divf %166, %167 : vector<8x384xf32>
    %169 = vector.extract_strided_slice %168 {offsets = [0, 0], sizes = [8, 128], strides = [1, 1]} : vector<8x384xf32> to vector<8x128xf32>
    %170 = vector.extract_strided_slice %168 {offsets = [0, 128], sizes = [8, 128], strides = [1, 1]} : vector<8x384xf32> to vector<8x128xf32>
    %171 = vector.extract_strided_slice %168 {offsets = [0, 256], sizes = [8, 128], strides = [1, 1]} : vector<8x384xf32> to vector<8x128xf32>
    %172 = vector.extract_strided_slice %162 {offsets = [0, 384], sizes = [8, 128], strides = [1, 1]} : vector<8x512xf32> to vector<8x128xf32>
    %173 = math.tanh %172 : vector<8x128xf32>
    %c0_102 = arith.constant 0 : index
    %c0_103 = arith.constant 0 : index
    %174 = vector.load %arg10[%c0_102, %c0_103] : memref<8x128xf32, #tpu.memory_space<vmem>>, vector<8x128xf32>
    %175 = arith.mulf %170, %174 : vector<8x128xf32>
    %176 = arith.mulf %169, %173 : vector<8x128xf32>
    %177 = arith.addf %175, %176 : vector<8x128xf32>
    %178 = math.tanh %177 : vector<8x128xf32>
    %179 = arith.mulf %171, %178 : vector<8x128xf32>
    %c0_104 = arith.constant 0 : index
    %c0_105 = arith.constant 0 : index
    %180 = vector.load %arg10[%c0_104, %c0_105] : memref<8x128xf32, #tpu.memory_space<vmem>>, vector<8x128xf32>
    tpu.vector_store %arg10[%c0_104, %c0_105], %177 {strides = array<i32>} : memref<8x128xf32, #tpu.memory_space<vmem>>, vector<8x128xf32>,
    %c0_106 = arith.constant 0 : index
    %c0_107 = arith.constant 0 : index
    %181 = vector.load %arg9[%c0_106, %c0_107] : memref<8x128xf32, #tpu.memory_space<vmem>>, vector<8x128xf32>
    tpu.vector_store %arg9[%c0_106, %c0_107], %179 {strides = array<i32>} : memref<8x128xf32, #tpu.memory_space<vmem>>, vector<8x128xf32>,
    %c48_108 = arith.constant 48 : index
    %c0_109 = arith.constant 0 : index
    %182 = vector.load %arg8[%c48_108, %c0_109] : memref<64x128xf32, #tpu.memory_space<vmem>>, vector<8x128xf32>
    tpu.vector_store %arg8[%c48_108, %c0_109], %179 {strides = array<i32>} : memref<64x128xf32, #tpu.memory_space<vmem>>, vector<8x128xf32>,
    %c56 = arith.constant 56 : index
    %c0_110 = arith.constant 0 : index
    %183 = vector.load %arg7[%c56, %c0_110] : memref<64x512xf32, #tpu.memory_space<vmem>>, vector<8x512xf32>
    %c0_111 = arith.constant 0 : index
    %c0_112 = arith.constant 0 : index
    %184 = vector.load %arg9[%c0_111, %c0_112] : memref<8x128xf32, #tpu.memory_space<vmem>>, vector<8x128xf32>
    %cst_113 = arith.constant dense<0.000000e+00> : vector<8x512xf32>
    %185 = tpu.matmul %184, %14, %cst_113 {dimension_numbers = #tpu.dot_dimension_numbers<[1], [0], [0], [1], [0, 0, 1, 1], [], []>} : vector<8x128xf32>, vector<128x512xf32>, vector<8x512xf32> -> vector<8x512xf32>
    %186 = arith.addf %183, %185 : vector<8x512xf32>
    %187 = vector.extract_strided_slice %186 {offsets = [0, 0], sizes = [8, 384], strides = [1, 1]} : vector<8x512xf32> to vector<8x384xf32>
    %188 = arith.negf %187 : vector<8x384xf32>
    %189 = math.exp %188 : vector<8x384xf32>
    %cst_114 = arith.constant 1.000000e+00 : f32
    %190 = vector.broadcast %cst_114 : f32 to vector<8x384xf32>
    %191 = arith.addf %190, %189 : vector<8x384xf32>
    %192 = arith.divf %190, %191 : vector<8x384xf32>
    %193 = vector.extract_strided_slice %192 {offsets = [0, 0], sizes = [8, 128], strides = [1, 1]} : vector<8x384xf32> to vector<8x128xf32>
    %194 = vector.extract_strided_slice %192 {offsets = [0, 128], sizes = [8, 128], strides = [1, 1]} : vector<8x384xf32> to vector<8x128xf32>
    %195 = vector.extract_strided_slice %192 {offsets = [0, 256], sizes = [8, 128], strides = [1, 1]} : vector<8x384xf32> to vector<8x128xf32>
    %196 = vector.extract_strided_slice %186 {offsets = [0, 384], sizes = [8, 128], strides = [1, 1]} : vector<8x512xf32> to vector<8x128xf32>
    %197 = math.tanh %196 : vector<8x128xf32>
    %c0_115 = arith.constant 0 : index
    %c0_116 = arith.constant 0 : index
    %198 = vector.load %arg10[%c0_115, %c0_116] : memref<8x128xf32, #tpu.memory_space<vmem>>, vector<8x128xf32>
    %199 = arith.mulf %194, %198 : vector<8x128xf32>
    %200 = arith.mulf %193, %197 : vector<8x128xf32>
    %201 = arith.addf %199, %200 : vector<8x128xf32>
    %202 = math.tanh %201 : vector<8x128xf32>
    %203 = arith.mulf %195, %202 : vector<8x128xf32>
    %c0_117 = arith.constant 0 : index
    %c0_118 = arith.constant 0 : index
    %204 = vector.load %arg10[%c0_117, %c0_118] : memref<8x128xf32, #tpu.memory_space<vmem>>, vector<8x128xf32>
    tpu.vector_store %arg10[%c0_117, %c0_118], %201 {strides = array<i32>} : memref<8x128xf32, #tpu.memory_space<vmem>>, vector<8x128xf32>,
    %c0_119 = arith.constant 0 : index
    %c0_120 = arith.constant 0 : index
    %205 = vector.load %arg9[%c0_119, %c0_120] : memref<8x128xf32, #tpu.memory_space<vmem>>, vector<8x128xf32>
    tpu.vector_store %arg9[%c0_119, %c0_120], %203 {strides = array<i32>} : memref<8x128xf32, #tpu.memory_space<vmem>>, vector<8x128xf32>,
    %c56_121 = arith.constant 56 : index
    %c0_122 = arith.constant 0 : index
    %206 = vector.load %arg8[%c56_121, %c0_122] : memref<64x128xf32, #tpu.memory_space<vmem>>, vector<8x128xf32>
    tpu.vector_store %arg8[%c56_121, %c0_122], %203 {strides = array<i32>} : memref<64x128xf32, #tpu.memory_space<vmem>>, vector<8x128xf32>,
    %c0_123 = arith.constant 0 : index
    %c0_124 = arith.constant 0 : index
    %207 = vector.load %arg8[%c0_123, %c0_124] : memref<64x128xf32, #tpu.memory_space<vmem>>, vector<64x128xf32>
    %c1 = arith.constant 1 : index
    %c0_125 = arith.constant 0 : index
    %c0_126 = arith.constant 0 : index
    %208 = vector.load %arg1[%c1, %c0_125, %c0_126] : memref<2x128x512xf32, #tpu.memory_space<vmem>>, vector<1x128x512xf32>
    %209 = vector.shape_cast %208 : vector<1x128x512xf32> to vector<128x512xf32>
    %cst_127 = arith.constant dense<0.000000e+00> : vector<64x512xf32>
    %210 = tpu.matmul %207, %209, %cst_127 {dimension_numbers = #tpu.dot_dimension_numbers<[1], [0], [0], [1], [0, 0, 1, 1], [], []>} : vector<64x128xf32>, vector<128x512xf32>, vector<64x512xf32> -> vector<64x512xf32>
    %c1_128 = arith.constant 1 : index
    %c0_129 = arith.constant 0 : index
    %c0_130 = arith.constant 0 : index
    %211 = vector.load %arg3[%c1_128, %c0_129, %c0_130] : memref<2x1x512xf32, #tpu.memory_space<vmem>>, vector<1x1x512xf32>
    %212 = vector.shape_cast %211 : vector<1x1x512xf32> to vector<1x512xf32>
    %213 = vector.broadcast %212 : vector<1x512xf32> to vector<64x512xf32>
    %214 = arith.addf %210, %213 : vector<64x512xf32>
    %c0_131 = arith.constant 0 : index
    %c0_132 = arith.constant 0 : index
    %215 = vector.load %arg7[%c0_131, %c0_132] : memref<64x512xf32, #tpu.memory_space<vmem>>, vector<64x512xf32>
    tpu.vector_store %arg7[%c0_131, %c0_132], %214 {strides = array<i32>} : memref<64x512xf32, #tpu.memory_space<vmem>>, vector<64x512xf32>,
    %cst_133 = arith.constant 0.000000e+00 : f32
    %216 = vector.broadcast %cst_133 : f32 to vector<8x128xf32>
    %c0_134 = arith.constant 0 : index
    %c0_135 = arith.constant 0 : index
    %217 = vector.load %arg9[%c0_134, %c0_135] : memref<8x128xf32, #tpu.memory_space<vmem>>, vector<8x128xf32>
    tpu.vector_store %arg9[%c0_134, %c0_135], %216 {strides = array<i32>} : memref<8x128xf32, #tpu.memory_space<vmem>>, vector<8x128xf32>,
    %cst_136 = arith.constant 0.000000e+00 : f32
    %218 = vector.broadcast %cst_136 : f32 to vector<8x128xf32>
    %c0_137 = arith.constant 0 : index
    %c0_138 = arith.constant 0 : index
    %219 = vector.load %arg10[%c0_137, %c0_138] : memref<8x128xf32, #tpu.memory_space<vmem>>, vector<8x128xf32>
    tpu.vector_store %arg10[%c0_137, %c0_138], %218 {strides = array<i32>} : memref<8x128xf32, #tpu.memory_space<vmem>>, vector<8x128xf32>,
    %c1_139 = arith.constant 1 : index
    %c0_140 = arith.constant 0 : index
    %c0_141 = arith.constant 0 : index
    %220 = vector.load %arg2[%c1_139, %c0_140, %c0_141] : memref<2x128x512xf32, #tpu.memory_space<vmem>>, vector<1x128x512xf32>
    %221 = vector.shape_cast %220 : vector<1x128x512xf32> to vector<128x512xf32>
    %c0_142 = arith.constant 0 : index
    %c0_143 = arith.constant 0 : index
    %222 = vector.load %arg7[%c0_142, %c0_143] : memref<64x512xf32, #tpu.memory_space<vmem>>, vector<8x512xf32>
    %c0_144 = arith.constant 0 : index
    %c0_145 = arith.constant 0 : index
    %223 = vector.load %arg9[%c0_144, %c0_145] : memref<8x128xf32, #tpu.memory_space<vmem>>, vector<8x128xf32>
    %cst_146 = arith.constant dense<0.000000e+00> : vector<8x512xf32>
    %224 = tpu.matmul %223, %221, %cst_146 {dimension_numbers = #tpu.dot_dimension_numbers<[1], [0], [0], [1], [0, 0, 1, 1], [], []>} : vector<8x128xf32>, vector<128x512xf32>, vector<8x512xf32> -> vector<8x512xf32>
    %225 = arith.addf %222, %224 : vector<8x512xf32>
    %226 = vector.extract_strided_slice %225 {offsets = [0, 0], sizes = [8, 384], strides = [1, 1]} : vector<8x512xf32> to vector<8x384xf32>
    %227 = arith.negf %226 : vector<8x384xf32>
    %228 = math.exp %227 : vector<8x384xf32>
    %cst_147 = arith.constant 1.000000e+00 : f32
    %229 = vector.broadcast %cst_147 : f32 to vector<8x384xf32>
    %230 = arith.addf %229, %228 : vector<8x384xf32>
    %231 = arith.divf %229, %230 : vector<8x384xf32>
    %232 = vector.extract_strided_slice %231 {offsets = [0, 0], sizes = [8, 128], strides = [1, 1]} : vector<8x384xf32> to vector<8x128xf32>
    %233 = vector.extract_strided_slice %231 {offsets = [0, 128], sizes = [8, 128], strides = [1, 1]} : vector<8x384xf32> to vector<8x128xf32>
    %234 = vector.extract_strided_slice %231 {offsets = [0, 256], sizes = [8, 128], strides = [1, 1]} : vector<8x384xf32> to vector<8x128xf32>
    %235 = vector.extract_strided_slice %225 {offsets = [0, 384], sizes = [8, 128], strides = [1, 1]} : vector<8x512xf32> to vector<8x128xf32>
    %236 = math.tanh %235 : vector<8x128xf32>
    %c0_148 = arith.constant 0 : index
    %c0_149 = arith.constant 0 : index
    %237 = vector.load %arg10[%c0_148, %c0_149] : memref<8x128xf32, #tpu.memory_space<vmem>>, vector<8x128xf32>
    %238 = arith.mulf %233, %237 : vector<8x128xf32>
    %239 = arith.mulf %232, %236 : vector<8x128xf32>
    %240 = arith.addf %238, %239 : vector<8x128xf32>
    %241 = math.tanh %240 : vector<8x128xf32>
    %242 = arith.mulf %234, %241 : vector<8x128xf32>
    %c0_150 = arith.constant 0 : index
    %c0_151 = arith.constant 0 : index
    %243 = vector.load %arg10[%c0_150, %c0_151] : memref<8x128xf32, #tpu.memory_space<vmem>>, vector<8x128xf32>
    tpu.vector_store %arg10[%c0_150, %c0_151], %240 {strides = array<i32>} : memref<8x128xf32, #tpu.memory_space<vmem>>, vector<8x128xf32>,
    %c0_152 = arith.constant 0 : index
    %c0_153 = arith.constant 0 : index
    %244 = vector.load %arg9[%c0_152, %c0_153] : memref<8x128xf32, #tpu.memory_space<vmem>>, vector<8x128xf32>
    tpu.vector_store %arg9[%c0_152, %c0_153], %242 {strides = array<i32>} : memref<8x128xf32, #tpu.memory_space<vmem>>, vector<8x128xf32>,
    %c8_154 = arith.constant 8 : index
    %c0_155 = arith.constant 0 : index
    %245 = vector.load %arg7[%c8_154, %c0_155] : memref<64x512xf32, #tpu.memory_space<vmem>>, vector<8x512xf32>
    %c0_156 = arith.constant 0 : index
    %c0_157 = arith.constant 0 : index
    %246 = vector.load %arg9[%c0_156, %c0_157] : memref<8x128xf32, #tpu.memory_space<vmem>>, vector<8x128xf32>
    %cst_158 = arith.constant dense<0.000000e+00> : vector<8x512xf32>
    %247 = tpu.matmul %246, %221, %cst_158 {dimension_numbers = #tpu.dot_dimension_numbers<[1], [0], [0], [1], [0, 0, 1, 1], [], []>} : vector<8x128xf32>, vector<128x512xf32>, vector<8x512xf32> -> vector<8x512xf32>
    %248 = arith.addf %245, %247 : vector<8x512xf32>
    %249 = vector.extract_strided_slice %248 {offsets = [0, 0], sizes = [8, 384], strides = [1, 1]} : vector<8x512xf32> to vector<8x384xf32>
    %250 = arith.negf %249 : vector<8x384xf32>
    %251 = math.exp %250 : vector<8x384xf32>
    %cst_159 = arith.constant 1.000000e+00 : f32
    %252 = vector.broadcast %cst_159 : f32 to vector<8x384xf32>
    %253 = arith.addf %252, %251 : vector<8x384xf32>
    %254 = arith.divf %252, %253 : vector<8x384xf32>
    %255 = vector.extract_strided_slice %254 {offsets = [0, 0], sizes = [8, 128], strides = [1, 1]} : vector<8x384xf32> to vector<8x128xf32>
    %256 = vector.extract_strided_slice %254 {offsets = [0, 128], sizes = [8, 128], strides = [1, 1]} : vector<8x384xf32> to vector<8x128xf32>
    %257 = vector.extract_strided_slice %254 {offsets = [0, 256], sizes = [8, 128], strides = [1, 1]} : vector<8x384xf32> to vector<8x128xf32>
    %258 = vector.extract_strided_slice %248 {offsets = [0, 384], sizes = [8, 128], strides = [1, 1]} : vector<8x512xf32> to vector<8x128xf32>
    %259 = math.tanh %258 : vector<8x128xf32>
    %c0_160 = arith.constant 0 : index
    %c0_161 = arith.constant 0 : index
    %260 = vector.load %arg10[%c0_160, %c0_161] : memref<8x128xf32, #tpu.memory_space<vmem>>, vector<8x128xf32>
    %261 = arith.mulf %256, %260 : vector<8x128xf32>
    %262 = arith.mulf %255, %259 : vector<8x128xf32>
    %263 = arith.addf %261, %262 : vector<8x128xf32>
    %264 = math.tanh %263 : vector<8x128xf32>
    %265 = arith.mulf %257, %264 : vector<8x128xf32>
    %c0_162 = arith.constant 0 : index
    %c0_163 = arith.constant 0 : index
    %266 = vector.load %arg10[%c0_162, %c0_163] : memref<8x128xf32, #tpu.memory_space<vmem>>, vector<8x128xf32>
    tpu.vector_store %arg10[%c0_162, %c0_163], %263 {strides = array<i32>} : memref<8x128xf32, #tpu.memory_space<vmem>>, vector<8x128xf32>,
    %c0_164 = arith.constant 0 : index
    %c0_165 = arith.constant 0 : index
    %267 = vector.load %arg9[%c0_164, %c0_165] : memref<8x128xf32, #tpu.memory_space<vmem>>, vector<8x128xf32>
    tpu.vector_store %arg9[%c0_164, %c0_165], %265 {strides = array<i32>} : memref<8x128xf32, #tpu.memory_space<vmem>>, vector<8x128xf32>,
    %c16_166 = arith.constant 16 : index
    %c0_167 = arith.constant 0 : index
    %268 = vector.load %arg7[%c16_166, %c0_167] : memref<64x512xf32, #tpu.memory_space<vmem>>, vector<8x512xf32>
    %c0_168 = arith.constant 0 : index
    %c0_169 = arith.constant 0 : index
    %269 = vector.load %arg9[%c0_168, %c0_169] : memref<8x128xf32, #tpu.memory_space<vmem>>, vector<8x128xf32>
    %cst_170 = arith.constant dense<0.000000e+00> : vector<8x512xf32>
    %270 = tpu.matmul %269, %221, %cst_170 {dimension_numbers = #tpu.dot_dimension_numbers<[1], [0], [0], [1], [0, 0, 1, 1], [], []>} : vector<8x128xf32>, vector<128x512xf32>, vector<8x512xf32> -> vector<8x512xf32>
    %271 = arith.addf %268, %270 : vector<8x512xf32>
    %272 = vector.extract_strided_slice %271 {offsets = [0, 0], sizes = [8, 384], strides = [1, 1]} : vector<8x512xf32> to vector<8x384xf32>
    %273 = arith.negf %272 : vector<8x384xf32>
    %274 = math.exp %273 : vector<8x384xf32>
    %cst_171 = arith.constant 1.000000e+00 : f32
    %275 = vector.broadcast %cst_171 : f32 to vector<8x384xf32>
    %276 = arith.addf %275, %274 : vector<8x384xf32>
    %277 = arith.divf %275, %276 : vector<8x384xf32>
    %278 = vector.extract_strided_slice %277 {offsets = [0, 0], sizes = [8, 128], strides = [1, 1]} : vector<8x384xf32> to vector<8x128xf32>
    %279 = vector.extract_strided_slice %277 {offsets = [0, 128], sizes = [8, 128], strides = [1, 1]} : vector<8x384xf32> to vector<8x128xf32>
    %280 = vector.extract_strided_slice %277 {offsets = [0, 256], sizes = [8, 128], strides = [1, 1]} : vector<8x384xf32> to vector<8x128xf32>
    %281 = vector.extract_strided_slice %271 {offsets = [0, 384], sizes = [8, 128], strides = [1, 1]} : vector<8x512xf32> to vector<8x128xf32>
    %282 = math.tanh %281 : vector<8x128xf32>
    %c0_172 = arith.constant 0 : index
    %c0_173 = arith.constant 0 : index
    %283 = vector.load %arg10[%c0_172, %c0_173] : memref<8x128xf32, #tpu.memory_space<vmem>>, vector<8x128xf32>
    %284 = arith.mulf %279, %283 : vector<8x128xf32>
    %285 = arith.mulf %278, %282 : vector<8x128xf32>
    %286 = arith.addf %284, %285 : vector<8x128xf32>
    %287 = math.tanh %286 : vector<8x128xf32>
    %288 = arith.mulf %280, %287 : vector<8x128xf32>
    %c0_174 = arith.constant 0 : index
    %c0_175 = arith.constant 0 : index
    %289 = vector.load %arg10[%c0_174, %c0_175] : memref<8x128xf32, #tpu.memory_space<vmem>>, vector<8x128xf32>
    tpu.vector_store %arg10[%c0_174, %c0_175], %286 {strides = array<i32>} : memref<8x128xf32, #tpu.memory_space<vmem>>, vector<8x128xf32>,
    %c0_176 = arith.constant 0 : index
    %c0_177 = arith.constant 0 : index
    %290 = vector.load %arg9[%c0_176, %c0_177] : memref<8x128xf32, #tpu.memory_space<vmem>>, vector<8x128xf32>
    tpu.vector_store %arg9[%c0_176, %c0_177], %288 {strides = array<i32>} : memref<8x128xf32, #tpu.memory_space<vmem>>, vector<8x128xf32>,
    %c24_178 = arith.constant 24 : index
    %c0_179 = arith.constant 0 : index
    %291 = vector.load %arg7[%c24_178, %c0_179] : memref<64x512xf32, #tpu.memory_space<vmem>>, vector<8x512xf32>
    %c0_180 = arith.constant 0 : index
    %c0_181 = arith.constant 0 : index
    %292 = vector.load %arg9[%c0_180, %c0_181] : memref<8x128xf32, #tpu.memory_space<vmem>>, vector<8x128xf32>
    %cst_182 = arith.constant dense<0.000000e+00> : vector<8x512xf32>
    %293 = tpu.matmul %292, %221, %cst_182 {dimension_numbers = #tpu.dot_dimension_numbers<[1], [0], [0], [1], [0, 0, 1, 1], [], []>} : vector<8x128xf32>, vector<128x512xf32>, vector<8x512xf32> -> vector<8x512xf32>
    %294 = arith.addf %291, %293 : vector<8x512xf32>
    %295 = vector.extract_strided_slice %294 {offsets = [0, 0], sizes = [8, 384], strides = [1, 1]} : vector<8x512xf32> to vector<8x384xf32>
    %296 = arith.negf %295 : vector<8x384xf32>
    %297 = math.exp %296 : vector<8x384xf32>
    %cst_183 = arith.constant 1.000000e+00 : f32
    %298 = vector.broadcast %cst_183 : f32 to vector<8x384xf32>
    %299 = arith.addf %298, %297 : vector<8x384xf32>
    %300 = arith.divf %298, %299 : vector<8x384xf32>
    %301 = vector.extract_strided_slice %300 {offsets = [0, 0], sizes = [8, 128], strides = [1, 1]} : vector<8x384xf32> to vector<8x128xf32>
    %302 = vector.extract_strided_slice %300 {offsets = [0, 128], sizes = [8, 128], strides = [1, 1]} : vector<8x384xf32> to vector<8x128xf32>
    %303 = vector.extract_strided_slice %300 {offsets = [0, 256], sizes = [8, 128], strides = [1, 1]} : vector<8x384xf32> to vector<8x128xf32>
    %304 = vector.extract_strided_slice %294 {offsets = [0, 384], sizes = [8, 128], strides = [1, 1]} : vector<8x512xf32> to vector<8x128xf32>
    %305 = math.tanh %304 : vector<8x128xf32>
    %c0_184 = arith.constant 0 : index
    %c0_185 = arith.constant 0 : index
    %306 = vector.load %arg10[%c0_184, %c0_185] : memref<8x128xf32, #tpu.memory_space<vmem>>, vector<8x128xf32>
    %307 = arith.mulf %302, %306 : vector<8x128xf32>
    %308 = arith.mulf %301, %305 : vector<8x128xf32>
    %309 = arith.addf %307, %308 : vector<8x128xf32>
    %310 = math.tanh %309 : vector<8x128xf32>
    %311 = arith.mulf %303, %310 : vector<8x128xf32>
    %c0_186 = arith.constant 0 : index
    %c0_187 = arith.constant 0 : index
    %312 = vector.load %arg10[%c0_186, %c0_187] : memref<8x128xf32, #tpu.memory_space<vmem>>, vector<8x128xf32>
    tpu.vector_store %arg10[%c0_186, %c0_187], %309 {strides = array<i32>} : memref<8x128xf32, #tpu.memory_space<vmem>>, vector<8x128xf32>,
    %c0_188 = arith.constant 0 : index
    %c0_189 = arith.constant 0 : index
    %313 = vector.load %arg9[%c0_188, %c0_189] : memref<8x128xf32, #tpu.memory_space<vmem>>, vector<8x128xf32>
    tpu.vector_store %arg9[%c0_188, %c0_189], %311 {strides = array<i32>} : memref<8x128xf32, #tpu.memory_space<vmem>>, vector<8x128xf32>,
    %c32_190 = arith.constant 32 : index
    %c0_191 = arith.constant 0 : index
    %314 = vector.load %arg7[%c32_190, %c0_191] : memref<64x512xf32, #tpu.memory_space<vmem>>, vector<8x512xf32>
    %c0_192 = arith.constant 0 : index
    %c0_193 = arith.constant 0 : index
    %315 = vector.load %arg9[%c0_192, %c0_193] : memref<8x128xf32, #tpu.memory_space<vmem>>, vector<8x128xf32>
    %cst_194 = arith.constant dense<0.000000e+00> : vector<8x512xf32>
    %316 = tpu.matmul %315, %221, %cst_194 {dimension_numbers = #tpu.dot_dimension_numbers<[1], [0], [0], [1], [0, 0, 1, 1], [], []>} : vector<8x128xf32>, vector<128x512xf32>, vector<8x512xf32> -> vector<8x512xf32>
    %317 = arith.addf %314, %316 : vector<8x512xf32>
    %318 = vector.extract_strided_slice %317 {offsets = [0, 0], sizes = [8, 384], strides = [1, 1]} : vector<8x512xf32> to vector<8x384xf32>
    %319 = arith.negf %318 : vector<8x384xf32>
    %320 = math.exp %319 : vector<8x384xf32>
    %cst_195 = arith.constant 1.000000e+00 : f32
    %321 = vector.broadcast %cst_195 : f32 to vector<8x384xf32>
    %322 = arith.addf %321, %320 : vector<8x384xf32>
    %323 = arith.divf %321, %322 : vector<8x384xf32>
    %324 = vector.extract_strided_slice %323 {offsets = [0, 0], sizes = [8, 128], strides = [1, 1]} : vector<8x384xf32> to vector<8x128xf32>
    %325 = vector.extract_strided_slice %323 {offsets = [0, 128], sizes = [8, 128], strides = [1, 1]} : vector<8x384xf32> to vector<8x128xf32>
    %326 = vector.extract_strided_slice %323 {offsets = [0, 256], sizes = [8, 128], strides = [1, 1]} : vector<8x384xf32> to vector<8x128xf32>
    %327 = vector.extract_strided_slice %317 {offsets = [0, 384], sizes = [8, 128], strides = [1, 1]} : vector<8x512xf32> to vector<8x128xf32>
    %328 = math.tanh %327 : vector<8x128xf32>
    %c0_196 = arith.constant 0 : index
    %c0_197 = arith.constant 0 : index
    %329 = vector.load %arg10[%c0_196, %c0_197] : memref<8x128xf32, #tpu.memory_space<vmem>>, vector<8x128xf32>
    %330 = arith.mulf %325, %329 : vector<8x128xf32>
    %331 = arith.mulf %324, %328 : vector<8x128xf32>
    %332 = arith.addf %330, %331 : vector<8x128xf32>
    %333 = math.tanh %332 : vector<8x128xf32>
    %334 = arith.mulf %326, %333 : vector<8x128xf32>
    %c0_198 = arith.constant 0 : index
    %c0_199 = arith.constant 0 : index
    %335 = vector.load %arg10[%c0_198, %c0_199] : memref<8x128xf32, #tpu.memory_space<vmem>>, vector<8x128xf32>
    tpu.vector_store %arg10[%c0_198, %c0_199], %332 {strides = array<i32>} : memref<8x128xf32, #tpu.memory_space<vmem>>, vector<8x128xf32>,
    %c0_200 = arith.constant 0 : index
    %c0_201 = arith.constant 0 : index
    %336 = vector.load %arg9[%c0_200, %c0_201] : memref<8x128xf32, #tpu.memory_space<vmem>>, vector<8x128xf32>
    tpu.vector_store %arg9[%c0_200, %c0_201], %334 {strides = array<i32>} : memref<8x128xf32, #tpu.memory_space<vmem>>, vector<8x128xf32>,
    %c40_202 = arith.constant 40 : index
    %c0_203 = arith.constant 0 : index
    %337 = vector.load %arg7[%c40_202, %c0_203] : memref<64x512xf32, #tpu.memory_space<vmem>>, vector<8x512xf32>
    %c0_204 = arith.constant 0 : index
    %c0_205 = arith.constant 0 : index
    %338 = vector.load %arg9[%c0_204, %c0_205] : memref<8x128xf32, #tpu.memory_space<vmem>>, vector<8x128xf32>
    %cst_206 = arith.constant dense<0.000000e+00> : vector<8x512xf32>
    %339 = tpu.matmul %338, %221, %cst_206 {dimension_numbers = #tpu.dot_dimension_numbers<[1], [0], [0], [1], [0, 0, 1, 1], [], []>} : vector<8x128xf32>, vector<128x512xf32>, vector<8x512xf32> -> vector<8x512xf32>
    %340 = arith.addf %337, %339 : vector<8x512xf32>
    %341 = vector.extract_strided_slice %340 {offsets = [0, 0], sizes = [8, 384], strides = [1, 1]} : vector<8x512xf32> to vector<8x384xf32>
    %342 = arith.negf %341 : vector<8x384xf32>
    %343 = math.exp %342 : vector<8x384xf32>
    %cst_207 = arith.constant 1.000000e+00 : f32
    %344 = vector.broadcast %cst_207 : f32 to vector<8x384xf32>
    %345 = arith.addf %344, %343 : vector<8x384xf32>
    %346 = arith.divf %344, %345 : vector<8x384xf32>
    %347 = vector.extract_strided_slice %346 {offsets = [0, 0], sizes = [8, 128], strides = [1, 1]} : vector<8x384xf32> to vector<8x128xf32>
    %348 = vector.extract_strided_slice %346 {offsets = [0, 128], sizes = [8, 128], strides = [1, 1]} : vector<8x384xf32> to vector<8x128xf32>
    %349 = vector.extract_strided_slice %346 {offsets = [0, 256], sizes = [8, 128], strides = [1, 1]} : vector<8x384xf32> to vector<8x128xf32>
    %350 = vector.extract_strided_slice %340 {offsets = [0, 384], sizes = [8, 128], strides = [1, 1]} : vector<8x512xf32> to vector<8x128xf32>
    %351 = math.tanh %350 : vector<8x128xf32>
    %c0_208 = arith.constant 0 : index
    %c0_209 = arith.constant 0 : index
    %352 = vector.load %arg10[%c0_208, %c0_209] : memref<8x128xf32, #tpu.memory_space<vmem>>, vector<8x128xf32>
    %353 = arith.mulf %348, %352 : vector<8x128xf32>
    %354 = arith.mulf %347, %351 : vector<8x128xf32>
    %355 = arith.addf %353, %354 : vector<8x128xf32>
    %356 = math.tanh %355 : vector<8x128xf32>
    %357 = arith.mulf %349, %356 : vector<8x128xf32>
    %c0_210 = arith.constant 0 : index
    %c0_211 = arith.constant 0 : index
    %358 = vector.load %arg10[%c0_210, %c0_211] : memref<8x128xf32, #tpu.memory_space<vmem>>, vector<8x128xf32>
    tpu.vector_store %arg10[%c0_210, %c0_211], %355 {strides = array<i32>} : memref<8x128xf32, #tpu.memory_space<vmem>>, vector<8x128xf32>,
    %c0_212 = arith.constant 0 : index
    %c0_213 = arith.constant 0 : index
    %359 = vector.load %arg9[%c0_212, %c0_213] : memref<8x128xf32, #tpu.memory_space<vmem>>, vector<8x128xf32>
    tpu.vector_store %arg9[%c0_212, %c0_213], %357 {strides = array<i32>} : memref<8x128xf32, #tpu.memory_space<vmem>>, vector<8x128xf32>,
    %c48_214 = arith.constant 48 : index
    %c0_215 = arith.constant 0 : index
    %360 = vector.load %arg7[%c48_214, %c0_215] : memref<64x512xf32, #tpu.memory_space<vmem>>, vector<8x512xf32>
    %c0_216 = arith.constant 0 : index
    %c0_217 = arith.constant 0 : index
    %361 = vector.load %arg9[%c0_216, %c0_217] : memref<8x128xf32, #tpu.memory_space<vmem>>, vector<8x128xf32>
    %cst_218 = arith.constant dense<0.000000e+00> : vector<8x512xf32>
    %362 = tpu.matmul %361, %221, %cst_218 {dimension_numbers = #tpu.dot_dimension_numbers<[1], [0], [0], [1], [0, 0, 1, 1], [], []>} : vector<8x128xf32>, vector<128x512xf32>, vector<8x512xf32> -> vector<8x512xf32>
    %363 = arith.addf %360, %362 : vector<8x512xf32>
    %364 = vector.extract_strided_slice %363 {offsets = [0, 0], sizes = [8, 384], strides = [1, 1]} : vector<8x512xf32> to vector<8x384xf32>
    %365 = arith.negf %364 : vector<8x384xf32>
    %366 = math.exp %365 : vector<8x384xf32>
    %cst_219 = arith.constant 1.000000e+00 : f32
    %367 = vector.broadcast %cst_219 : f32 to vector<8x384xf32>
    %368 = arith.addf %367, %366 : vector<8x384xf32>
    %369 = arith.divf %367, %368 : vector<8x384xf32>
    %370 = vector.extract_strided_slice %369 {offsets = [0, 0], sizes = [8, 128], strides = [1, 1]} : vector<8x384xf32> to vector<8x128xf32>
    %371 = vector.extract_strided_slice %369 {offsets = [0, 128], sizes = [8, 128], strides = [1, 1]} : vector<8x384xf32> to vector<8x128xf32>
    %372 = vector.extract_strided_slice %369 {offsets = [0, 256], sizes = [8, 128], strides = [1, 1]} : vector<8x384xf32> to vector<8x128xf32>
    %373 = vector.extract_strided_slice %363 {offsets = [0, 384], sizes = [8, 128], strides = [1, 1]} : vector<8x512xf32> to vector<8x128xf32>
    %374 = math.tanh %373 : vector<8x128xf32>
    %c0_220 = arith.constant 0 : index
    %c0_221 = arith.constant 0 : index
    %375 = vector.load %arg10[%c0_220, %c0_221] : memref<8x128xf32, #tpu.memory_space<vmem>>, vector<8x128xf32>
    %376 = arith.mulf %371, %375 : vector<8x128xf32>
    %377 = arith.mulf %370, %374 : vector<8x128xf32>
    %378 = arith.addf %376, %377 : vector<8x128xf32>
    %379 = math.tanh %378 : vector<8x128xf32>
    %380 = arith.mulf %372, %379 : vector<8x128xf32>
    %c0_222 = arith.constant 0 : index
    %c0_223 = arith.constant 0 : index
    %381 = vector.load %arg10[%c0_222, %c0_223] : memref<8x128xf32, #tpu.memory_space<vmem>>, vector<8x128xf32>
    tpu.vector_store %arg10[%c0_222, %c0_223], %378 {strides = array<i32>} : memref<8x128xf32, #tpu.memory_space<vmem>>, vector<8x128xf32>,
    %c0_224 = arith.constant 0 : index
    %c0_225 = arith.constant 0 : index
    %382 = vector.load %arg9[%c0_224, %c0_225] : memref<8x128xf32, #tpu.memory_space<vmem>>, vector<8x128xf32>
    tpu.vector_store %arg9[%c0_224, %c0_225], %380 {strides = array<i32>} : memref<8x128xf32, #tpu.memory_space<vmem>>, vector<8x128xf32>,
    %c56_226 = arith.constant 56 : index
    %c0_227 = arith.constant 0 : index
    %383 = vector.load %arg7[%c56_226, %c0_227] : memref<64x512xf32, #tpu.memory_space<vmem>>, vector<8x512xf32>
    %c0_228 = arith.constant 0 : index
    %c0_229 = arith.constant 0 : index
    %384 = vector.load %arg9[%c0_228, %c0_229] : memref<8x128xf32, #tpu.memory_space<vmem>>, vector<8x128xf32>
    %cst_230 = arith.constant dense<0.000000e+00> : vector<8x512xf32>
    %385 = tpu.matmul %384, %221, %cst_230 {dimension_numbers = #tpu.dot_dimension_numbers<[1], [0], [0], [1], [0, 0, 1, 1], [], []>} : vector<8x128xf32>, vector<128x512xf32>, vector<8x512xf32> -> vector<8x512xf32>
    %386 = arith.addf %383, %385 : vector<8x512xf32>
    %387 = vector.extract_strided_slice %386 {offsets = [0, 0], sizes = [8, 384], strides = [1, 1]} : vector<8x512xf32> to vector<8x384xf32>
    %388 = arith.negf %387 : vector<8x384xf32>
    %389 = math.exp %388 : vector<8x384xf32>
    %cst_231 = arith.constant 1.000000e+00 : f32
    %390 = vector.broadcast %cst_231 : f32 to vector<8x384xf32>
    %391 = arith.addf %390, %389 : vector<8x384xf32>
    %392 = arith.divf %390, %391 : vector<8x384xf32>
    %393 = vector.extract_strided_slice %392 {offsets = [0, 0], sizes = [8, 128], strides = [1, 1]} : vector<8x384xf32> to vector<8x128xf32>
    %394 = vector.extract_strided_slice %392 {offsets = [0, 128], sizes = [8, 128], strides = [1, 1]} : vector<8x384xf32> to vector<8x128xf32>
    %395 = vector.extract_strided_slice %392 {offsets = [0, 256], sizes = [8, 128], strides = [1, 1]} : vector<8x384xf32> to vector<8x128xf32>
    %396 = vector.extract_strided_slice %386 {offsets = [0, 384], sizes = [8, 128], strides = [1, 1]} : vector<8x512xf32> to vector<8x128xf32>
    %397 = math.tanh %396 : vector<8x128xf32>
    %c0_232 = arith.constant 0 : index
    %c0_233 = arith.constant 0 : index
    %398 = vector.load %arg10[%c0_232, %c0_233] : memref<8x128xf32, #tpu.memory_space<vmem>>, vector<8x128xf32>
    %399 = arith.mulf %394, %398 : vector<8x128xf32>
    %400 = arith.mulf %393, %397 : vector<8x128xf32>
    %401 = arith.addf %399, %400 : vector<8x128xf32>
    %402 = math.tanh %401 : vector<8x128xf32>
    %403 = arith.mulf %395, %402 : vector<8x128xf32>
    %c0_234 = arith.constant 0 : index
    %c0_235 = arith.constant 0 : index
    %404 = vector.load %arg10[%c0_234, %c0_235] : memref<8x128xf32, #tpu.memory_space<vmem>>, vector<8x128xf32>
    tpu.vector_store %arg10[%c0_234, %c0_235], %401 {strides = array<i32>} : memref<8x128xf32, #tpu.memory_space<vmem>>, vector<8x128xf32>,
    %c0_236 = arith.constant 0 : index
    %c0_237 = arith.constant 0 : index
    %405 = vector.load %arg9[%c0_236, %c0_237] : memref<8x128xf32, #tpu.memory_space<vmem>>, vector<8x128xf32>
    tpu.vector_store %arg9[%c0_236, %c0_237], %403 {strides = array<i32>} : memref<8x128xf32, #tpu.memory_space<vmem>>, vector<8x128xf32>,
    %c0_238 = arith.constant 0 : index
    %c0_239 = arith.constant 0 : index
    %406 = vector.load %arg9[%c0_238, %c0_239] : memref<8x128xf32, #tpu.memory_space<vmem>>, vector<8x128xf32>
    %c0_240 = arith.constant 0 : index
    %c0_241 = arith.constant 0 : index
    %407 = vector.load %arg4[%c0_240, %c0_241] : memref<128x128xf32, #tpu.memory_space<vmem>>, vector<128x128xf32>
    %cst_242 = arith.constant dense<0.000000e+00> : vector<8x128xf32>
    %408 = tpu.matmul %406, %407, %cst_242 {dimension_numbers = #tpu.dot_dimension_numbers<[1], [0], [0], [1], [0, 0, 1, 1], [], []>} : vector<8x128xf32>, vector<128x128xf32>, vector<8x128xf32> -> vector<8x128xf32>
    %c0_243 = arith.constant 0 : index
    %c0_244 = arith.constant 0 : index
    %409 = vector.load %arg5[%c0_243, %c0_244] : memref<1x128xf32, #tpu.memory_space<vmem>>, vector<1x128xf32>
    %410 = vector.broadcast %409 : vector<1x128xf32> to vector<8x128xf32>
    %411 = arith.addf %408, %410 : vector<8x128xf32>
    %c0_245 = arith.constant 0 : index
    %c0_246 = arith.constant 0 : index
    %412 = vector.load %arg6[%c0_245, %c0_246] : memref<8x128xf32, #tpu.memory_space<vmem>>, vector<8x128xf32>
    tpu.vector_store %arg6[%c0_245, %c0_246], %411 {strides = array<i32>} : memref<8x128xf32, #tpu.memory_space<vmem>>, vector<8x128xf32>,
    return
  }
}

</mosaic_0001>

<llo_original>
// kernel: tpu_custom_call.1
$region0: #{tpu_custom_call.1}
  #allocation0 [shape = 'u32[]', space=smem, size = 0x4, offset = 0x4, fixed_abs, tag = 'smem constant byte address 0x4 - core index']
  #allocation1 [shape = 'u32[144,128]{1,0:T(1,128)}', space=vmem, size = 0x12000, scoped, tag = 'internal scratch']
  #allocation2 [shape = 'f32[64,512]{1,0:T(8,128)}', space=vmem, size = 0x20000, scoped, tag = 'scratch operand']
  #allocation3 [shape = 'f32[64,128]{1,0:T(8,128)}', space=vmem, size = 0x8000, scoped, tag = 'scratch operand']
  #allocation4 [shape = 'f32[8,128]{1,0:T(8,128)}', space=vmem, size = 0x1000, scoped, tag = 'scratch operand']
  #allocation5 [shape = 'f32[8,128]{1,0:T(8,128)}', space=vmem, size = 0x1000, scoped, tag = 'scratch operand']
  %s0 = inlined_call_operand.hbm [shape: f32[64,128], index: 0, kind: input, shape index: {}]
  %s1 = inlined_call_operand.hbm [shape: f32[2,128,512], index: 1, kind: input, shape index: {}]
  %s2 = inlined_call_operand.hbm [shape: f32[2,128,512], index: 2, kind: input, shape index: {}]
  %s3 = inlined_call_operand.vmem [shape: f32[2,1,512], index: 3, kind: input, shape index: {}]
  %s4 = inlined_call_operand.hbm [shape: f32[128,128], index: 4, kind: input, shape index: {}]
  %s5 = inlined_call_operand.vmem [shape: f32[1,128], index: 5, kind: input, shape index: {}]
  %s6 = inlined_call_operand.hbm [shape: f32[8,128], index: 6, kind: output, shape index: {}]
  %s7 = sld [smem:[#allocation0]]
  $region50: #{tpu_custom_call.1} parent=0
    _
  %s9 = ssub.s32 1, %s7
  %s10 = scalar_select 0, %s9, %s7
  $region1: #{tpu_custom_call.1} parent=0
    #allocation6 [shape = 'u8[32768]{0}', space=vmem, size = 0x8000, scoped, tag = 'input window, operand 0, single buffered']
    #allocation7 [shape = 's32[1]{0}', space=sflag, size = 0x4, scoped, tag = 'scoped memory for tpu_custom_call.1']
    #allocation8 [shape = 's32[1]{0}', space=sflag, size = 0x4, scoped, tag = 'scoped memory for tpu_custom_call.1']
    #allocation9 [shape = 'u8[524288]{0}', space=vmem, size = 0x80000, scoped, tag = 'input window, operand 1, single buffered']
    #allocation10 [shape = 's32[1]{0}', space=sflag, size = 0x4, scoped, tag = 'scoped memory for tpu_custom_call.1']
    #allocation11 [shape = 'u8[524288]{0}', space=vmem, size = 0x80000, scoped, tag = 'input window, operand 2, single buffered']
    #allocation12 [shape = 'u8[65536]{0}', space=vmem, size = 0x10000, scoped, tag = 'input window, operand 4, single buffered']
    #allocation13 [shape = 's32[1]{0}', space=sflag, size = 0x4, scoped, tag = 'scoped memory for tpu_custom_call.1']
    #allocation14 [shape = 'u8[4096]{0}', space=vmem, size = 0x1000, scoped, tag = 'output window, operand 0, single buffered']
    %11 = vsyncpa [#allocation7], 0
    %12 = vsyncpa [#allocation10], 0
    %13 = vsyncpa [#allocation13], 0
    %14 = vsyncpa [#allocation8], 0
    // Predicated region
    $region2: #{tpu_custom_call.1} parent=1 // pred_check
      _
    $region3: #{tpu_custom_call.1} parent=1 // pred_check_branch
      %16 = sbr.rel (0) target = $region5
    $region4: #{tpu_custom_call.1} parent=1 // pred_region
      %s18 = ssub.s32 1024, 1024
      %19 = vsyncadd [#allocation7], %s18
      %s20 = sshll.u32 [#allocation6], 4
      %s21 = int_to_ptr.vmem [resolvable:$true] %s20
      %26 = dma.hbm_to_vmem [thread:$0]  %s0, 1024, %s21, [#allocation7], 128, 128, 8
    $region5: #{tpu_custom_call.1} parent=1 // pred_fallthru
      _
    // Predicated region
    $region6: #{tpu_custom_call.1} parent=1 // pred_check
      _
    $region7: #{tpu_custom_call.1} parent=1 // pred_check_branch
      %28 = sbr.rel (0) target = $region9
    $region8: #{tpu_custom_call.1} parent=1 // pred_region
      %s30 = ssub.s32 16384, 16384
      %31 = vsyncadd [#allocation10], %s30
      %s32 = sshll.u32 [#allocation9], 4
      %s33 = int_to_ptr.vmem [resolvable:$true] %s32
      %38 = dma.hbm_to_vmem [thread:$0]  %s1, 16384, %s33, [#allocation10], 512, 512, 32
    $region9: #{tpu_custom_call.1} parent=1 // pred_fallthru
      _
    // Predicated region
    $region10: #{tpu_custom_call.1} parent=1 // pred_check
      _
    $region11: #{tpu_custom_call.1} parent=1 // pred_check_branch
      %40 = sbr.rel (0) target = $region13
    $region12: #{tpu_custom_call.1} parent=1 // pred_region
      %s42 = ssub.s32 16384, 16384
      %43 = vsyncadd [#allocation10], %s42
      %s44 = sshll.u32 [#allocation11], 4
      %s45 = int_to_ptr.vmem [resolvable:$true] %s44
      %50 = dma.hbm_to_vmem [thread:$0]  %s2, 16384, %s45, [#allocation10], 512, 512, 32
    $region13: #{tpu_custom_call.1} parent=1 // pred_fallthru
      _
    // Predicated region
    $region14: #{tpu_custom_call.1} parent=1 // pred_check
      _
    $region15: #{tpu_custom_call.1} parent=1 // pred_check_branch
      %52 = sbr.rel (0) target = $region17
    $region16: #{tpu_custom_call.1} parent=1 // pred_region
      _
    $region17: #{tpu_custom_call.1} parent=1 // pred_fallthru
      _
    // Predicated region
    $region18: #{tpu_custom_call.1} parent=1 // pred_check
      _
    $region19: #{tpu_custom_call.1} parent=1 // pred_check_branch
      %54 = sbr.rel (0) target = $region21
    $region20: #{tpu_custom_call.1} parent=1 // pred_region
      %s56 = ssub.s32 2048, 2048
      %57 = vsyncadd [#allocation13], %s56
      %s58 = sshll.u32 [#allocation12], 4
      %s59 = int_to_ptr.vmem [resolvable:$true] %s58
      %64 = dma.hbm_to_vmem [thread:$0]  %s4, 2048, %s59, [#allocation13], 128, 128, 8
    $region21: #{tpu_custom_call.1} parent=1 // pred_fallthru
      _
    // Predicated region
    $region22: #{tpu_custom_call.1} parent=1 // pred_check
      _
    $region23: #{tpu_custom_call.1} parent=1 // pred_check_branch
      %66 = sbr.rel (0) target = $region25
    $region24: #{tpu_custom_call.1} parent=1 // pred_region
      _
    $region25: #{tpu_custom_call.1} parent=1 // pred_fallthru
      _
    // Predicated region
    $region26: #{tpu_custom_call.1} parent=1 // pred_check
      _
    $region27: #{tpu_custom_call.1} parent=1 // pred_check_branch
      %68 = sbr.rel (0) target = $region29
    $region28: #{tpu_custom_call.1} parent=1 // pred_region
      %69 = dma.done [#allocation7], 1024
    $region29: #{tpu_custom_call.1} parent=1 // pred_fallthru
      _
    // Predicated region
    $region30: #{tpu_custom_call.1} parent=1 // pred_check
      _
    $region31: #{tpu_custom_call.1} parent=1 // pred_check_branch
      %71 = sbr.rel (0) target = $region33
    $region32: #{tpu_custom_call.1} parent=1 // pred_region
      %72 = dma.done [#allocation10], 16384
    $region33: #{tpu_custom_call.1} parent=1 // pred_fallthru
      _
    // Predicated region
    $region34: #{tpu_custom_call.1} parent=1 // pred_check
      _
    $region35: #{tpu_custom_call.1} parent=1 // pred_check_branch
      %74 = sbr.rel (0) target = $region37
    $region36: #{tpu_custom_call.1} parent=1 // pred_region
      %75 = dma.done [#allocation10], 16384
    $region37: #{tpu_custom_call.1} parent=1 // pred_fallthru
      _
    // Predicated region
    $region38: #{tpu_custom_call.1} parent=1 // pred_check
      _
    $region39: #{tpu_custom_call.1} parent=1 // pred_check_branch
      %77 = sbr.rel (0) target = $region41
    $region40: #{tpu_custom_call.1} parent=1 // pred_region
      %78 = dma.done [#allocation13], 2048
    $region41: #{tpu_custom_call.1} parent=1 // pred_fallthru
      _
    %v79 = vld [vmem:[#allocation6] sm:$0xff]
    %v80 = vld [vmem:[#allocation6 + $0x8] sm:$0xff]
    %v81 = vld [vmem:[#allocation6 + $0x10] sm:$0xff]
    %v82 = vld [vmem:[#allocation6 + $0x18] sm:$0xff]
    %v83 = vld [vmem:[#allocation6 + $0x20] sm:$0xff]
    %v84 = vld [vmem:[#allocation6 + $0x28] sm:$0xff]
    %v85 = vld [vmem:[#allocation6 + $0x30] sm:$0xff]
    %v86 = vld [vmem:[#allocation6 + $0x38] sm:$0xff]
    %v87 = vld [vmem:[#allocation9] sm:$0xff]
    %v88 = vld [vmem:[#allocation9 + $0x8] sm:$0xff]
    %v89 = vld [vmem:[#allocation9 + $0x10] sm:$0xff]
    %v90 = vld [vmem:[#allocation9 + $0x18] sm:$0xff]
    %v91 = vld [vmem:[#allocation9 + $0x20] sm:$0xff]
    %v92 = vld [vmem:[#allocation9 + $0x28] sm:$0xff]
    %v93 = vld [vmem:[#allocation9 + $0x30] sm:$0xff]
    %v94 = vld [vmem:[#allocation9 + $0x38] sm:$0xff]
    %v95 = vld [vmem:[#allocation9 + $0x40] sm:$0xff]
    %v96 = vld [vmem:[#allocation9 + $0x48] sm:$0xff]
    %v97 = vld [vmem:[#allocation9 + $0x50] sm:$0xff]
    %v98 = vld [vmem:[#allocation9 + $0x58] sm:$0xff]
    %v99 = vld [vmem:[#allocation9 + $0x60] sm:$0xff]
    %v100 = vld [vmem:[#allocation9 + $0x68] sm:$0xff]
    %v101 = vld [vmem:[#allocation9 + $0x70] sm:$0xff]
    %v102 = vld [vmem:[#allocation9 + $0x78] sm:$0xff]
    %v103 = vld [vmem:[#allocation9 + $0x80] sm:$0xff]
    %v104 = vld [vmem:[#allocation9 + $0x88] sm:$0xff]
    %v105 = vld [vmem:[#allocation9 + $0x90] sm:$0xff]
    %v106 = vld [vmem:[#allocation9 + $0x98] sm:$0xff]
    %v107 = vld [vmem:[#allocation9 + $0xa0] sm:$0xff]
    %v108 = vld [vmem:[#allocation9 + $0xa8] sm:$0xff]
    %v109 = vld [vmem:[#allocation9 + $0xb0] sm:$0xff]
    %v110 = vld [vmem:[#allocation9 + $0xb8] sm:$0xff]
    %v111 = vld [vmem:[#allocation9 + $0xc0] sm:$0xff]
    %v112 = vld [vmem:[#allocation9 + $0xc8] sm:$0xff]
    %v113 = vld [vmem:[#allocation9 + $0xd0] sm:$0xff]
    %v114 = vld [vmem:[#allocation9 + $0xd8] sm:$0xff]
    %v115 = vld [vmem:[#allocation9 + $0xe0] sm:$0xff]
    %v116 = vld [vmem:[#allocation9 + $0xe8] sm:$0xff]
    %v117 = vld [vmem:[#allocation9 + $0xf0] sm:$0xff]
    %v118 = vld [vmem:[#allocation9 + $0xf8] sm:$0xff]
    %v119 = vld [vmem:[#allocation9 + $0x100] sm:$0xff]
    %v120 = vld [vmem:[#allocation9 + $0x108] sm:$0xff]
    %v121 = vld [vmem:[#allocation9 + $0x110] sm:$0xff]
    %v122 = vld [vmem:[#allocation9 + $0x118] sm:$0xff]
    %v123 = vld [vmem:[#allocation9 + $0x120] sm:$0xff]
    %v124 = vld [vmem:[#allocation9 + $0x128] sm:$0xff]
    %v125 = vld [vmem:[#allocation9 + $0x130] sm:$0xff]
    %v126 = vld [vmem:[#allocation9 + $0x138] sm:$0xff]
    %v127 = vld [vmem:[#allocation9 + $0x140] sm:$0xff]
    %v128 = vld [vmem:[#allocation9 + $0x148] sm:$0xff]
    %v129 = vld [vmem:[#allocation9 + $0x150] sm:$0xff]
    %v130 = vld [vmem:[#allocation9 + $0x158] sm:$0xff]
    %v131 = vld [vmem:[#allocation9 + $0x160] sm:$0xff]
    %v132 = vld [vmem:[#allocation9 + $0x168] sm:$0xff]
    %v133 = vld [vmem:[#allocation9 + $0x170] sm:$0xff]
    %v134 = vld [vmem:[#allocation9 + $0x178] sm:$0xff]
    %v135 = vld [vmem:[#allocation9 + $0x180] sm:$0xff]
    %v136 = vld [vmem:[#allocation9 + $0x188] sm:$0xff]
    %v137 = vld [vmem:[#allocation9 + $0x190] sm:$0xff]
    %v138 = vld [vmem:[#allocation9 + $0x198] sm:$0xff]
    %v139 = vld [vmem:[#allocation9 + $0x1a0] sm:$0xff]
    %v140 = vld [vmem:[#allocation9 + $0x1a8] sm:$0xff]
    %v141 = vld [vmem:[#allocation9 + $0x1b0] sm:$0xff]
    %v142 = vld [vmem:[#allocation9 + $0x1b8] sm:$0xff]
    %v143 = vld [vmem:[#allocation9 + $0x1c0] sm:$0xff]
    %v144 = vld [vmem:[#allocation9 + $0x1c8] sm:$0xff]
    %v145 = vld [vmem:[#allocation9 + $0x1d0] sm:$0xff]
    %v146 = vld [vmem:[#allocation9 + $0x1d8] sm:$0xff]
    %v147 = vld [vmem:[#allocation9 + $0x1e0] sm:$0xff]
    %v148 = vld [vmem:[#allocation9 + $0x1e8] sm:$0xff]
    %v149 = vld [vmem:[#allocation9 + $0x1f0] sm:$0xff]
    %v150 = vld [vmem:[#allocation9 + $0x1f8] sm:$0xff]
    %v151 = vld [vmem:[%s3] sm:$0xf]
    %v153 = vlaneseq
    %v154 = vshrl.u32 %v153, 7
    %v155 = vsub.s32 0, %v154
    %v156 = vrot.slane %v151, %v155
    %v157 = vlaneseq
    %v158 = vshrl.u32 %v157, 7
    %v159 = vsub.s32 1, %v158
    %v160 = vrot.slane %v151, %v159
    %v161 = vlaneseq
    %v162 = vshrl.u32 %v161, 7
    %v163 = vsub.s32 2, %v162
    %v164 = vrot.slane %v151, %v163
    %v165 = vlaneseq
    %v166 = vshrl.u32 %v165, 7
    %v167 = vsub.s32 3, %v166
    %v168 = vrot.slane %v151, %v167
    %173 = vmatprep.subr.mxu0 %v88
    %174 = vmatpush1.msra.mxu0 %v87
    %175 = vmatprep.subr.mxu0 %v92
    %176 = vmatpush1.msra.mxu0 %v91
    %177 = vmatprep.subr.mxu0 %v96
    %178 = vmatpush1.msra.mxu0 %v95
    %179 = vmatprep.subr.mxu0 %v100
    %180 = vmatpush1.msra.mxu0 %v99
    %181 = vmatprep.subr.mxu0 %v104
    %182 = vmatpush1.msra.mxu0 %v103
    %183 = vmatprep.subr.mxu0 %v108
    %184 = vmatpush1.msra.mxu0 %v107
    %185 = vmatprep.subr.mxu0 %v112
    %186 = vmatpush1.msra.mxu0 %v111
    %187 = vmatprep.subr.mxu0 %v116
    %188 = vmatpush1.msra.mxu0 %v115
    %189 = vmatprep.subr.mxu0 %v120
    %190 = vmatpush1.msra.mxu0 %v119
    %191 = vmatprep.subr.mxu0 %v124
    %192 = vmatpush1.msra.mxu0 %v123
    %193 = vmatprep.subr.mxu0 %v128
    %194 = vmatpush1.msra.mxu0 %v127
    %195 = vmatprep.subr.mxu0 %v132
    %196 = vmatpush1.msra.mxu0 %v131
    %197 = vmatprep.subr.mxu0 %v136
    %198 = vmatpush1.msra.mxu0 %v135
    %199 = vmatprep.subr.mxu0 %v140
    %200 = vmatpush1.msra.mxu0 %v139
    %201 = vmatprep.subr.mxu0 %v144
    %202 = vmatpush1.msra.mxu0 %v143
    %203 = vmatprep.subr.mxu0 %v148
    %204 = vmatpush1.msra.mxu0 %v147
    %205 = vmatprep.subr.mxu0 0.0
    %206 = vmatpush1.msra.mxu0 0.0
    %207 = vmatprep.subr.mxu0 0.0
    %208 = vmatpush1.msra.mxu0 0.0
    %209 = vmatprep.subr.mxu0 0.0
    %210 = vmatpush1.msra.mxu0 0.0
    %211 = vmatprep.subr.mxu0 0.0
    %212 = vmatpush1.msra.mxu0 0.0
    %213 = vmatprep.subr.mxu0 0.0
    %214 = vmatpush1.msra.mxu0 0.0
    %215 = vmatprep.subr.mxu0 0.0
    %216 = vmatpush1.msra.mxu0 0.0
    %217 = vmatprep.subr.mxu0 0.0
    %218 = vmatpush1.msra.mxu0 0.0
    %219 = vmatprep.subr.mxu0 0.0
    %220 = vmatpush1.msra.mxu0 0.0
    %221 = vmatprep.subr.mxu0 0.0
    %222 = vmatpush1.msra.mxu0 0.0
    %223 = vmatprep.subr.mxu0 0.0
    %224 = vmatpush1.msra.mxu0 0.0
    %225 = vmatprep.subr.mxu0 0.0
    %226 = vmatpush1.msra.mxu0 0.0
    %227 = vmatprep.subr.mxu0 0.0
    %228 = vmatpush1.msra.mxu0 0.0
    %229 = vmatprep.subr.mxu0 0.0
    %230 = vmatpush1.msra.mxu0 0.0
    %231 = vmatprep.subr.mxu0 0.0
    %232 = vmatpush1.msra.mxu0 0.0
    %233 = vmatprep.subr.mxu0 0.0
    %234 = vmatpush1.msra.mxu0 0.0
    %235 = vmatprep.subr.mxu0 0.0
    %236 = vmatpush1.msra.mxu0 0.0
    %237 = vmatprep.mubr.f32.mxu0 0.0
    %238 = vmatmul.mubr.f32.gmra.mrb[0].mxu0 %v79
    %v239 = vpop.f32.mrb[0].mxu0
    %v240 = vadd.f32 %v156, %v239
    %v241 = vpop.f32.mrb[0].mxu0
    %v242 = vadd.f32 %v160, %v241
    %243 = vmatprep.mubr.f32.mxu0 0.0
    %244 = vmatmul.mubr.f32.gmra.mrb[0].mxu0 %v80
    %v245 = vpop.f32.mrb[0].mxu0
    %v246 = vadd.f32 %v156, %v245
    %v247 = vpop.f32.mrb[0].mxu0
    %v248 = vadd.f32 %v160, %v247
    %249 = vmatprep.mubr.f32.mxu0 0.0
    %250 = vmatmul.mubr.f32.gmra.mrb[0].mxu0 %v81
    %v251 = vpop.f32.mrb[0].mxu0
    %v252 = vadd.f32 %v156, %v251
    %v253 = vpop.f32.mrb[0].mxu0
    %v254 = vadd.f32 %v160, %v253
    %255 = vmatprep.mubr.f32.mxu0 0.0
    %256 = vmatmul.mubr.f32.gmra.mrb[0].mxu0 %v82
    %v257 = vpop.f32.mrb[0].mxu0
    %v258 = vadd.f32 %v156, %v257
    %v259 = vpop.f32.mrb[0].mxu0
    %v260 = vadd.f32 %v160, %v259
    %261 = vmatprep.mubr.f32.mxu0 0.0
    %262 = vmatmul.mubr.f32.gmra.mrb[0].mxu0 %v83
    %v263 = vpop.f32.mrb[0].mxu0
    %v264 = vadd.f32 %v156, %v263
    %v265 = vpop.f32.mrb[0].mxu0
    %v266 = vadd.f32 %v160, %v265
    %267 = vmatprep.mubr.f32.mxu0 0.0
    %268 = vmatmul.mubr.f32.gmra.mrb[0].mxu0 %v84
    %v269 = vpop.f32.mrb[0].mxu0
    %v270 = vadd.f32 %v156, %v269
    %v271 = vpop.f32.mrb[0].mxu0
    %v272 = vadd.f32 %v160, %v271
    %273 = vmatprep.mubr.f32.mxu0 0.0
    %274 = vmatmul.mubr.f32.gmra.mrb[0].mxu0 %v85
    %v275 = vpop.f32.mrb[0].mxu0
    %v276 = vadd.f32 %v156, %v275
    %v277 = vpop.f32.mrb[0].mxu0
    %v278 = vadd.f32 %v160, %v277
    %279 = vmatprep.mubr.f32.mxu0 0.0
    %280 = vmatmul.mubr.f32.gmra.mrb[0].mxu0 %v86
    %v281 = vpop.f32.mrb[0].mxu0
    %v282 = vadd.f32 %v156, %v281
    %v283 = vpop.f32.mrb[0].mxu0
    %v284 = vadd.f32 %v160, %v283
    %285 = vdwg.mxu0
    %286 = vmatprep.subr.mxu0 %v90
    %287 = vmatpush1.msra.mxu0 %v89
    %288 = vmatprep.subr.mxu0 %v94
    %289 = vmatpush1.msra.mxu0 %v93
    %290 = vmatprep.subr.mxu0 %v98
    %291 = vmatpush1.msra.mxu0 %v97
    %292 = vmatprep.subr.mxu0 %v102
    %293 = vmatpush1.msra.mxu0 %v101
    %294 = vmatprep.subr.mxu0 %v106
    %295 = vmatpush1.msra.mxu0 %v105
    %296 = vmatprep.subr.mxu0 %v110
    %297 = vmatpush1.msra.mxu0 %v109
    %298 = vmatprep.subr.mxu0 %v114
    %299 = vmatpush1.msra.mxu0 %v113
    %300 = vmatprep.subr.mxu0 %v118
    %301 = vmatpush1.msra.mxu0 %v117
    %302 = vmatprep.subr.mxu0 %v122
    %303 = vmatpush1.msra.mxu0 %v121
    %304 = vmatprep.subr.mxu0 %v126
    %305 = vmatpush1.msra.mxu0 %v125
    %306 = vmatprep.subr.mxu0 %v130
    %307 = vmatpush1.msra.mxu0 %v129
    %308 = vmatprep.subr.mxu0 %v134
    %309 = vmatpush1.msra.mxu0 %v133
    %310 = vmatprep.subr.mxu0 %v138
    %311 = vmatpush1.msra.mxu0 %v137
    %312 = vmatprep.subr.mxu0 %v142
    %313 = vmatpush1.msra.mxu0 %v141
    %314 = vmatprep.subr.mxu0 %v146
    %315 = vmatpush1.msra.mxu0 %v145
    %316 = vmatprep.subr.mxu0 %v150
    %317 = vmatpush1.msra.mxu0 %v149
    %318 = vmatprep.subr.mxu0 0.0
    %319 = vmatpush1.msra.mxu0 0.0
    %320 = vmatprep.subr.mxu0 0.0
    %321 = vmatpush1.msra.mxu0 0.0
    %322 = vmatprep.subr.mxu0 0.0
    %323 = vmatpush1.msra.mxu0 0.0
    %324 = vmatprep.subr.mxu0 0.0
    %325 = vmatpush1.msra.mxu0 0.0
    %326 = vmatprep.subr.mxu0 0.0
    %327 = vmatpush1.msra.mxu0 0.0
    %328 = vmatprep.subr.mxu0 0.0
    %329 = vmatpush1.msra.mxu0 0.0
    %330 = vmatprep.subr.mxu0 0.0
    %331 = vmatpush1.msra.mxu0 0.0
    %332 = vmatprep.subr.mxu0 0.0
    %333 = vmatpush1.msra.mxu0 0.0
    %334 = vmatprep.subr.mxu0 0.0
    %335 = vmatpush1.msra.mxu0 0.0
    %336 = vmatprep.subr.mxu0 0.0
    %337 = vmatpush1.msra.mxu0 0.0
    %338 = vmatprep.subr.mxu0 0.0
    %339 = vmatpush1.msra.mxu0 0.0
    %340 = vmatprep.subr.mxu0 0.0
    %341 = vmatpush1.msra.mxu0 0.0
    %342 = vmatprep.subr.mxu0 0.0
    %343 = vmatpush1.msra.mxu0 0.0
    %344 = vmatprep.subr.mxu0 0.0
    %345 = vmatpush1.msra.mxu0 0.0
    %346 = vmatprep.subr.mxu0 0.0
    %347 = vmatpush1.msra.mxu0 0.0
    %348 = vmatprep.subr.mxu0 0.0
    %349 = vmatpush1.msra.mxu0 0.0
    %350 = vmatprep.mubr.f32.mxu0 0.0
    %351 = vmatmul.mubr.f32.gmra.mrb[0].mxu0 %v79
    %v352 = vpop.f32.mrb[0].mxu0
    %v353 = vadd.f32 %v164, %v352
    %v354 = vpop.f32.mrb[0].mxu0
    %v355 = vadd.f32 %v168, %v354
    %356 = vmatprep.mubr.f32.mxu0 0.0
    %357 = vmatmul.mubr.f32.gmra.mrb[0].mxu0 %v80
    %v358 = vpop.f32.mrb[0].mxu0
    %v359 = vadd.f32 %v164, %v358
    %v360 = vpop.f32.mrb[0].mxu0
    %v361 = vadd.f32 %v168, %v360
    %362 = vmatprep.mubr.f32.mxu0 0.0
    %363 = vmatmul.mubr.f32.gmra.mrb[0].mxu0 %v81
    %v364 = vpop.f32.mrb[0].mxu0
    %v365 = vadd.f32 %v164, %v364
    %v366 = vpop.f32.mrb[0].mxu0
    %v367 = vadd.f32 %v168, %v366
    %368 = vmatprep.mubr.f32.mxu0 0.0
    %369 = vmatmul.mubr.f32.gmra.mrb[0].mxu0 %v82
    %v370 = vpop.f32.mrb[0].mxu0
    %v371 = vadd.f32 %v164, %v370
    %v372 = vpop.f32.mrb[0].mxu0
    %v373 = vadd.f32 %v168, %v372
    %374 = vmatprep.mubr.f32.mxu0 0.0
    %375 = vmatmul.mubr.f32.gmra.mrb[0].mxu0 %v83
    %v376 = vpop.f32.mrb[0].mxu0
    %v377 = vadd.f32 %v164, %v376
    %v378 = vpop.f32.mrb[0].mxu0
    %v379 = vadd.f32 %v168, %v378
    %380 = vmatprep.mubr.f32.mxu0 0.0
    %381 = vmatmul.mubr.f32.gmra.mrb[0].mxu0 %v84
    %v382 = vpop.f32.mrb[0].mxu0
    %v383 = vadd.f32 %v164, %v382
    %v384 = vpop.f32.mrb[0].mxu0
    %v385 = vadd.f32 %v168, %v384
    %386 = vmatprep.mubr.f32.mxu0 0.0
    %387 = vmatmul.mubr.f32.gmra.mrb[0].mxu0 %v85
    %v388 = vpop.f32.mrb[0].mxu0
    %v389 = vadd.f32 %v164, %v388
    %v390 = vpop.f32.mrb[0].mxu0
    %v391 = vadd.f32 %v168, %v390
    %392 = vmatprep.mubr.f32.mxu0 0.0
    %393 = vmatmul.mubr.f32.gmra.mrb[0].mxu0 %v86
    %v394 = vpop.f32.mrb[0].mxu0
    %v395 = vadd.f32 %v164, %v394
    %v396 = vpop.f32.mrb[0].mxu0
    %v397 = vadd.f32 %v168, %v396
    %398 = vdwg.mxu0
    %399 = vst [vmem:[#allocation2] sm:$0xff] %v240
    %400 = vst [vmem:[#allocation2 + $0x8] sm:$0xff] %v242
    %401 = vst [vmem:[#allocation2 + $0x10] sm:$0xff] %v353
    %402 = vst [vmem:[#allocation2 + $0x18] sm:$0xff] %v355
    %403 = vst [vmem:[#allocation2 + $0x20] sm:$0xff] %v246
    %404 = vst [vmem:[#allocation2 + $0x28] sm:$0xff] %v248
    %405 = vst [vmem:[#allocation2 + $0x30] sm:$0xff] %v359
    %406 = vst [vmem:[#allocation2 + $0x38] sm:$0xff] %v361
    %407 = vst [vmem:[#allocation2 + $0x40] sm:$0xff] %v252
    %408 = vst [vmem:[#allocation2 + $0x48] sm:$0xff] %v254
    %409 = vst [vmem:[#allocation2 + $0x50] sm:$0xff] %v365
    %410 = vst [vmem:[#allocation2 + $0x58] sm:$0xff] %v367
    %411 = vst [vmem:[#allocation2 + $0x60] sm:$0xff] %v258
    %412 = vst [vmem:[#allocation2 + $0x68] sm:$0xff] %v260
    %413 = vst [vmem:[#allocation2 + $0x70] sm:$0xff] %v371
    %414 = vst [vmem:[#allocation2 + $0x78] sm:$0xff] %v373
    %415 = vst [vmem:[#allocation2 + $0x80] sm:$0xff] %v264
    %416 = vst [vmem:[#allocation2 + $0x88] sm:$0xff] %v266
    %417 = vst [vmem:[#allocation2 + $0x90] sm:$0xff] %v377
    %418 = vst [vmem:[#allocation2 + $0x98] sm:$0xff] %v379
    %419 = vst [vmem:[#allocation2 + $0xa0] sm:$0xff] %v270
    %420 = vst [vmem:[#allocation2 + $0xa8] sm:$0xff] %v272
    %421 = vst [vmem:[#allocation2 + $0xb0] sm:$0xff] %v383
    %422 = vst [vmem:[#allocation2 + $0xb8] sm:$0xff] %v385
    %423 = vst [vmem:[#allocation2 + $0xc0] sm:$0xff] %v276
    %424 = vst [vmem:[#allocation2 + $0xc8] sm:$0xff] %v278
    %425 = vst [vmem:[#allocation2 + $0xd0] sm:$0xff] %v389
    %426 = vst [vmem:[#allocation2 + $0xd8] sm:$0xff] %v391
    %427 = vst [vmem:[#allocation2 + $0xe0] sm:$0xff] %v282
    %428 = vst [vmem:[#allocation2 + $0xe8] sm:$0xff] %v284
    %429 = vst [vmem:[#allocation2 + $0xf0] sm:$0xff] %v395
    %430 = vst [vmem:[#allocation2 + $0xf8] sm:$0xff] %v397
    %431 = vst [vmem:[#allocation4] sm:$0xff] 0.0
    %432 = vst [vmem:[#allocation5] sm:$0xff] 0.0
    %v433 = vld [vmem:[#allocation11] sm:$0xff]
    %v434 = vld [vmem:[#allocation11 + $0x8] sm:$0xff]
    %v435 = vld [vmem:[#allocation11 + $0x10] sm:$0xff]
    %v436 = vld [vmem:[#allocation11 + $0x18] sm:$0xff]
    %v437 = vld [vmem:[#allocation11 + $0x20] sm:$0xff]
    %v438 = vld [vmem:[#allocation11 + $0x28] sm:$0xff]
    %v439 = vld [vmem:[#allocation11 + $0x30] sm:$0xff]
    %v440 = vld [vmem:[#allocation11 + $0x38] sm:$0xff]
    %v441 = vld [vmem:[#allocation11 + $0x40] sm:$0xff]
    %v442 = vld [vmem:[#allocation11 + $0x48] sm:$0xff]
    %v443 = vld [vmem:[#allocation11 + $0x50] sm:$0xff]
    %v444 = vld [vmem:[#allocation11 + $0x58] sm:$0xff]
    %v445 = vld [vmem:[#allocation11 + $0x60] sm:$0xff]
    %v446 = vld [vmem:[#allocation11 + $0x68] sm:$0xff]
    %v447 = vld [vmem:[#allocation11 + $0x70] sm:$0xff]
    %v448 = vld [vmem:[#allocation11 + $0x78] sm:$0xff]
    %v449 = vld [vmem:[#allocation11 + $0x80] sm:$0xff]
    %v450 = vld [vmem:[#allocation11 + $0x88] sm:$0xff]
    %v451 = vld [vmem:[#allocation11 + $0x90] sm:$0xff]
    %v452 = vld [vmem:[#allocation11 + $0x98] sm:$0xff]
    %v453 = vld [vmem:[#allocation11 + $0xa0] sm:$0xff]
    %v454 = vld [vmem:[#allocation11 + $0xa8] sm:$0xff]
    %v455 = vld [vmem:[#allocation11 + $0xb0] sm:$0xff]
    %v456 = vld [vmem:[#allocation11 + $0xb8] sm:$0xff]
    %v457 = vld [vmem:[#allocation11 + $0xc0] sm:$0xff]
    %v458 = vld [vmem:[#allocation11 + $0xc8] sm:$0xff]
    %v459 = vld [vmem:[#allocation11 + $0xd0] sm:$0xff]
    %v460 = vld [vmem:[#allocation11 + $0xd8] sm:$0xff]
    %v461 = vld [vmem:[#allocation11 + $0xe0] sm:$0xff]
    %v462 = vld [vmem:[#allocation11 + $0xe8] sm:$0xff]
    %v463 = vld [vmem:[#allocation11 + $0xf0] sm:$0xff]
    %v464 = vld [vmem:[#allocation11 + $0xf8] sm:$0xff]
    %v465 = vld [vmem:[#allocation11 + $0x100] sm:$0xff]
    %v466 = vld [vmem:[#allocation11 + $0x108] sm:$0xff]
    %v467 = vld [vmem:[#allocation11 + $0x110] sm:$0xff]
    %v468 = vld [vmem:[#allocation11 + $0x118] sm:$0xff]
    %v469 = vld [vmem:[#allocation11 + $0x120] sm:$0xff]
    %v470 = vld [vmem:[#allocation11 + $0x128] sm:$0xff]
    %v471 = vld [vmem:[#allocation11 + $0x130] sm:$0xff]
    %v472 = vld [vmem:[#allocation11 + $0x138] sm:$0xff]
    %v473 = vld [vmem:[#allocation11 + $0x140] sm:$0xff]
    %v474 = vld [vmem:[#allocation11 + $0x148] sm:$0xff]
    %v475 = vld [vmem:[#allocation11 + $0x150] sm:$0xff]
    %v476 = vld [vmem:[#allocation11 + $0x158] sm:$0xff]
    %v477 = vld [vmem:[#allocation11 + $0x160] sm:$0xff]
    %v478 = vld [vmem:[#allocation11 + $0x168] sm:$0xff]
    %v479 = vld [vmem:[#allocation11 + $0x170] sm:$0xff]
    %v480 = vld [vmem:[#allocation11 + $0x178] sm:$0xff]
    %v481 = vld [vmem:[#allocation11 + $0x180] sm:$0xff]
    %v482 = vld [vmem:[#allocation11 + $0x188] sm:$0xff]
    %v483 = vld [vmem:[#allocation11 + $0x190] sm:$0xff]
    %v484 = vld [vmem:[#allocation11 + $0x198] sm:$0xff]
    %v485 = vld [vmem:[#allocation11 + $0x1a0] sm:$0xff]
    %v486 = vld [vmem:[#allocation11 + $0x1a8] sm:$0xff]
    %v487 = vld [vmem:[#allocation11 + $0x1b0] sm:$0xff]
    %v488 = vld [vmem:[#allocation11 + $0x1b8] sm:$0xff]
    %v489 = vld [vmem:[#allocation11 + $0x1c0] sm:$0xff]
    %v490 = vld [vmem:[#allocation11 + $0x1c8] sm:$0xff]
    %v491 = vld [vmem:[#allocation11 + $0x1d0] sm:$0xff]
    %v492 = vld [vmem:[#allocation11 + $0x1d8] sm:$0xff]
    %v493 = vld [vmem:[#allocation11 + $0x1e0] sm:$0xff]
    %v494 = vld [vmem:[#allocation11 + $0x1e8] sm:$0xff]
    %v495 = vld [vmem:[#allocation11 + $0x1f0] sm:$0xff]
    %v496 = vld [vmem:[#allocation11 + $0x1f8] sm:$0xff]
    %v497 = vld [vmem:[#allocation2] sm:$0xff]
    %v498 = vld [vmem:[#allocation2 + $0x8] sm:$0xff]
    %v499 = vld [vmem:[#allocation2 + $0x10] sm:$0xff]
    %v500 = vld [vmem:[#allocation2 + $0x18] sm:$0xff]
    %v501 = vld [vmem:[#allocation4] sm:$0xff]
    %502 = vmatprep.subr.mxu0 %v434
    %503 = vmatpush1.msra.mxu0 %v433
    %504 = vmatprep.subr.mxu0 %v438
    %505 = vmatpush1.msra.mxu0 %v437
    %506 = vmatprep.subr.mxu0 %v442
    %507 = vmatpush1.msra.mxu0 %v441
    %508 = vmatprep.subr.mxu0 %v446
    %509 = vmatpush1.msra.mxu0 %v445
    %510 = vmatprep.subr.mxu0 %v450
    %511 = vmatpush1.msra.mxu0 %v449
    %512 = vmatprep.subr.mxu0 %v454
    %513 = vmatpush1.msra.mxu0 %v453
    %514 = vmatprep.subr.mxu0 %v458
    %515 = vmatpush1.msra.mxu0 %v457
    %516 = vmatprep.subr.mxu0 %v462
    %517 = vmatpush1.msra.mxu0 %v461
    %518 = vmatprep.subr.mxu0 %v466
    %519 = vmatpush1.msra.mxu0 %v465
    %520 = vmatprep.subr.mxu0 %v470
    %521 = vmatpush1.msra.mxu0 %v469
    %522 = vmatprep.subr.mxu0 %v474
    %523 = vmatpush1.msra.mxu0 %v473
    %524 = vmatprep.subr.mxu0 %v478
    %525 = vmatpush1.msra.mxu0 %v477
    %526 = vmatprep.subr.mxu0 %v482
    %527 = vmatpush1.msra.mxu0 %v481
    %528 = vmatprep.subr.mxu0 %v486
    %529 = vmatpush1.msra.mxu0 %v485
    %530 = vmatprep.subr.mxu0 %v490
    %531 = vmatpush1.msra.mxu0 %v489
    %532 = vmatprep.subr.mxu0 %v494
    %533 = vmatpush1.msra.mxu0 %v493
    %534 = vmatprep.subr.mxu0 0.0
    %535 = vmatpush1.msra.mxu0 0.0
    %536 = vmatprep.subr.mxu0 0.0
    %537 = vmatpush1.msra.mxu0 0.0
    %538 = vmatprep.subr.mxu0 0.0
    %539 = vmatpush1.msra.mxu0 0.0
    %540 = vmatprep.subr.mxu0 0.0
    %541 = vmatpush1.msra.mxu0 0.0
    %542 = vmatprep.subr.mxu0 0.0
    %543 = vmatpush1.msra.mxu0 0.0
    %544 = vmatprep.subr.mxu0 0.0
    %545 = vmatpush1.msra.mxu0 0.0
    %546 = vmatprep.subr.mxu0 0.0
    %547 = vmatpush1.msra.mxu0 0.0
    %548 = vmatprep.subr.mxu0 0.0
    %549 = vmatpush1.msra.mxu0 0.0
    %550 = vmatprep.subr.mxu0 0.0
    %551 = vmatpush1.msra.mxu0 0.0
    %552 = vmatprep.subr.mxu0 0.0
    %553 = vmatpush1.msra.mxu0 0.0
    %554 = vmatprep.subr.mxu0 0.0
    %555 = vmatpush1.msra.mxu0 0.0
    %556 = vmatprep.subr.mxu0 0.0
    %557 = vmatpush1.msra.mxu0 0.0
    %558 = vmatprep.subr.mxu0 0.0
    %559 = vmatpush1.msra.mxu0 0.0
    %560 = vmatprep.subr.mxu0 0.0
    %561 = vmatpush1.msra.mxu0 0.0
    %562 = vmatprep.subr.mxu0 0.0
    %563 = vmatpush1.msra.mxu0 0.0
    %564 = vmatprep.subr.mxu0 0.0
    %565 = vmatpush1.msra.mxu0 0.0
    %566 = vmatprep.mubr.f32.mxu0 0.0
    %567 = vmatmul.mubr.f32.gmra.mrb[0].mxu0 %v501
    %v568 = vpop.f32.mrb[0].mxu0
    %v569 = vadd.f32 0.0, %v568
    %v570 = vpop.f32.mrb[0].mxu0
    %v571 = vadd.f32 0.0, %v570
    %572 = vdwg.mxu0
    %573 = vmatprep.subr.mxu0 %v436
    %574 = vmatpush1.msra.mxu0 %v435
    %575 = vmatprep.subr.mxu0 %v440
    %576 = vmatpush1.msra.mxu0 %v439
    %577 = vmatprep.subr.mxu0 %v444
    %578 = vmatpush1.msra.mxu0 %v443
    %579 = vmatprep.subr.mxu0 %v448
    %580 = vmatpush1.msra.mxu0 %v447
    %581 = vmatprep.subr.mxu0 %v452
    %582 = vmatpush1.msra.mxu0 %v451
    %583 = vmatprep.subr.mxu0 %v456
    %584 = vmatpush1.msra.mxu0 %v455
    %585 = vmatprep.subr.mxu0 %v460
    %586 = vmatpush1.msra.mxu0 %v459
    %587 = vmatprep.subr.mxu0 %v464
    %588 = vmatpush1.msra.mxu0 %v463
    %589 = vmatprep.subr.mxu0 %v468
    %590 = vmatpush1.msra.mxu0 %v467
    %591 = vmatprep.subr.mxu0 %v472
    %592 = vmatpush1.msra.mxu0 %v471
    %593 = vmatprep.subr.mxu0 %v476
    %594 = vmatpush1.msra.mxu0 %v475
    %595 = vmatprep.subr.mxu0 %v480
    %596 = vmatpush1.msra.mxu0 %v479
    %597 = vmatprep.subr.mxu0 %v484
    %598 = vmatpush1.msra.mxu0 %v483
    %599 = vmatprep.subr.mxu0 %v488
    %600 = vmatpush1.msra.mxu0 %v487
    %601 = vmatprep.subr.mxu0 %v492
    %602 = vmatpush1.msra.mxu0 %v491
    %603 = vmatprep.subr.mxu0 %v496
    %604 = vmatpush1.msra.mxu0 %v495
    %605 = vmatprep.subr.mxu0 0.0
    %606 = vmatpush1.msra.mxu0 0.0
    %607 = vmatprep.subr.mxu0 0.0
    %608 = vmatpush1.msra.mxu0 0.0
    %609 = vmatprep.subr.mxu0 0.0
    %610 = vmatpush1.msra.mxu0 0.0
    %611 = vmatprep.subr.mxu0 0.0
    %612 = vmatpush1.msra.mxu0 0.0
    %613 = vmatprep.subr.mxu0 0.0
    %614 = vmatpush1.msra.mxu0 0.0
    %615 = vmatprep.subr.mxu0 0.0
    %616 = vmatpush1.msra.mxu0 0.0
    %617 = vmatprep.subr.mxu0 0.0
    %618 = vmatpush1.msra.mxu0 0.0
    %619 = vmatprep.subr.mxu0 0.0
    %620 = vmatpush1.msra.mxu0 0.0
    %621 = vmatprep.subr.mxu0 0.0
    %622 = vmatpush1.msra.mxu0 0.0
    %623 = vmatprep.subr.mxu0 0.0
    %624 = vmatpush1.msra.mxu0 0.0
    %625 = vmatprep.subr.mxu0 0.0
    %626 = vmatpush1.msra.mxu0 0.0
    %627 = vmatprep.subr.mxu0 0.0
    %628 = vmatpush1.msra.mxu0 0.0
    %629 = vmatprep.subr.mxu0 0.0
    %630 = vmatpush1.msra.mxu0 0.0
    %631 = vmatprep.subr.mxu0 0.0
    %632 = vmatpush1.msra.mxu0 0.0
    %633 = vmatprep.subr.mxu0 0.0
    %634 = vmatpush1.msra.mxu0 0.0
    %635 = vmatprep.subr.mxu0 0.0
    %636 = vmatpush1.msra.mxu0 0.0
    %637 = vmatprep.mubr.f32.mxu0 0.0
    %638 = vmatmul.mubr.f32.gmra.mrb[0].mxu0 %v501
    %v639 = vpop.f32.mrb[0].mxu0
    %v640 = vadd.f32 0.0, %v639
    %v641 = vpop.f32.mrb[0].mxu0
    %v642 = vadd.f32 0.0, %v641
    %643 = vdwg.mxu0
    %v644 = vadd.f32 %v497, %v569
    %v645 = vadd.f32 %v498, %v571
    %v646 = vadd.f32 %v499, %v640
    %v647 = vadd.f32 %v500, %v642
    %v648 = vxor.u32 %v644, 2147483648
    %v649 = vxor.u32 %v645, 2147483648
    %v650 = vxor.u32 %v646, 2147483648
    %v651 = vmul.f32 %v648, 1.442695
    %v652 = vpow.pop %v651
    %v653 = vmul.f32 %v649, 1.442695
    %v654 = vpow.pop %v653
    %v655 = vmul.f32 %v650, 1.442695
    %v656 = vpow.pop %v655
    %v657 = vadd.f32 %v652, 1.0
    %v658 = vadd.f32 %v654, 1.0
    %v659 = vadd.f32 %v656, 1.0
    %v660 = vrcp.pop %v657
    %v661 = vmul.f32 1.0, %v660
    %v662 = vrcp.pop %v658
    %v663 = vmul.f32 1.0, %v662
    %v664 = vrcp.pop %v659
    %v665 = vmul.f32 1.0, %v664
    %v666 = vtanh.pop %v647
    %v667 = vld [vmem:[#allocation5] sm:$0xff]
    %v668 = vmul.f32 %v663, %v667
    %v669 = vmul.f32 %v661, %v666
    %v670 = vadd.f32 %v668, %v669
    %v671 = vtanh.pop %v670
    %v672 = vmul.f32 %v665, %v671
    %673 = vst [vmem:[#allocation5] sm:$0xff] %v670
    %674 = vst [vmem:[#allocation4] sm:$0xff] %v672
    %675 = vst [vmem:[#allocation3] sm:$0xff] %v672
    %v676 = vld [vmem:[#allocation2 + $0x20] sm:$0xff]
    %v677 = vld [vmem:[#allocation2 + $0x28] sm:$0xff]
    %v678 = vld [vmem:[#allocation2 + $0x30] sm:$0xff]
    %v679 = vld [vmem:[#allocation2 + $0x38] sm:$0xff]
    %v680 = vld [vmem:[#allocation4] sm:$0xff]
    %681 = vmatprep.subr.mxu0 %v434
    %682 = vmatpush1.msra.mxu0 %v433
    %683 = vmatprep.subr.mxu0 %v438
    %684 = vmatpush1.msra.mxu0 %v437
    %685 = vmatprep.subr.mxu0 %v442
    %686 = vmatpush1.msra.mxu0 %v441
    %687 = vmatprep.subr.mxu0 %v446
    %688 = vmatpush1.msra.mxu0 %v445
    %689 = vmatprep.subr.mxu0 %v450
    %690 = vmatpush1.msra.mxu0 %v449
    %691 = vmatprep.subr.mxu0 %v454
    %692 = vmatpush1.msra.mxu0 %v453
    %693 = vmatprep.subr.mxu0 %v458
    %694 = vmatpush1.msra.mxu0 %v457
    %695 = vmatprep.subr.mxu0 %v462
    %696 = vmatpush1.msra.mxu0 %v461
    %697 = vmatprep.subr.mxu0 %v466
    %698 = vmatpush1.msra.mxu0 %v465
    %699 = vmatprep.subr.mxu0 %v470
    %700 = vmatpush1.msra.mxu0 %v469
    %701 = vmatprep.subr.mxu0 %v474
    %702 = vmatpush1.msra.mxu0 %v473
    %703 = vmatprep.subr.mxu0 %v478
    %704 = vmatpush1.msra.mxu0 %v477
    %705 = vmatprep.subr.mxu0 %v482
    %706 = vmatpush1.msra.mxu0 %v481
    %707 = vmatprep.subr.mxu0 %v486
    %708 = vmatpush1.msra.mxu0 %v485
    %709 = vmatprep.subr.mxu0 %v490
    %710 = vmatpush1.msra.mxu0 %v489
    %711 = vmatprep.subr.mxu0 %v494
    %712 = vmatpush1.msra.mxu0 %v493
    %713 = vmatprep.subr.mxu0 0.0
    %714 = vmatpush1.msra.mxu0 0.0
    %715 = vmatprep.subr.mxu0 0.0
    %716 = vmatpush1.msra.mxu0 0.0
    %717 = vmatprep.subr.mxu0 0.0
    %718 = vmatpush1.msra.mxu0 0.0
    %719 = vmatprep.subr.mxu0 0.0
    %720 = vmatpush1.msra.mxu0 0.0
    %721 = vmatprep.subr.mxu0 0.0
    %722 = vmatpush1.msra.mxu0 0.0
    %723 = vmatprep.subr.mxu0 0.0
    %724 = vmatpush1.msra.mxu0 0.0
    %725 = vmatprep.subr.mxu0 0.0
    %726 = vmatpush1.msra.mxu0 0.0
    %727 = vmatprep.subr.mxu0 0.0
    %728 = vmatpush1.msra.mxu0 0.0
    %729 = vmatprep.subr.mxu0 0.0
    %730 = vmatpush1.msra.mxu0 0.0
    %731 = vmatprep.subr.mxu0 0.0
    %732 = vmatpush1.msra.mxu0 0.0
    %733 = vmatprep.subr.mxu0 0.0
    %734 = vmatpush1.msra.mxu0 0.0
    %735 = vmatprep.subr.mxu0 0.0
    %736 = vmatpush1.msra.mxu0 0.0
    %737 = vmatprep.subr.mxu0 0.0
    %738 = vmatpush1.msra.mxu0 0.0
    %739 = vmatprep.subr.mxu0 0.0
    %740 = vmatpush1.msra.mxu0 0.0
    %741 = vmatprep.subr.mxu0 0.0
    %742 = vmatpush1.msra.mxu0 0.0
    %743 = vmatprep.subr.mxu0 0.0
    %744 = vmatpush1.msra.mxu0 0.0
    %745 = vmatprep.mubr.f32.mxu0 0.0
    %746 = vmatmul.mubr.f32.gmra.mrb[0].mxu0 %v680
    %v747 = vpop.f32.mrb[0].mxu0
    %v748 = vadd.f32 0.0, %v747
    %v749 = vpop.f32.mrb[0].mxu0
    %v750 = vadd.f32 0.0, %v749
    %751 = vdwg.mxu0
    %752 = vmatprep.subr.mxu0 %v436
    %753 = vmatpush1.msra.mxu0 %v435
    %754 = vmatprep.subr.mxu0 %v440
    %755 = vmatpush1.msra.mxu0 %v439
    %756 = vmatprep.subr.mxu0 %v444
    %757 = vmatpush1.msra.mxu0 %v443
    %758 = vmatprep.subr.mxu0 %v448
    %759 = vmatpush1.msra.mxu0 %v447
    %760 = vmatprep.subr.mxu0 %v452
    %761 = vmatpush1.msra.mxu0 %v451
    %762 = vmatprep.subr.mxu0 %v456
    %763 = vmatpush1.msra.mxu0 %v455
    %764 = vmatprep.subr.mxu0 %v460
    %765 = vmatpush1.msra.mxu0 %v459
    %766 = vmatprep.subr.mxu0 %v464
    %767 = vmatpush1.msra.mxu0 %v463
    %768 = vmatprep.subr.mxu0 %v468
    %769 = vmatpush1.msra.mxu0 %v467
    %770 = vmatprep.subr.mxu0 %v472
    %771 = vmatpush1.msra.mxu0 %v471
    %772 = vmatprep.subr.mxu0 %v476
    %773 = vmatpush1.msra.mxu0 %v475
    %774 = vmatprep.subr.mxu0 %v480
    %775 = vmatpush1.msra.mxu0 %v479
    %776 = vmatprep.subr.mxu0 %v484
    %777 = vmatpush1.msra.mxu0 %v483
    %778 = vmatprep.subr.mxu0 %v488
    %779 = vmatpush1.msra.mxu0 %v487
    %780 = vmatprep.subr.mxu0 %v492
    %781 = vmatpush1.msra.mxu0 %v491
    %782 = vmatprep.subr.mxu0 %v496
    %783 = vmatpush1.msra.mxu0 %v495
    %784 = vmatprep.subr.mxu0 0.0
    %785 = vmatpush1.msra.mxu0 0.0
    %786 = vmatprep.subr.mxu0 0.0
    %787 = vmatpush1.msra.mxu0 0.0
    %788 = vmatprep.subr.mxu0 0.0
    %789 = vmatpush1.msra.mxu0 0.0
    %790 = vmatprep.subr.mxu0 0.0
    %791 = vmatpush1.msra.mxu0 0.0
    %792 = vmatprep.subr.mxu0 0.0
    %793 = vmatpush1.msra.mxu0 0.0
    %794 = vmatprep.subr.mxu0 0.0
    %795 = vmatpush1.msra.mxu0 0.0
    %796 = vmatprep.subr.mxu0 0.0
    %797 = vmatpush1.msra.mxu0 0.0
    %798 = vmatprep.subr.mxu0 0.0
    %799 = vmatpush1.msra.mxu0 0.0
    %800 = vmatprep.subr.mxu0 0.0
    %801 = vmatpush1.msra.mxu0 0.0
    %802 = vmatprep.subr.mxu0 0.0
    %803 = vmatpush1.msra.mxu0 0.0
    %804 = vmatprep.subr.mxu0 0.0
    %805 = vmatpush1.msra.mxu0 0.0
    %806 = vmatprep.subr.mxu0 0.0
    %807 = vmatpush1.msra.mxu0 0.0
    %808 = vmatprep.subr.mxu0 0.0
    %809 = vmatpush1.msra.mxu0 0.0
    %810 = vmatprep.subr.mxu0 0.0
    %811 = vmatpush1.msra.mxu0 0.0
    %812 = vmatprep.subr.mxu0 0.0
    %813 = vmatpush1.msra.mxu0 0.0
    %814 = vmatprep.subr.mxu0 0.0
    %815 = vmatpush1.msra.mxu0 0.0
    %816 = vmatprep.mubr.f32.mxu0 0.0
    %817 = vmatmul.mubr.f32.gmra.mrb[0].mxu0 %v680
    %v818 = vpop.f32.mrb[0].mxu0
    %v819 = vadd.f32 0.0, %v818
    %v820 = vpop.f32.mrb[0].mxu0
    %v821 = vadd.f32 0.0, %v820
    %822 = vdwg.mxu0
    %v823 = vadd.f32 %v676, %v748
    %v824 = vadd.f32 %v677, %v750
    %v825 = vadd.f32 %v678, %v819
    %v826 = vadd.f32 %v679, %v821
    %v827 = vxor.u32 %v823, 2147483648
    %v828 = vxor.u32 %v824, 2147483648
    %v829 = vxor.u32 %v825, 2147483648
    %v830 = vmul.f32 %v827, 1.442695
    %v831 = vpow.pop %v830
    %v832 = vmul.f32 %v828, 1.442695
    %v833 = vpow.pop %v832
    %v834 = vmul.f32 %v829, 1.442695
    %v835 = vpow.pop %v834
    %v836 = vadd.f32 %v831, 1.0
    %v837 = vadd.f32 %v833, 1.0
    %v838 = vadd.f32 %v835, 1.0
    %v839 = vrcp.pop %v836
    %v840 = vmul.f32 1.0, %v839
    %v841 = vrcp.pop %v837
    %v842 = vmul.f32 1.0, %v841
    %v843 = vrcp.pop %v838
    %v844 = vmul.f32 1.0, %v843
    %v845 = vtanh.pop %v826
    %v846 = vld [vmem:[#allocation5] sm:$0xff]
    %v847 = vmul.f32 %v842, %v846
    %v848 = vmul.f32 %v840, %v845
    %v849 = vadd.f32 %v847, %v848
    %v850 = vtanh.pop %v849
    %v851 = vmul.f32 %v844, %v850
    %852 = vst [vmem:[#allocation5] sm:$0xff] %v849
    %853 = vst [vmem:[#allocation4] sm:$0xff] %v851
    %854 = vst [vmem:[#allocation3 + $0x8] sm:$0xff] %v851
    %v855 = vld [vmem:[#allocation2 + $0x40] sm:$0xff]
    %v856 = vld [vmem:[#allocation2 + $0x48] sm:$0xff]
    %v857 = vld [vmem:[#allocation2 + $0x50] sm:$0xff]
    %v858 = vld [vmem:[#allocation2 + $0x58] sm:$0xff]
    %v859 = vld [vmem:[#allocation4] sm:$0xff]
    %860 = vmatprep.subr.mxu0 %v434
    %861 = vmatpush1.msra.mxu0 %v433
    %862 = vmatprep.subr.mxu0 %v438
    %863 = vmatpush1.msra.mxu0 %v437
    %864 = vmatprep.subr.mxu0 %v442
    %865 = vmatpush1.msra.mxu0 %v441
    %866 = vmatprep.subr.mxu0 %v446
    %867 = vmatpush1.msra.mxu0 %v445
    %868 = vmatprep.subr.mxu0 %v450
    %869 = vmatpush1.msra.mxu0 %v449
    %870 = vmatprep.subr.mxu0 %v454
    %871 = vmatpush1.msra.mxu0 %v453
    %872 = vmatprep.subr.mxu0 %v458
    %873 = vmatpush1.msra.mxu0 %v457
    %874 = vmatprep.subr.mxu0 %v462
    %875 = vmatpush1.msra.mxu0 %v461
    %876 = vmatprep.subr.mxu0 %v466
    %877 = vmatpush1.msra.mxu0 %v465
    %878 = vmatprep.subr.mxu0 %v470
    %879 = vmatpush1.msra.mxu0 %v469
    %880 = vmatprep.subr.mxu0 %v474
    %881 = vmatpush1.msra.mxu0 %v473
    %882 = vmatprep.subr.mxu0 %v478
    %883 = vmatpush1.msra.mxu0 %v477
    %884 = vmatprep.subr.mxu0 %v482
    %885 = vmatpush1.msra.mxu0 %v481
    %886 = vmatprep.subr.mxu0 %v486
    %887 = vmatpush1.msra.mxu0 %v485
    %888 = vmatprep.subr.mxu0 %v490
    %889 = vmatpush1.msra.mxu0 %v489
    %890 = vmatprep.subr.mxu0 %v494
    %891 = vmatpush1.msra.mxu0 %v493
    %892 = vmatprep.subr.mxu0 0.0
    %893 = vmatpush1.msra.mxu0 0.0
    %894 = vmatprep.subr.mxu0 0.0
    %895 = vmatpush1.msra.mxu0 0.0
    %896 = vmatprep.subr.mxu0 0.0
    %897 = vmatpush1.msra.mxu0 0.0
    %898 = vmatprep.subr.mxu0 0.0
    %899 = vmatpush1.msra.mxu0 0.0
    %900 = vmatprep.subr.mxu0 0.0
    %901 = vmatpush1.msra.mxu0 0.0
    %902 = vmatprep.subr.mxu0 0.0
    %903 = vmatpush1.msra.mxu0 0.0
    %904 = vmatprep.subr.mxu0 0.0
    %905 = vmatpush1.msra.mxu0 0.0
    %906 = vmatprep.subr.mxu0 0.0
    %907 = vmatpush1.msra.mxu0 0.0
    %908 = vmatprep.subr.mxu0 0.0
    %909 = vmatpush1.msra.mxu0 0.0
    %910 = vmatprep.subr.mxu0 0.0
    %911 = vmatpush1.msra.mxu0 0.0
    %912 = vmatprep.subr.mxu0 0.0
    %913 = vmatpush1.msra.mxu0 0.0
    %914 = vmatprep.subr.mxu0 0.0
    %915 = vmatpush1.msra.mxu0 0.0
    %916 = vmatprep.subr.mxu0 0.0
    %917 = vmatpush1.msra.mxu0 0.0
    %918 = vmatprep.subr.mxu0 0.0
    %919 = vmatpush1.msra.mxu0 0.0
    %920 = vmatprep.subr.mxu0 0.0
    %921 = vmatpush1.msra.mxu0 0.0
    %922 = vmatprep.subr.mxu0 0.0
    %923 = vmatpush1.msra.mxu0 0.0
    %924 = vmatprep.mubr.f32.mxu0 0.0
    %925 = vmatmul.mubr.f32.gmra.mrb[0].mxu0 %v859
    %v926 = vpop.f32.mrb[0].mxu0
    %v927 = vadd.f32 0.0, %v926
    %v928 = vpop.f32.mrb[0].mxu0
    %v929 = vadd.f32 0.0, %v928
    %930 = vdwg.mxu0
    %931 = vmatprep.subr.mxu0 %v436
    %932 = vmatpush1.msra.mxu0 %v435
    %933 = vmatprep.subr.mxu0 %v440
    %934 = vmatpush1.msra.mxu0 %v439
    %935 = vmatprep.subr.mxu0 %v444
    %936 = vmatpush1.msra.mxu0 %v443
    %937 = vmatprep.subr.mxu0 %v448
    %938 = vmatpush1.msra.mxu0 %v447
    %939 = vmatprep.subr.mxu0 %v452
    %940 = vmatpush1.msra.mxu0 %v451
    %941 = vmatprep.subr.mxu0 %v456
    %942 = vmatpush1.msra.mxu0 %v455
    %943 = vmatprep.subr.mxu0 %v460
    %944 = vmatpush1.msra.mxu0 %v459
    %945 = vmatprep.subr.mxu0 %v464
    %946 = vmatpush1.msra.mxu0 %v463
    %947 = vmatprep.subr.mxu0 %v468
    %948 = vmatpush1.msra.mxu0 %v467
    %949 = vmatprep.subr.mxu0 %v472
    %950 = vmatpush1.msra.mxu0 %v471
    %951 = vmatprep.subr.mxu0 %v476
    %952 = vmatpush1.msra.mxu0 %v475
    %953 = vmatprep.subr.mxu0 %v480
    %954 = vmatpush1.msra.mxu0 %v479
    %955 = vmatprep.subr.mxu0 %v484
    %956 = vmatpush1.msra.mxu0 %v483
    %957 = vmatprep.subr.mxu0 %v488
    %958 = vmatpush1.msra.mxu0 %v487
    %959 = vmatprep.subr.mxu0 %v492
    %960 = vmatpush1.msra.mxu0 %v491
    %961 = vmatprep.subr.mxu0 %v496
    %962 = vmatpush1.msra.mxu0 %v495
    %963 = vmatprep.subr.mxu0 0.0
    %964 = vmatpush1.msra.mxu0 0.0
    %965 = vmatprep.subr.mxu0 0.0
    %966 = vmatpush1.msra.mxu0 0.0
    %967 = vmatprep.subr.mxu0 0.0
    %968 = vmatpush1.msra.mxu0 0.0
    %969 = vmatprep.subr.mxu0 0.0
    %970 = vmatpush1.msra.mxu0 0.0
    %971 = vmatprep.subr.mxu0 0.0
    %972 = vmatpush1.msra.mxu0 0.0
    %973 = vmatprep.subr.mxu0 0.0
    %974 = vmatpush1.msra.mxu0 0.0
    %975 = vmatprep.subr.mxu0 0.0
    %976 = vmatpush1.msra.mxu0 0.0
    %977 = vmatprep.subr.mxu0 0.0
    %978 = vmatpush1.msra.mxu0 0.0
    %979 = vmatprep.subr.mxu0 0.0
    %980 = vmatpush1.msra.mxu0 0.0
    %981 = vmatprep.subr.mxu0 0.0
    %982 = vmatpush1.msra.mxu0 0.0
    %983 = vmatprep.subr.mxu0 0.0
    %984 = vmatpush1.msra.mxu0 0.0
    %985 = vmatprep.subr.mxu0 0.0
    %986 = vmatpush1.msra.mxu0 0.0
    %987 = vmatprep.subr.mxu0 0.0
    %988 = vmatpush1.msra.mxu0 0.0
    %989 = vmatprep.subr.mxu0 0.0
    %990 = vmatpush1.msra.mxu0 0.0
    %991 = vmatprep.subr.mxu0 0.0
    %992 = vmatpush1.msra.mxu0 0.0
    %993 = vmatprep.subr.mxu0 0.0
    %994 = vmatpush1.msra.mxu0 0.0
    %995 = vmatprep.mubr.f32.mxu0 0.0
    %996 = vmatmul.mubr.f32.gmra.mrb[0].mxu0 %v859
    %v997 = vpop.f32.mrb[0].mxu0
    %v998 = vadd.f32 0.0, %v997
    %v999 = vpop.f32.mrb[0].mxu0
    %v1000 = vadd.f32 0.0, %v999
    %1001 = vdwg.mxu0
    %v1002 = vadd.f32 %v855, %v927
    %v1003 = vadd.f32 %v856, %v929
    %v1004 = vadd.f32 %v857, %v998
    %v1005 = vadd.f32 %v858, %v1000
    %v1006 = vxor.u32 %v1002, 2147483648
    %v1007 = vxor.u32 %v1003, 2147483648
    %v1008 = vxor.u32 %v1004, 2147483648
    %v1009 = vmul.f32 %v1006, 1.442695
    %v1010 = vpow.pop %v1009
    %v1011 = vmul.f32 %v1007, 1.442695
    %v1012 = vpow.pop %v1011
    %v1013 = vmul.f32 %v1008, 1.442695
    %v1014 = vpow.pop %v1013
    %v1015 = vadd.f32 %v1010, 1.0
    %v1016 = vadd.f32 %v1012, 1.0
    %v1017 = vadd.f32 %v1014, 1.0
    %v1018 = vrcp.pop %v1015
    %v1019 = vmul.f32 1.0, %v1018
    %v1020 = vrcp.pop %v1016
    %v1021 = vmul.f32 1.0, %v1020
    %v1022 = vrcp.pop %v1017
    %v1023 = vmul.f32 1.0, %v1022
    %v1024 = vtanh.pop %v1005
    %v1025 = vld [vmem:[#allocation5] sm:$0xff]
    %v1026 = vmul.f32 %v1021, %v1025
    %v1027 = vmul.f32 %v1019, %v1024
    %v1028 = vadd.f32 %v1026, %v1027
    %v1029 = vtanh.pop %v1028
    %v1030 = vmul.f32 %v1023, %v1029
    %1031 = vst [vmem:[#allocation5] sm:$0xff] %v1028
    %1032 = vst [vmem:[#allocation4] sm:$0xff] %v1030
    %1033 = vst [vmem:[#allocation3 + $0x10] sm:$0xff] %v1030
    %v1034 = vld [vmem:[#allocation2 + $0x60] sm:$0xff]
    %v1035 = vld [vmem:[#allocation2 + $0x68] sm:$0xff]
    %v1036 = vld [vmem:[#allocation2 + $0x70] sm:$0xff]
    %v1037 = vld [vmem:[#allocation2 + $0x78] sm:$0xff]
    %v1038 = vld [vmem:[#allocation4] sm:$0xff]
    %1039 = vmatprep.subr.mxu0 %v434
    %1040 = vmatpush1.msra.mxu0 %v433
    %1041 = vmatprep.subr.mxu0 %v438
    %1042 = vmatpush1.msra.mxu0 %v437
    %1043 = vmatprep.subr.mxu0 %v442
    %1044 = vmatpush1.msra.mxu0 %v441
    %1045 = vmatprep.subr.mxu0 %v446
    %1046 = vmatpush1.msra.mxu0 %v445
    %1047 = vmatprep.subr.mxu0 %v450
    %1048 = vmatpush1.msra.mxu0 %v449
    %1049 = vmatprep.subr.mxu0 %v454
    %1050 = vmatpush1.msra.mxu0 %v453
    %1051 = vmatprep.subr.mxu0 %v458
    %1052 = vmatpush1.msra.mxu0 %v457
    %1053 = vmatprep.subr.mxu0 %v462
    %1054 = vmatpush1.msra.mxu0 %v461
    %1055 = vmatprep.subr.mxu0 %v466
    %1056 = vmatpush1.msra.mxu0 %v465
    %1057 = vmatprep.subr.mxu0 %v470
    %1058 = vmatpush1.msra.mxu0 %v469
    %1059 = vmatprep.subr.mxu0 %v474
    %1060 = vmatpush1.msra.mxu0 %v473
    %1061 = vmatprep.subr.mxu0 %v478
    %1062 = vmatpush1.msra.mxu0 %v477
    %1063 = vmatprep.subr.mxu0 %v482
    %1064 = vmatpush1.msra.mxu0 %v481
    %1065 = vmatprep.subr.mxu0 %v486
    %1066 = vmatpush1.msra.mxu0 %v485
    %1067 = vmatprep.subr.mxu0 %v490
    %1068 = vmatpush1.msra.mxu0 %v489
    %1069 = vmatprep.subr.mxu0 %v494
    %1070 = vmatpush1.msra.mxu0 %v493
    %1071 = vmatprep.subr.mxu0 0.0
    %1072 = vmatpush1.msra.mxu0 0.0
    %1073 = vmatprep.subr.mxu0 0.0
    %1074 = vmatpush1.msra.mxu0 0.0
    %1075 = vmatprep.subr.mxu0 0.0
    %1076 = vmatpush1.msra.mxu0 0.0
    %1077 = vmatprep.subr.mxu0 0.0
    %1078 = vmatpush1.msra.mxu0 0.0
    %1079 = vmatprep.subr.mxu0 0.0
    %1080 = vmatpush1.msra.mxu0 0.0
    %1081 = vmatprep.subr.mxu0 0.0
    %1082 = vmatpush1.msra.mxu0 0.0
    %1083 = vmatprep.subr.mxu0 0.0
    %1084 = vmatpush1.msra.mxu0 0.0
    %1085 = vmatprep.subr.mxu0 0.0
    %1086 = vmatpush1.msra.mxu0 0.0
    %1087 = vmatprep.subr.mxu0 0.0
    %1088 = vmatpush1.msra.mxu0 0.0
    %1089 = vmatprep.subr.mxu0 0.0
    %1090 = vmatpush1.msra.mxu0 0.0
    %1091 = vmatprep.subr.mxu0 0.0
    %1092 = vmatpush1.msra.mxu0 0.0
    %1093 = vmatprep.subr.mxu0 0.0
    %1094 = vmatpush1.msra.mxu0 0.0
    %1095 = vmatprep.subr.mxu0 0.0
    %1096 = vmatpush1.msra.mxu0 0.0
    %1097 = vmatprep.subr.mxu0 0.0
    %1098 = vmatpush1.msra.mxu0 0.0
    %1099 = vmatprep.subr.mxu0 0.0
    %1100 = vmatpush1.msra.mxu0 0.0
    %1101 = vmatprep.subr.mxu0 0.0
    %1102 = vmatpush1.msra.mxu0 0.0
    %1103 = vmatprep.mubr.f32.mxu0 0.0
    %1104 = vmatmul.mubr.f32.gmra.mrb[0].mxu0 %v1038
    %v1105 = vpop.f32.mrb[0].mxu0
    %v1106 = vadd.f32 0.0, %v1105
    %v1107 = vpop.f32.mrb[0].mxu0
    %v1108 = vadd.f32 0.0, %v1107
    %1109 = vdwg.mxu0
    %1110 = vmatprep.subr.mxu0 %v436
    %1111 = vmatpush1.msra.mxu0 %v435
    %1112 = vmatprep.subr.mxu0 %v440
    %1113 = vmatpush1.msra.mxu0 %v439
    %1114 = vmatprep.subr.mxu0 %v444
    %1115 = vmatpush1.msra.mxu0 %v443
    %1116 = vmatprep.subr.mxu0 %v448
    %1117 = vmatpush1.msra.mxu0 %v447
    %1118 = vmatprep.subr.mxu0 %v452
    %1119 = vmatpush1.msra.mxu0 %v451
    %1120 = vmatprep.subr.mxu0 %v456
    %1121 = vmatpush1.msra.mxu0 %v455
    %1122 = vmatprep.subr.mxu0 %v460
    %1123 = vmatpush1.msra.mxu0 %v459
    %1124 = vmatprep.subr.mxu0 %v464
    %1125 = vmatpush1.msra.mxu0 %v463
    %1126 = vmatprep.subr.mxu0 %v468
    %1127 = vmatpush1.msra.mxu0 %v467
    %1128 = vmatprep.subr.mxu0 %v472
    %1129 = vmatpush1.msra.mxu0 %v471
    %1130 = vmatprep.subr.mxu0 %v476
    %1131 = vmatpush1.msra.mxu0 %v475
    %1132 = vmatprep.subr.mxu0 %v480
    %1133 = vmatpush1.msra.mxu0 %v479
    %1134 = vmatprep.subr.mxu0 %v484
    %1135 = vmatpush1.msra.mxu0 %v483
    %1136 = vmatprep.subr.mxu0 %v488
    %1137 = vmatpush1.msra.mxu0 %v487
    %1138 = vmatprep.subr.mxu0 %v492
    %1139 = vmatpush1.msra.mxu0 %v491
    %1140 = vmatprep.subr.mxu0 %v496
    %1141 = vmatpush1.msra.mxu0 %v495
    %1142 = vmatprep.subr.mxu0 0.0
    %1143 = vmatpush1.msra.mxu0 0.0
    %1144 = vmatprep.subr.mxu0 0.0
    %1145 = vmatpush1.msra.mxu0 0.0
    %1146 = vmatprep.subr.mxu0 0.0
    %1147 = vmatpush1.msra.mxu0 0.0
    %1148 = vmatprep.subr.mxu0 0.0
    %1149 = vmatpush1.msra.mxu0 0.0
    %1150 = vmatprep.subr.mxu0 0.0
    %1151 = vmatpush1.msra.mxu0 0.0
    %1152 = vmatprep.subr.mxu0 0.0
    %1153 = vmatpush1.msra.mxu0 0.0
    %1154 = vmatprep.subr.mxu0 0.0
    %1155 = vmatpush1.msra.mxu0 0.0
    %1156 = vmatprep.subr.mxu0 0.0
    %1157 = vmatpush1.msra.mxu0 0.0
    %1158 = vmatprep.subr.mxu0 0.0
    %1159 = vmatpush1.msra.mxu0 0.0
    %1160 = vmatprep.subr.mxu0 0.0
    %1161 = vmatpush1.msra.mxu0 0.0
    %1162 = vmatprep.subr.mxu0 0.0
    %1163 = vmatpush1.msra.mxu0 0.0
    %1164 = vmatprep.subr.mxu0 0.0
    %1165 = vmatpush1.msra.mxu0 0.0
    %1166 = vmatprep.subr.mxu0 0.0
    %1167 = vmatpush1.msra.mxu0 0.0
    %1168 = vmatprep.subr.mxu0 0.0
    %1169 = vmatpush1.msra.mxu0 0.0
    %1170 = vmatprep.subr.mxu0 0.0
    %1171 = vmatpush1.msra.mxu0 0.0
    %1172 = vmatprep.subr.mxu0 0.0
    %1173 = vmatpush1.msra.mxu0 0.0
    %1174 = vmatprep.mubr.f32.mxu0 0.0
    %1175 = vmatmul.mubr.f32.gmra.mrb[0].mxu0 %v1038
    %v1176 = vpop.f32.mrb[0].mxu0
    %v1177 = vadd.f32 0.0, %v1176
    %v1178 = vpop.f32.mrb[0].mxu0
    %v1179 = vadd.f32 0.0, %v1178
    %1180 = vdwg.mxu0
    %v1181 = vadd.f32 %v1034, %v1106
    %v1182 = vadd.f32 %v1035, %v1108
    %v1183 = vadd.f32 %v1036, %v1177
    %v1184 = vadd.f32 %v1037, %v1179
    %v1185 = vxor.u32 %v1181, 2147483648
    %v1186 = vxor.u32 %v1182, 2147483648
    %v1187 = vxor.u32 %v1183, 2147483648
    %v1188 = vmul.f32 %v1185, 1.442695
    %v1189 = vpow.pop %v1188
    %v1190 = vmul.f32 %v1186, 1.442695
    %v1191 = vpow.pop %v1190
    %v1192 = vmul.f32 %v1187, 1.442695
    %v1193 = vpow.pop %v1192
    %v1194 = vadd.f32 %v1189, 1.0
    %v1195 = vadd.f32 %v1191, 1.0
    %v1196 = vadd.f32 %v1193, 1.0
    %v1197 = vrcp.pop %v1194
    %v1198 = vmul.f32 1.0, %v1197
    %v1199 = vrcp.pop %v1195
    %v1200 = vmul.f32 1.0, %v1199
    %v1201 = vrcp.pop %v1196
    %v1202 = vmul.f32 1.0, %v1201
    %v1203 = vtanh.pop %v1184
    %v1204 = vld [vmem:[#allocation5] sm:$0xff]
    %v1205 = vmul.f32 %v1200, %v1204
    %v1206 = vmul.f32 %v1198, %v1203
    %v1207 = vadd.f32 %v1205, %v1206
    %v1208 = vtanh.pop %v1207
    %v1209 = vmul.f32 %v1202, %v1208
    %1210 = vst [vmem:[#allocation5] sm:$0xff] %v1207
    %1211 = vst [vmem:[#allocation4] sm:$0xff] %v1209
    %1212 = vst [vmem:[#allocation3 + $0x18] sm:$0xff] %v1209
    %v1213 = vld [vmem:[#allocation2 + $0x80] sm:$0xff]
    %v1214 = vld [vmem:[#allocation2 + $0x88] sm:$0xff]
    %v1215 = vld [vmem:[#allocation2 + $0x90] sm:$0xff]
    %v1216 = vld [vmem:[#allocation2 + $0x98] sm:$0xff]
    %v1217 = vld [vmem:[#allocation4] sm:$0xff]
    %1218 = vmatprep.subr.mxu0 %v434
    %1219 = vmatpush1.msra.mxu0 %v433
    %1220 = vmatprep.subr.mxu0 %v438
    %1221 = vmatpush1.msra.mxu0 %v437
    %1222 = vmatprep.subr.mxu0 %v442
    %1223 = vmatpush1.msra.mxu0 %v441
    %1224 = vmatprep.subr.mxu0 %v446
    %1225 = vmatpush1.msra.mxu0 %v445
    %1226 = vmatprep.subr.mxu0 %v450
    %1227 = vmatpush1.msra.mxu0 %v449
    %1228 = vmatprep.subr.mxu0 %v454
    %1229 = vmatpush1.msra.mxu0 %v453
    %1230 = vmatprep.subr.mxu0 %v458
    %1231 = vmatpush1.msra.mxu0 %v457
    %1232 = vmatprep.subr.mxu0 %v462
    %1233 = vmatpush1.msra.mxu0 %v461
    %1234 = vmatprep.subr.mxu0 %v466
    %1235 = vmatpush1.msra.mxu0 %v465
    %1236 = vmatprep.subr.mxu0 %v470
    %1237 = vmatpush1.msra.mxu0 %v469
    %1238 = vmatprep.subr.mxu0 %v474
    %1239 = vmatpush1.msra.mxu0 %v473
    %1240 = vmatprep.subr.mxu0 %v478
    %1241 = vmatpush1.msra.mxu0 %v477
    %1242 = vmatprep.subr.mxu0 %v482
    %1243 = vmatpush1.msra.mxu0 %v481
    %1244 = vmatprep.subr.mxu0 %v486
    %1245 = vmatpush1.msra.mxu0 %v485
    %1246 = vmatprep.subr.mxu0 %v490
    %1247 = vmatpush1.msra.mxu0 %v489
    %1248 = vmatprep.subr.mxu0 %v494
    %1249 = vmatpush1.msra.mxu0 %v493
    %1250 = vmatprep.subr.mxu0 0.0
    %1251 = vmatpush1.msra.mxu0 0.0
    %1252 = vmatprep.subr.mxu0 0.0
    %1253 = vmatpush1.msra.mxu0 0.0
    %1254 = vmatprep.subr.mxu0 0.0
    %1255 = vmatpush1.msra.mxu0 0.0
    %1256 = vmatprep.subr.mxu0 0.0
    %1257 = vmatpush1.msra.mxu0 0.0
    %1258 = vmatprep.subr.mxu0 0.0
    %1259 = vmatpush1.msra.mxu0 0.0
    %1260 = vmatprep.subr.mxu0 0.0
    %1261 = vmatpush1.msra.mxu0 0.0
    %1262 = vmatprep.subr.mxu0 0.0
    %1263 = vmatpush1.msra.mxu0 0.0
    %1264 = vmatprep.subr.mxu0 0.0
    %1265 = vmatpush1.msra.mxu0 0.0
    %1266 = vmatprep.subr.mxu0 0.0
    %1267 = vmatpush1.msra.mxu0 0.0
    %1268 = vmatprep.subr.mxu0 0.0
    %1269 = vmatpush1.msra.mxu0 0.0
    %1270 = vmatprep.subr.mxu0 0.0
    %1271 = vmatpush1.msra.mxu0 0.0
    %1272 = vmatprep.subr.mxu0 0.0
    %1273 = vmatpush1.msra.mxu0 0.0
    %1274 = vmatprep.subr.mxu0 0.0
    %1275 = vmatpush1.msra.mxu0 0.0
    %1276 = vmatprep.subr.mxu0 0.0
    %1277 = vmatpush1.msra.mxu0 0.0
    %1278 = vmatprep.subr.mxu0 0.0
    %1279 = vmatpush1.msra.mxu0 0.0
    %1280 = vmatprep.subr.mxu0 0.0
    %1281 = vmatpush1.msra.mxu0 0.0
    %1282 = vmatprep.mubr.f32.mxu0 0.0
    %1283 = vmatmul.mubr.f32.gmra.mrb[0].mxu0 %v1217
    %v1284 = vpop.f32.mrb[0].mxu0
    %v1285 = vadd.f32 0.0, %v1284
    %v1286 = vpop.f32.mrb[0].mxu0
    %v1287 = vadd.f32 0.0, %v1286
    %1288 = vdwg.mxu0
    %1289 = vmatprep.subr.mxu0 %v436
    %1290 = vmatpush1.msra.mxu0 %v435
    %1291 = vmatprep.subr.mxu0 %v440
    %1292 = vmatpush1.msra.mxu0 %v439
    %1293 = vmatprep.subr.mxu0 %v444
    %1294 = vmatpush1.msra.mxu0 %v443
    %1295 = vmatprep.subr.mxu0 %v448
    %1296 = vmatpush1.msra.mxu0 %v447
    %1297 = vmatprep.subr.mxu0 %v452
    %1298 = vmatpush1.msra.mxu0 %v451
    %1299 = vmatprep.subr.mxu0 %v456
    %1300 = vmatpush1.msra.mxu0 %v455
    %1301 = vmatprep.subr.mxu0 %v460
    %1302 = vmatpush1.msra.mxu0 %v459
    %1303 = vmatprep.subr.mxu0 %v464
    %1304 = vmatpush1.msra.mxu0 %v463
    %1305 = vmatprep.subr.mxu0 %v468
    %1306 = vmatpush1.msra.mxu0 %v467
    %1307 = vmatprep.subr.mxu0 %v472
    %1308 = vmatpush1.msra.mxu0 %v471
    %1309 = vmatprep.subr.mxu0 %v476
    %1310 = vmatpush1.msra.mxu0 %v475
    %1311 = vmatprep.subr.mxu0 %v480
    %1312 = vmatpush1.msra.mxu0 %v479
    %1313 = vmatprep.subr.mxu0 %v484
    %1314 = vmatpush1.msra.mxu0 %v483
    %1315 = vmatprep.subr.mxu0 %v488
    %1316 = vmatpush1.msra.mxu0 %v487
    %1317 = vmatprep.subr.mxu0 %v492
    %1318 = vmatpush1.msra.mxu0 %v491
    %1319 = vmatprep.subr.mxu0 %v496
    %1320 = vmatpush1.msra.mxu0 %v495
    %1321 = vmatprep.subr.mxu0 0.0
    %1322 = vmatpush1.msra.mxu0 0.0
    %1323 = vmatprep.subr.mxu0 0.0
    %1324 = vmatpush1.msra.mxu0 0.0
    %1325 = vmatprep.subr.mxu0 0.0
    %1326 = vmatpush1.msra.mxu0 0.0
    %1327 = vmatprep.subr.mxu0 0.0
    %1328 = vmatpush1.msra.mxu0 0.0
    %1329 = vmatprep.subr.mxu0 0.0
    %1330 = vmatpush1.msra.mxu0 0.0
    %1331 = vmatprep.subr.mxu0 0.0
    %1332 = vmatpush1.msra.mxu0 0.0
    %1333 = vmatprep.subr.mxu0 0.0
    %1334 = vmatpush1.msra.mxu0 0.0
    %1335 = vmatprep.subr.mxu0 0.0
    %1336 = vmatpush1.msra.mxu0 0.0
    %1337 = vmatprep.subr.mxu0 0.0
    %1338 = vmatpush1.msra.mxu0 0.0
    %1339 = vmatprep.subr.mxu0 0.0
    %1340 = vmatpush1.msra.mxu0 0.0
    %1341 = vmatprep.subr.mxu0 0.0
    %1342 = vmatpush1.msra.mxu0 0.0
    %1343 = vmatprep.subr.mxu0 0.0
    %1344 = vmatpush1.msra.mxu0 0.0
    %1345 = vmatprep.subr.mxu0 0.0
    %1346 = vmatpush1.msra.mxu0 0.0
    %1347 = vmatprep.subr.mxu0 0.0
    %1348 = vmatpush1.msra.mxu0 0.0
    %1349 = vmatprep.subr.mxu0 0.0
    %1350 = vmatpush1.msra.mxu0 0.0
    %1351 = vmatprep.subr.mxu0 0.0
    %1352 = vmatpush1.msra.mxu0 0.0
    %1353 = vmatprep.mubr.f32.mxu0 0.0
    %1354 = vmatmul.mubr.f32.gmra.mrb[0].mxu0 %v1217
    %v1355 = vpop.f32.mrb[0].mxu0
    %v1356 = vadd.f32 0.0, %v1355
    %v1357 = vpop.f32.mrb[0].mxu0
    %v1358 = vadd.f32 0.0, %v1357
    %1359 = vdwg.mxu0
    %v1360 = vadd.f32 %v1213, %v1285
    %v1361 = vadd.f32 %v1214, %v1287
    %v1362 = vadd.f32 %v1215, %v1356
    %v1363 = vadd.f32 %v1216, %v1358
    %v1364 = vxor.u32 %v1360, 2147483648
    %v1365 = vxor.u32 %v1361, 2147483648
    %v1366 = vxor.u32 %v1362, 2147483648
    %v1367 = vmul.f32 %v1364, 1.442695
    %v1368 = vpow.pop %v1367
    %v1369 = vmul.f32 %v1365, 1.442695
    %v1370 = vpow.pop %v1369
    %v1371 = vmul.f32 %v1366, 1.442695
    %v1372 = vpow.pop %v1371
    %v1373 = vadd.f32 %v1368, 1.0
    %v1374 = vadd.f32 %v1370, 1.0
    %v1375 = vadd.f32 %v1372, 1.0
    %v1376 = vrcp.pop %v1373
    %v1377 = vmul.f32 1.0, %v1376
    %v1378 = vrcp.pop %v1374
    %v1379 = vmul.f32 1.0, %v1378
    %v1380 = vrcp.pop %v1375
    %v1381 = vmul.f32 1.0, %v1380
    %v1382 = vtanh.pop %v1363
    %v1383 = vld [vmem:[#allocation5] sm:$0xff]
    %v1384 = vmul.f32 %v1379, %v1383
    %v1385 = vmul.f32 %v1377, %v1382
    %v1386 = vadd.f32 %v1384, %v1385
    %v1387 = vtanh.pop %v1386
    %v1388 = vmul.f32 %v1381, %v1387
    %1389 = vst [vmem:[#allocation5] sm:$0xff] %v1386
    %1390 = vst [vmem:[#allocation4] sm:$0xff] %v1388
    %1391 = vst [vmem:[#allocation3 + $0x20] sm:$0xff] %v1388
    %v1392 = vld [vmem:[#allocation2 + $0xa0] sm:$0xff]
    %v1393 = vld [vmem:[#allocation2 + $0xa8] sm:$0xff]
    %v1394 = vld [vmem:[#allocation2 + $0xb0] sm:$0xff]
    %v1395 = vld [vmem:[#allocation2 + $0xb8] sm:$0xff]
    %v1396 = vld [vmem:[#allocation4] sm:$0xff]
    %1397 = vmatprep.subr.mxu0 %v434
    %1398 = vmatpush1.msra.mxu0 %v433
    %1399 = vmatprep.subr.mxu0 %v438
    %1400 = vmatpush1.msra.mxu0 %v437
    %1401 = vmatprep.subr.mxu0 %v442
    %1402 = vmatpush1.msra.mxu0 %v441
    %1403 = vmatprep.subr.mxu0 %v446
    %1404 = vmatpush1.msra.mxu0 %v445
    %1405 = vmatprep.subr.mxu0 %v450
    %1406 = vmatpush1.msra.mxu0 %v449
    %1407 = vmatprep.subr.mxu0 %v454
    %1408 = vmatpush1.msra.mxu0 %v453
    %1409 = vmatprep.subr.mxu0 %v458
    %1410 = vmatpush1.msra.mxu0 %v457
    %1411 = vmatprep.subr.mxu0 %v462
    %1412 = vmatpush1.msra.mxu0 %v461
    %1413 = vmatprep.subr.mxu0 %v466
    %1414 = vmatpush1.msra.mxu0 %v465
    %1415 = vmatprep.subr.mxu0 %v470
    %1416 = vmatpush1.msra.mxu0 %v469
    %1417 = vmatprep.subr.mxu0 %v474
    %1418 = vmatpush1.msra.mxu0 %v473
    %1419 = vmatprep.subr.mxu0 %v478
    %1420 = vmatpush1.msra.mxu0 %v477
    %1421 = vmatprep.subr.mxu0 %v482
    %1422 = vmatpush1.msra.mxu0 %v481
    %1423 = vmatprep.subr.mxu0 %v486
    %1424 = vmatpush1.msra.mxu0 %v485
    %1425 = vmatprep.subr.mxu0 %v490
    %1426 = vmatpush1.msra.mxu0 %v489
    %1427 = vmatprep.subr.mxu0 %v494
    %1428 = vmatpush1.msra.mxu0 %v493
    %1429 = vmatprep.subr.mxu0 0.0
    %1430 = vmatpush1.msra.mxu0 0.0
    %1431 = vmatprep.subr.mxu0 0.0
    %1432 = vmatpush1.msra.mxu0 0.0
    %1433 = vmatprep.subr.mxu0 0.0
    %1434 = vmatpush1.msra.mxu0 0.0
    %1435 = vmatprep.subr.mxu0 0.0
    %1436 = vmatpush1.msra.mxu0 0.0
    %1437 = vmatprep.subr.mxu0 0.0
    %1438 = vmatpush1.msra.mxu0 0.0
    %1439 = vmatprep.subr.mxu0 0.0
    %1440 = vmatpush1.msra.mxu0 0.0
    %1441 = vmatprep.subr.mxu0 0.0
    %1442 = vmatpush1.msra.mxu0 0.0
    %1443 = vmatprep.subr.mxu0 0.0
    %1444 = vmatpush1.msra.mxu0 0.0
    %1445 = vmatprep.subr.mxu0 0.0
    %1446 = vmatpush1.msra.mxu0 0.0
    %1447 = vmatprep.subr.mxu0 0.0
    %1448 = vmatpush1.msra.mxu0 0.0
    %1449 = vmatprep.subr.mxu0 0.0
    %1450 = vmatpush1.msra.mxu0 0.0
    %1451 = vmatprep.subr.mxu0 0.0
    %1452 = vmatpush1.msra.mxu0 0.0
    %1453 = vmatprep.subr.mxu0 0.0
    %1454 = vmatpush1.msra.mxu0 0.0
    %1455 = vmatprep.subr.mxu0 0.0
    %1456 = vmatpush1.msra.mxu0 0.0
    %1457 = vmatprep.subr.mxu0 0.0
    %1458 = vmatpush1.msra.mxu0 0.0
    %1459 = vmatprep.subr.mxu0 0.0
    %1460 = vmatpush1.msra.mxu0 0.0
    %1461 = vmatprep.mubr.f32.mxu0 0.0
    %1462 = vmatmul.mubr.f32.gmra.mrb[0].mxu0 %v1396
    %v1463 = vpop.f32.mrb[0].mxu0
    %v1464 = vadd.f32 0.0, %v1463
    %v1465 = vpop.f32.mrb[0].mxu0
    %v1466 = vadd.f32 0.0, %v1465
    %1467 = vdwg.mxu0
    %1468 = vmatprep.subr.mxu0 %v436
    %1469 = vmatpush1.msra.mxu0 %v435
    %1470 = vmatprep.subr.mxu0 %v440
    %1471 = vmatpush1.msra.mxu0 %v439
    %1472 = vmatprep.subr.mxu0 %v444
    %1473 = vmatpush1.msra.mxu0 %v443
    %1474 = vmatprep.subr.mxu0 %v448
    %1475 = vmatpush1.msra.mxu0 %v447
    %1476 = vmatprep.subr.mxu0 %v452
    %1477 = vmatpush1.msra.mxu0 %v451
    %1478 = vmatprep.subr.mxu0 %v456
    %1479 = vmatpush1.msra.mxu0 %v455
    %1480 = vmatprep.subr.mxu0 %v460
    %1481 = vmatpush1.msra.mxu0 %v459
    %1482 = vmatprep.subr.mxu0 %v464
    %1483 = vmatpush1.msra.mxu0 %v463
    %1484 = vmatprep.subr.mxu0 %v468
    %1485 = vmatpush1.msra.mxu0 %v467
    %1486 = vmatprep.subr.mxu0 %v472
    %1487 = vmatpush1.msra.mxu0 %v471
    %1488 = vmatprep.subr.mxu0 %v476
    %1489 = vmatpush1.msra.mxu0 %v475
    %1490 = vmatprep.subr.mxu0 %v480
    %1491 = vmatpush1.msra.mxu0 %v479
    %1492 = vmatprep.subr.mxu0 %v484
    %1493 = vmatpush1.msra.mxu0 %v483
    %1494 = vmatprep.subr.mxu0 %v488
    %1495 = vmatpush1.msra.mxu0 %v487
    %1496 = vmatprep.subr.mxu0 %v492
    %1497 = vmatpush1.msra.mxu0 %v491
    %1498 = vmatprep.subr.mxu0 %v496
    %1499 = vmatpush1.msra.mxu0 %v495
    %1500 = vmatprep.subr.mxu0 0.0
    %1501 = vmatpush1.msra.mxu0 0.0
    %1502 = vmatprep.subr.mxu0 0.0
    %1503 = vmatpush1.msra.mxu0 0.0
    %1504 = vmatprep.subr.mxu0 0.0
    %1505 = vmatpush1.msra.mxu0 0.0
    %1506 = vmatprep.subr.mxu0 0.0
    %1507 = vmatpush1.msra.mxu0 0.0
    %1508 = vmatprep.subr.mxu0 0.0
    %1509 = vmatpush1.msra.mxu0 0.0
    %1510 = vmatprep.subr.mxu0 0.0
    %1511 = vmatpush1.msra.mxu0 0.0
    %1512 = vmatprep.subr.mxu0 0.0
    %1513 = vmatpush1.msra.mxu0 0.0
    %1514 = vmatprep.subr.mxu0 0.0
    %1515 = vmatpush1.msra.mxu0 0.0
    %1516 = vmatprep.subr.mxu0 0.0
    %1517 = vmatpush1.msra.mxu0 0.0
    %1518 = vmatprep.subr.mxu0 0.0
    %1519 = vmatpush1.msra.mxu0 0.0
    %1520 = vmatprep.subr.mxu0 0.0
    %1521 = vmatpush1.msra.mxu0 0.0
    %1522 = vmatprep.subr.mxu0 0.0
    %1523 = vmatpush1.msra.mxu0 0.0
    %1524 = vmatprep.subr.mxu0 0.0
    %1525 = vmatpush1.msra.mxu0 0.0
    %1526 = vmatprep.subr.mxu0 0.0
    %1527 = vmatpush1.msra.mxu0 0.0
    %1528 = vmatprep.subr.mxu0 0.0
    %1529 = vmatpush1.msra.mxu0 0.0
    %1530 = vmatprep.subr.mxu0 0.0
    %1531 = vmatpush1.msra.mxu0 0.0
    %1532 = vmatprep.mubr.f32.mxu0 0.0
    %1533 = vmatmul.mubr.f32.gmra.mrb[0].mxu0 %v1396
    %v1534 = vpop.f32.mrb[0].mxu0
    %v1535 = vadd.f32 0.0, %v1534
    %v1536 = vpop.f32.mrb[0].mxu0
    %v1537 = vadd.f32 0.0, %v1536
    %1538 = vdwg.mxu0
    %v1539 = vadd.f32 %v1392, %v1464
    %v1540 = vadd.f32 %v1393, %v1466
    %v1541 = vadd.f32 %v1394, %v1535
    %v1542 = vadd.f32 %v1395, %v1537
    %v1543 = vxor.u32 %v1539, 2147483648
    %v1544 = vxor.u32 %v1540, 2147483648
    %v1545 = vxor.u32 %v1541, 2147483648
    %v1546 = vmul.f32 %v1543, 1.442695
    %v1547 = vpow.pop %v1546
    %v1548 = vmul.f32 %v1544, 1.442695
    %v1549 = vpow.pop %v1548
    %v1550 = vmul.f32 %v1545, 1.442695
    %v1551 = vpow.pop %v1550
    %v1552 = vadd.f32 %v1547, 1.0
    %v1553 = vadd.f32 %v1549, 1.0
    %v1554 = vadd.f32 %v1551, 1.0
    %v1555 = vrcp.pop %v1552
    %v1556 = vmul.f32 1.0, %v1555
    %v1557 = vrcp.pop %v1553
    %v1558 = vmul.f32 1.0, %v1557
    %v1559 = vrcp.pop %v1554
    %v1560 = vmul.f32 1.0, %v1559
    %v1561 = vtanh.pop %v1542
    %v1562 = vld [vmem:[#allocation5] sm:$0xff]
    %v1563 = vmul.f32 %v1558, %v1562
    %v1564 = vmul.f32 %v1556, %v1561
    %v1565 = vadd.f32 %v1563, %v1564
    %v1566 = vtanh.pop %v1565
    %v1567 = vmul.f32 %v1560, %v1566
    %1568 = vst [vmem:[#allocation5] sm:$0xff] %v1565
    %1569 = vst [vmem:[#allocation4] sm:$0xff] %v1567
    %1570 = vst [vmem:[#allocation3 + $0x28] sm:$0xff] %v1567
    %v1571 = vld [vmem:[#allocation2 + $0xc0] sm:$0xff]
    %v1572 = vld [vmem:[#allocation2 + $0xc8] sm:$0xff]
    %v1573 = vld [vmem:[#allocation2 + $0xd0] sm:$0xff]
    %v1574 = vld [vmem:[#allocation2 + $0xd8] sm:$0xff]
    %v1575 = vld [vmem:[#allocation4] sm:$0xff]
    %1576 = vmatprep.subr.mxu0 %v434
    %1577 = vmatpush1.msra.mxu0 %v433
    %1578 = vmatprep.subr.mxu0 %v438
    %1579 = vmatpush1.msra.mxu0 %v437
    %1580 = vmatprep.subr.mxu0 %v442
    %1581 = vmatpush1.msra.mxu0 %v441
    %1582 = vmatprep.subr.mxu0 %v446
    %1583 = vmatpush1.msra.mxu0 %v445
    %1584 = vmatprep.subr.mxu0 %v450
    %1585 = vmatpush1.msra.mxu0 %v449
    %1586 = vmatprep.subr.mxu0 %v454
    %1587 = vmatpush1.msra.mxu0 %v453
    %1588 = vmatprep.subr.mxu0 %v458
    %1589 = vmatpush1.msra.mxu0 %v457
    %1590 = vmatprep.subr.mxu0 %v462
    %1591 = vmatpush1.msra.mxu0 %v461
    %1592 = vmatprep.subr.mxu0 %v466
    %1593 = vmatpush1.msra.mxu0 %v465
    %1594 = vmatprep.subr.mxu0 %v470
    %1595 = vmatpush1.msra.mxu0 %v469
    %1596 = vmatprep.subr.mxu0 %v474
    %1597 = vmatpush1.msra.mxu0 %v473
    %1598 = vmatprep.subr.mxu0 %v478
    %1599 = vmatpush1.msra.mxu0 %v477
    %1600 = vmatprep.subr.mxu0 %v482
    %1601 = vmatpush1.msra.mxu0 %v481
    %1602 = vmatprep.subr.mxu0 %v486
    %1603 = vmatpush1.msra.mxu0 %v485
    %1604 = vmatprep.subr.mxu0 %v490
    %1605 = vmatpush1.msra.mxu0 %v489
    %1606 = vmatprep.subr.mxu0 %v494
    %1607 = vmatpush1.msra.mxu0 %v493
    %1608 = vmatprep.subr.mxu0 0.0
    %1609 = vmatpush1.msra.mxu0 0.0
    %1610 = vmatprep.subr.mxu0 0.0
    %1611 = vmatpush1.msra.mxu0 0.0
    %1612 = vmatprep.subr.mxu0 0.0
    %1613 = vmatpush1.msra.mxu0 0.0
    %1614 = vmatprep.subr.mxu0 0.0
    %1615 = vmatpush1.msra.mxu0 0.0
    %1616 = vmatprep.subr.mxu0 0.0
    %1617 = vmatpush1.msra.mxu0 0.0
    %1618 = vmatprep.subr.mxu0 0.0
    %1619 = vmatpush1.msra.mxu0 0.0
    %1620 = vmatprep.subr.mxu0 0.0
    %1621 = vmatpush1.msra.mxu0 0.0
    %1622 = vmatprep.subr.mxu0 0.0
    %1623 = vmatpush1.msra.mxu0 0.0
    %1624 = vmatprep.subr.mxu0 0.0
    %1625 = vmatpush1.msra.mxu0 0.0
    %1626 = vmatprep.subr.mxu0 0.0
    %1627 = vmatpush1.msra.mxu0 0.0
    %1628 = vmatprep.subr.mxu0 0.0
    %1629 = vmatpush1.msra.mxu0 0.0
    %1630 = vmatprep.subr.mxu0 0.0
    %1631 = vmatpush1.msra.mxu0 0.0
    %1632 = vmatprep.subr.mxu0 0.0
    %1633 = vmatpush1.msra.mxu0 0.0
    %1634 = vmatprep.subr.mxu0 0.0
    %1635 = vmatpush1.msra.mxu0 0.0
    %1636 = vmatprep.subr.mxu0 0.0
    %1637 = vmatpush1.msra.mxu0 0.0
    %1638 = vmatprep.subr.mxu0 0.0
    %1639 = vmatpush1.msra.mxu0 0.0
    %1640 = vmatprep.mubr.f32.mxu0 0.0
    %1641 = vmatmul.mubr.f32.gmra.mrb[0].mxu0 %v1575
    %v1642 = vpop.f32.mrb[0].mxu0
    %v1643 = vadd.f32 0.0, %v1642
    %v1644 = vpop.f32.mrb[0].mxu0
    %v1645 = vadd.f32 0.0, %v1644
    %1646 = vdwg.mxu0
    %1647 = vmatprep.subr.mxu0 %v436
    %1648 = vmatpush1.msra.mxu0 %v435
    %1649 = vmatprep.subr.mxu0 %v440
    %1650 = vmatpush1.msra.mxu0 %v439
    %1651 = vmatprep.subr.mxu0 %v444
    %1652 = vmatpush1.msra.mxu0 %v443
    %1653 = vmatprep.subr.mxu0 %v448
    %1654 = vmatpush1.msra.mxu0 %v447
    %1655 = vmatprep.subr.mxu0 %v452
    %1656 = vmatpush1.msra.mxu0 %v451
    %1657 = vmatprep.subr.mxu0 %v456
    %1658 = vmatpush1.msra.mxu0 %v455
    %1659 = vmatprep.subr.mxu0 %v460
    %1660 = vmatpush1.msra.mxu0 %v459
    %1661 = vmatprep.subr.mxu0 %v464
    %1662 = vmatpush1.msra.mxu0 %v463
    %1663 = vmatprep.subr.mxu0 %v468
    %1664 = vmatpush1.msra.mxu0 %v467
    %1665 = vmatprep.subr.mxu0 %v472
    %1666 = vmatpush1.msra.mxu0 %v471
    %1667 = vmatprep.subr.mxu0 %v476
    %1668 = vmatpush1.msra.mxu0 %v475
    %1669 = vmatprep.subr.mxu0 %v480
    %1670 = vmatpush1.msra.mxu0 %v479
    %1671 = vmatprep.subr.mxu0 %v484
    %1672 = vmatpush1.msra.mxu0 %v483
    %1673 = vmatprep.subr.mxu0 %v488
    %1674 = vmatpush1.msra.mxu0 %v487
    %1675 = vmatprep.subr.mxu0 %v492
    %1676 = vmatpush1.msra.mxu0 %v491
    %1677 = vmatprep.subr.mxu0 %v496
    %1678 = vmatpush1.msra.mxu0 %v495
    %1679 = vmatprep.subr.mxu0 0.0
    %1680 = vmatpush1.msra.mxu0 0.0
    %1681 = vmatprep.subr.mxu0 0.0
    %1682 = vmatpush1.msra.mxu0 0.0
    %1683 = vmatprep.subr.mxu0 0.0
    %1684 = vmatpush1.msra.mxu0 0.0
    %1685 = vmatprep.subr.mxu0 0.0
    %1686 = vmatpush1.msra.mxu0 0.0
    %1687 = vmatprep.subr.mxu0 0.0
    %1688 = vmatpush1.msra.mxu0 0.0
    %1689 = vmatprep.subr.mxu0 0.0
    %1690 = vmatpush1.msra.mxu0 0.0
    %1691 = vmatprep.subr.mxu0 0.0
    %1692 = vmatpush1.msra.mxu0 0.0
    %1693 = vmatprep.subr.mxu0 0.0
    %1694 = vmatpush1.msra.mxu0 0.0
    %1695 = vmatprep.subr.mxu0 0.0
    %1696 = vmatpush1.msra.mxu0 0.0
    %1697 = vmatprep.subr.mxu0 0.0
    %1698 = vmatpush1.msra.mxu0 0.0
    %1699 = vmatprep.subr.mxu0 0.0
    %1700 = vmatpush1.msra.mxu0 0.0
    %1701 = vmatprep.subr.mxu0 0.0
    %1702 = vmatpush1.msra.mxu0 0.0
    %1703 = vmatprep.subr.mxu0 0.0
    %1704 = vmatpush1.msra.mxu0 0.0
    %1705 = vmatprep.subr.mxu0 0.0
    %1706 = vmatpush1.msra.mxu0 0.0
    %1707 = vmatprep.subr.mxu0 0.0
    %1708 = vmatpush1.msra.mxu0 0.0
    %1709 = vmatprep.subr.mxu0 0.0
    %1710 = vmatpush1.msra.mxu0 0.0
    %1711 = vmatprep.mubr.f32.mxu0 0.0
    %1712 = vmatmul.mubr.f32.gmra.mrb[0].mxu0 %v1575
    %v1713 = vpop.f32.mrb[0].mxu0
    %v1714 = vadd.f32 0.0, %v1713
    %v1715 = vpop.f32.mrb[0].mxu0
    %v1716 = vadd.f32 0.0, %v1715
    %1717 = vdwg.mxu0
    %v1718 = vadd.f32 %v1571, %v1643
    %v1719 = vadd.f32 %v1572, %v1645
    %v1720 = vadd.f32 %v1573, %v1714
    %v1721 = vadd.f32 %v1574, %v1716
    %v1722 = vxor.u32 %v1718, 2147483648
    %v1723 = vxor.u32 %v1719, 2147483648
    %v1724 = vxor.u32 %v1720, 2147483648
    %v1725 = vmul.f32 %v1722, 1.442695
    %v1726 = vpow.pop %v1725
    %v1727 = vmul.f32 %v1723, 1.442695
    %v1728 = vpow.pop %v1727
    %v1729 = vmul.f32 %v1724, 1.442695
    %v1730 = vpow.pop %v1729
    %v1731 = vadd.f32 %v1726, 1.0
    %v1732 = vadd.f32 %v1728, 1.0
    %v1733 = vadd.f32 %v1730, 1.0
    %v1734 = vrcp.pop %v1731
    %v1735 = vmul.f32 1.0, %v1734
    %v1736 = vrcp.pop %v1732
    %v1737 = vmul.f32 1.0, %v1736
    %v1738 = vrcp.pop %v1733
    %v1739 = vmul.f32 1.0, %v1738
    %v1740 = vtanh.pop %v1721
    %v1741 = vld [vmem:[#allocation5] sm:$0xff]
    %v1742 = vmul.f32 %v1737, %v1741
    %v1743 = vmul.f32 %v1735, %v1740
    %v1744 = vadd.f32 %v1742, %v1743
    %v1745 = vtanh.pop %v1744
    %v1746 = vmul.f32 %v1739, %v1745
    %1747 = vst [vmem:[#allocation5] sm:$0xff] %v1744
    %1748 = vst [vmem:[#allocation4] sm:$0xff] %v1746
    %1749 = vst [vmem:[#allocation3 + $0x30] sm:$0xff] %v1746
    %v1750 = vld [vmem:[#allocation2 + $0xe0] sm:$0xff]
    %v1751 = vld [vmem:[#allocation2 + $0xe8] sm:$0xff]
    %v1752 = vld [vmem:[#allocation2 + $0xf0] sm:$0xff]
    %v1753 = vld [vmem:[#allocation2 + $0xf8] sm:$0xff]
    %v1754 = vld [vmem:[#allocation4] sm:$0xff]
    %1755 = vmatprep.subr.mxu0 %v434
    %1756 = vmatpush1.msra.mxu0 %v433
    %1757 = vmatprep.subr.mxu0 %v438
    %1758 = vmatpush1.msra.mxu0 %v437
    %1759 = vmatprep.subr.mxu0 %v442
    %1760 = vmatpush1.msra.mxu0 %v441
    %1761 = vmatprep.subr.mxu0 %v446
    %1762 = vmatpush1.msra.mxu0 %v445
    %1763 = vmatprep.subr.mxu0 %v450
    %1764 = vmatpush1.msra.mxu0 %v449
    %1765 = vmatprep.subr.mxu0 %v454
    %1766 = vmatpush1.msra.mxu0 %v453
    %1767 = vmatprep.subr.mxu0 %v458
    %1768 = vmatpush1.msra.mxu0 %v457
    %1769 = vmatprep.subr.mxu0 %v462
    %1770 = vmatpush1.msra.mxu0 %v461
    %1771 = vmatprep.subr.mxu0 %v466
    %1772 = vmatpush1.msra.mxu0 %v465
    %1773 = vmatprep.subr.mxu0 %v470
    %1774 = vmatpush1.msra.mxu0 %v469
    %1775 = vmatprep.subr.mxu0 %v474
    %1776 = vmatpush1.msra.mxu0 %v473
    %1777 = vmatprep.subr.mxu0 %v478
    %1778 = vmatpush1.msra.mxu0 %v477
    %1779 = vmatprep.subr.mxu0 %v482
    %1780 = vmatpush1.msra.mxu0 %v481
    %1781 = vmatprep.subr.mxu0 %v486
    %1782 = vmatpush1.msra.mxu0 %v485
    %1783 = vmatprep.subr.mxu0 %v490
    %1784 = vmatpush1.msra.mxu0 %v489
    %1785 = vmatprep.subr.mxu0 %v494
    %1786 = vmatpush1.msra.mxu0 %v493
    %1787 = vmatprep.subr.mxu0 0.0
    %1788 = vmatpush1.msra.mxu0 0.0
    %1789 = vmatprep.subr.mxu0 0.0
    %1790 = vmatpush1.msra.mxu0 0.0
    %1791 = vmatprep.subr.mxu0 0.0
    %1792 = vmatpush1.msra.mxu0 0.0
    %1793 = vmatprep.subr.mxu0 0.0
    %1794 = vmatpush1.msra.mxu0 0.0
    %1795 = vmatprep.subr.mxu0 0.0
    %1796 = vmatpush1.msra.mxu0 0.0
    %1797 = vmatprep.subr.mxu0 0.0
    %1798 = vmatpush1.msra.mxu0 0.0
    %1799 = vmatprep.subr.mxu0 0.0
    %1800 = vmatpush1.msra.mxu0 0.0
    %1801 = vmatprep.subr.mxu0 0.0
    %1802 = vmatpush1.msra.mxu0 0.0
    %1803 = vmatprep.subr.mxu0 0.0
    %1804 = vmatpush1.msra.mxu0 0.0
    %1805 = vmatprep.subr.mxu0 0.0
    %1806 = vmatpush1.msra.mxu0 0.0
    %1807 = vmatprep.subr.mxu0 0.0
    %1808 = vmatpush1.msra.mxu0 0.0
    %1809 = vmatprep.subr.mxu0 0.0
    %1810 = vmatpush1.msra.mxu0 0.0
    %1811 = vmatprep.subr.mxu0 0.0
    %1812 = vmatpush1.msra.mxu0 0.0
    %1813 = vmatprep.subr.mxu0 0.0
    %1814 = vmatpush1.msra.mxu0 0.0
    %1815 = vmatprep.subr.mxu0 0.0
    %1816 = vmatpush1.msra.mxu0 0.0
    %1817 = vmatprep.subr.mxu0 0.0
    %1818 = vmatpush1.msra.mxu0 0.0
    %1819 = vmatprep.mubr.f32.mxu0 0.0
    %1820 = vmatmul.mubr.f32.gmra.mrb[0].mxu0 %v1754
    %v1821 = vpop.f32.mrb[0].mxu0
    %v1822 = vadd.f32 0.0, %v1821
    %v1823 = vpop.f32.mrb[0].mxu0
    %v1824 = vadd.f32 0.0, %v1823
    %1825 = vdwg.mxu0
    %1826 = vmatprep.subr.mxu0 %v436
    %1827 = vmatpush1.msra.mxu0 %v435
    %1828 = vmatprep.subr.mxu0 %v440
    %1829 = vmatpush1.msra.mxu0 %v439
    %1830 = vmatprep.subr.mxu0 %v444
    %1831 = vmatpush1.msra.mxu0 %v443
    %1832 = vmatprep.subr.mxu0 %v448
    %1833 = vmatpush1.msra.mxu0 %v447
    %1834 = vmatprep.subr.mxu0 %v452
    %1835 = vmatpush1.msra.mxu0 %v451
    %1836 = vmatprep.subr.mxu0 %v456
    %1837 = vmatpush1.msra.mxu0 %v455
    %1838 = vmatprep.subr.mxu0 %v460
    %1839 = vmatpush1.msra.mxu0 %v459
    %1840 = vmatprep.subr.mxu0 %v464
    %1841 = vmatpush1.msra.mxu0 %v463
    %1842 = vmatprep.subr.mxu0 %v468
    %1843 = vmatpush1.msra.mxu0 %v467
    %1844 = vmatprep.subr.mxu0 %v472
    %1845 = vmatpush1.msra.mxu0 %v471
    %1846 = vmatprep.subr.mxu0 %v476
    %1847 = vmatpush1.msra.mxu0 %v475
    %1848 = vmatprep.subr.mxu0 %v480
    %1849 = vmatpush1.msra.mxu0 %v479
    %1850 = vmatprep.subr.mxu0 %v484
    %1851 = vmatpush1.msra.mxu0 %v483
    %1852 = vmatprep.subr.mxu0 %v488
    %1853 = vmatpush1.msra.mxu0 %v487
    %1854 = vmatprep.subr.mxu0 %v492
    %1855 = vmatpush1.msra.mxu0 %v491
    %1856 = vmatprep.subr.mxu0 %v496
    %1857 = vmatpush1.msra.mxu0 %v495
    %1858 = vmatprep.subr.mxu0 0.0
    %1859 = vmatpush1.msra.mxu0 0.0
    %1860 = vmatprep.subr.mxu0 0.0
    %1861 = vmatpush1.msra.mxu0 0.0
    %1862 = vmatprep.subr.mxu0 0.0
    %1863 = vmatpush1.msra.mxu0 0.0
    %1864 = vmatprep.subr.mxu0 0.0
    %1865 = vmatpush1.msra.mxu0 0.0
    %1866 = vmatprep.subr.mxu0 0.0
    %1867 = vmatpush1.msra.mxu0 0.0
    %1868 = vmatprep.subr.mxu0 0.0
    %1869 = vmatpush1.msra.mxu0 0.0
    %1870 = vmatprep.subr.mxu0 0.0
    %1871 = vmatpush1.msra.mxu0 0.0
    %1872 = vmatprep.subr.mxu0 0.0
    %1873 = vmatpush1.msra.mxu0 0.0
    %1874 = vmatprep.subr.mxu0 0.0
    %1875 = vmatpush1.msra.mxu0 0.0
    %1876 = vmatprep.subr.mxu0 0.0
    %1877 = vmatpush1.msra.mxu0 0.0
    %1878 = vmatprep.subr.mxu0 0.0
    %1879 = vmatpush1.msra.mxu0 0.0
    %1880 = vmatprep.subr.mxu0 0.0
    %1881 = vmatpush1.msra.mxu0 0.0
    %1882 = vmatprep.subr.mxu0 0.0
    %1883 = vmatpush1.msra.mxu0 0.0
    %1884 = vmatprep.subr.mxu0 0.0
    %1885 = vmatpush1.msra.mxu0 0.0
    %1886 = vmatprep.subr.mxu0 0.0
    %1887 = vmatpush1.msra.mxu0 0.0
    %1888 = vmatprep.subr.mxu0 0.0
    %1889 = vmatpush1.msra.mxu0 0.0
    %1890 = vmatprep.mubr.f32.mxu0 0.0
    %1891 = vmatmul.mubr.f32.gmra.mrb[0].mxu0 %v1754
    %v1892 = vpop.f32.mrb[0].mxu0
    %v1893 = vadd.f32 0.0, %v1892
    %v1894 = vpop.f32.mrb[0].mxu0
    %v1895 = vadd.f32 0.0, %v1894
    %1896 = vdwg.mxu0
    %v1897 = vadd.f32 %v1750, %v1822
    %v1898 = vadd.f32 %v1751, %v1824
    %v1899 = vadd.f32 %v1752, %v1893
    %v1900 = vadd.f32 %v1753, %v1895
    %v1901 = vxor.u32 %v1897, 2147483648
    %v1902 = vxor.u32 %v1898, 2147483648
    %v1903 = vxor.u32 %v1899, 2147483648
    %v1904 = vmul.f32 %v1901, 1.442695
    %v1905 = vpow.pop %v1904
    %v1906 = vmul.f32 %v1902, 1.442695
    %v1907 = vpow.pop %v1906
    %v1908 = vmul.f32 %v1903, 1.442695
    %v1909 = vpow.pop %v1908
    %v1910 = vadd.f32 %v1905, 1.0
    %v1911 = vadd.f32 %v1907, 1.0
    %v1912 = vadd.f32 %v1909, 1.0
    %v1913 = vrcp.pop %v1910
    %v1914 = vmul.f32 1.0, %v1913
    %v1915 = vrcp.pop %v1911
    %v1916 = vmul.f32 1.0, %v1915
    %v1917 = vrcp.pop %v1912
    %v1918 = vmul.f32 1.0, %v1917
    %v1919 = vtanh.pop %v1900
    %v1920 = vld [vmem:[#allocation5] sm:$0xff]
    %v1921 = vmul.f32 %v1916, %v1920
    %v1922 = vmul.f32 %v1914, %v1919
    %v1923 = vadd.f32 %v1921, %v1922
    %v1924 = vtanh.pop %v1923
    %v1925 = vmul.f32 %v1918, %v1924
    %1926 = vst [vmem:[#allocation5] sm:$0xff] %v1923
    %1927 = vst [vmem:[#allocation4] sm:$0xff] %v1925
    %1928 = vst [vmem:[#allocation3 + $0x38] sm:$0xff] %v1925
    %v1929 = vld [vmem:[#allocation3] sm:$0xff]
    %v1930 = vld [vmem:[#allocation3 + $0x8] sm:$0xff]
    %v1931 = vld [vmem:[#allocation3 + $0x10] sm:$0xff]
    %v1932 = vld [vmem:[#allocation3 + $0x18] sm:$0xff]
    %v1933 = vld [vmem:[#allocation3 + $0x20] sm:$0xff]
    %v1934 = vld [vmem:[#allocation3 + $0x28] sm:$0xff]
    %v1935 = vld [vmem:[#allocation3 + $0x30] sm:$0xff]
    %v1936 = vld [vmem:[#allocation3 + $0x38] sm:$0xff]
    %s1937 = scalar_lea.vmem [#allocation9], 512
    %v1938 = vld [vmem:[%s1937] sm:$0xff]
    %v1939 = vld [vmem:[%s1937 + $0x8] sm:$0xff]
    %v1940 = vld [vmem:[%s1937 + $0x10] sm:$0xff]
    %v1941 = vld [vmem:[%s1937 + $0x18] sm:$0xff]
    %v1942 = vld [vmem:[%s1937 + $0x20] sm:$0xff]
    %v1943 = vld [vmem:[%s1937 + $0x28] sm:$0xff]
    %v1944 = vld [vmem:[%s1937 + $0x30] sm:$0xff]
    %v1945 = vld [vmem:[%s1937 + $0x38] sm:$0xff]
    %v1946 = vld [vmem:[%s1937 + $0x40] sm:$0xff]
    %v1947 = vld [vmem:[%s1937 + $0x48] sm:$0xff]
    %v1948 = vld [vmem:[%s1937 + $0x50] sm:$0xff]
    %v1949 = vld [vmem:[%s1937 + $0x58] sm:$0xff]
    %v1950 = vld [vmem:[%s1937 + $0x60] sm:$0xff]
    %v1951 = vld [vmem:[%s1937 + $0x68] sm:$0xff]
    %v1952 = vld [vmem:[%s1937 + $0x70] sm:$0xff]
    %v1953 = vld [vmem:[%s1937 + $0x78] sm:$0xff]
    %v1954 = vld [vmem:[%s1937 + $0x80] sm:$0xff]
    %v1955 = vld [vmem:[%s1937 + $0x88] sm:$0xff]
    %v1956 = vld [vmem:[%s1937 + $0x90] sm:$0xff]
    %v1957 = vld [vmem:[%s1937 + $0x98] sm:$0xff]
    %v1958 = vld [vmem:[%s1937 + $0xa0] sm:$0xff]
    %v1959 = vld [vmem:[%s1937 + $0xa8] sm:$0xff]
    %v1960 = vld [vmem:[%s1937 + $0xb0] sm:$0xff]
    %v1961 = vld [vmem:[%s1937 + $0xb8] sm:$0xff]
    %v1962 = vld [vmem:[%s1937 + $0xc0] sm:$0xff]
    %v1963 = vld [vmem:[%s1937 + $0xc8] sm:$0xff]
    %v1964 = vld [vmem:[%s1937 + $0xd0] sm:$0xff]
    %v1965 = vld [vmem:[%s1937 + $0xd8] sm:$0xff]
    %v1966 = vld [vmem:[%s1937 + $0xe0] sm:$0xff]
    %v1967 = vld [vmem:[%s1937 + $0xe8] sm:$0xff]
    %v1968 = vld [vmem:[%s1937 + $0xf0] sm:$0xff]
    %v1969 = vld [vmem:[%s1937 + $0xf8] sm:$0xff]
    %v1970 = vld [vmem:[%s1937 + $0x100] sm:$0xff]
    %v1971 = vld [vmem:[%s1937 + $0x108] sm:$0xff]
    %v1972 = vld [vmem:[%s1937 + $0x110] sm:$0xff]
    %v1973 = vld [vmem:[%s1937 + $0x118] sm:$0xff]
    %v1974 = vld [vmem:[%s1937 + $0x120] sm:$0xff]
    %v1975 = vld [vmem:[%s1937 + $0x128] sm:$0xff]
    %v1976 = vld [vmem:[%s1937 + $0x130] sm:$0xff]
    %v1977 = vld [vmem:[%s1937 + $0x138] sm:$0xff]
    %v1978 = vld [vmem:[%s1937 + $0x140] sm:$0xff]
    %v1979 = vld [vmem:[%s1937 + $0x148] sm:$0xff]
    %v1980 = vld [vmem:[%s1937 + $0x150] sm:$0xff]
    %v1981 = vld [vmem:[%s1937 + $0x158] sm:$0xff]
    %v1982 = vld [vmem:[%s1937 + $0x160] sm:$0xff]
    %v1983 = vld [vmem:[%s1937 + $0x168] sm:$0xff]
    %v1984 = vld [vmem:[%s1937 + $0x170] sm:$0xff]
    %v1985 = vld [vmem:[%s1937 + $0x178] sm:$0xff]
    %v1986 = vld [vmem:[%s1937 + $0x180] sm:$0xff]
    %v1987 = vld [vmem:[%s1937 + $0x188] sm:$0xff]
    %v1988 = vld [vmem:[%s1937 + $0x190] sm:$0xff]
    %v1989 = vld [vmem:[%s1937 + $0x198] sm:$0xff]
    %v1990 = vld [vmem:[%s1937 + $0x1a0] sm:$0xff]
    %v1991 = vld [vmem:[%s1937 + $0x1a8] sm:$0xff]
    %v1992 = vld [vmem:[%s1937 + $0x1b0] sm:$0xff]
    %v1993 = vld [vmem:[%s1937 + $0x1b8] sm:$0xff]
    %v1994 = vld [vmem:[%s1937 + $0x1c0] sm:$0xff]
    %v1995 = vld [vmem:[%s1937 + $0x1c8] sm:$0xff]
    %v1996 = vld [vmem:[%s1937 + $0x1d0] sm:$0xff]
    %v1997 = vld [vmem:[%s1937 + $0x1d8] sm:$0xff]
    %v1998 = vld [vmem:[%s1937 + $0x1e0] sm:$0xff]
    %v1999 = vld [vmem:[%s1937 + $0x1e8] sm:$0xff]
    %v2000 = vld [vmem:[%s1937 + $0x1f0] sm:$0xff]
    %v2001 = vld [vmem:[%s1937 + $0x1f8] sm:$0xff]
    %s2002 = scalar_lea.vmem %s3, 4
    %v2003 = vld [vmem:[%s2002] sm:$0xf]
    %v2005 = vlaneseq
    %v2006 = vshrl.u32 %v2005, 7
    %v2007 = vsub.s32 0, %v2006
    %v2008 = vrot.slane %v2003, %v2007
    %v2009 = vlaneseq
    %v2010 = vshrl.u32 %v2009, 7
    %v2011 = vsub.s32 1, %v2010
    %v2012 = vrot.slane %v2003, %v2011
    %v2013 = vlaneseq
    %v2014 = vshrl.u32 %v2013, 7
    %v2015 = vsub.s32 2, %v2014
    %v2016 = vrot.slane %v2003, %v2015
    %v2017 = vlaneseq
    %v2018 = vshrl.u32 %v2017, 7
    %v2019 = vsub.s32 3, %v2018
    %v2020 = vrot.slane %v2003, %v2019
    %2025 = vmatprep.subr.mxu0 %v1939
    %2026 = vmatpush1.msra.mxu0 %v1938
    %2027 = vmatprep.subr.mxu0 %v1943
    %2028 = vmatpush1.msra.mxu0 %v1942
    %2029 = vmatprep.subr.mxu0 %v1947
    %2030 = vmatpush1.msra.mxu0 %v1946
    %2031 = vmatprep.subr.mxu0 %v1951
    %2032 = vmatpush1.msra.mxu0 %v1950
    %2033 = vmatprep.subr.mxu0 %v1955
    %2034 = vmatpush1.msra.mxu0 %v1954
    %2035 = vmatprep.subr.mxu0 %v1959
    %2036 = vmatpush1.msra.mxu0 %v1958
    %2037 = vmatprep.subr.mxu0 %v1963
    %2038 = vmatpush1.msra.mxu0 %v1962
    %2039 = vmatprep.subr.mxu0 %v1967
    %2040 = vmatpush1.msra.mxu0 %v1966
    %2041 = vmatprep.subr.mxu0 %v1971
    %2042 = vmatpush1.msra.mxu0 %v1970
    %2043 = vmatprep.subr.mxu0 %v1975
    %2044 = vmatpush1.msra.mxu0 %v1974
    %2045 = vmatprep.subr.mxu0 %v1979
    %2046 = vmatpush1.msra.mxu0 %v1978
    %2047 = vmatprep.subr.mxu0 %v1983
    %2048 = vmatpush1.msra.mxu0 %v1982
    %2049 = vmatprep.subr.mxu0 %v1987
    %2050 = vmatpush1.msra.mxu0 %v1986
    %2051 = vmatprep.subr.mxu0 %v1991
    %2052 = vmatpush1.msra.mxu0 %v1990
    %2053 = vmatprep.subr.mxu0 %v1995
    %2054 = vmatpush1.msra.mxu0 %v1994
    %2055 = vmatprep.subr.mxu0 %v1999
    %2056 = vmatpush1.msra.mxu0 %v1998
    %2057 = vmatprep.subr.mxu0 0.0
    %2058 = vmatpush1.msra.mxu0 0.0
    %2059 = vmatprep.subr.mxu0 0.0
    %2060 = vmatpush1.msra.mxu0 0.0
    %2061 = vmatprep.subr.mxu0 0.0
    %2062 = vmatpush1.msra.mxu0 0.0
    %2063 = vmatprep.subr.mxu0 0.0
    %2064 = vmatpush1.msra.mxu0 0.0
    %2065 = vmatprep.subr.mxu0 0.0
    %2066 = vmatpush1.msra.mxu0 0.0
    %2067 = vmatprep.subr.mxu0 0.0
    %2068 = vmatpush1.msra.mxu0 0.0
    %2069 = vmatprep.subr.mxu0 0.0
    %2070 = vmatpush1.msra.mxu0 0.0
    %2071 = vmatprep.subr.mxu0 0.0
    %2072 = vmatpush1.msra.mxu0 0.0
    %2073 = vmatprep.subr.mxu0 0.0
    %2074 = vmatpush1.msra.mxu0 0.0
    %2075 = vmatprep.subr.mxu0 0.0
    %2076 = vmatpush1.msra.mxu0 0.0
    %2077 = vmatprep.subr.mxu0 0.0
    %2078 = vmatpush1.msra.mxu0 0.0
    %2079 = vmatprep.subr.mxu0 0.0
    %2080 = vmatpush1.msra.mxu0 0.0
    %2081 = vmatprep.subr.mxu0 0.0
    %2082 = vmatpush1.msra.mxu0 0.0
    %2083 = vmatprep.subr.mxu0 0.0
    %2084 = vmatpush1.msra.mxu0 0.0
    %2085 = vmatprep.subr.mxu0 0.0
    %2086 = vmatpush1.msra.mxu0 0.0
    %2087 = vmatprep.subr.mxu0 0.0
    %2088 = vmatpush1.msra.mxu0 0.0
    %2089 = vmatprep.mubr.f32.mxu0 0.0
    %2090 = vmatmul.mubr.f32.gmra.mrb[0].mxu0 %v1929
    %v2091 = vpop.f32.mrb[0].mxu0
    %v2092 = vadd.f32 %v2008, %v2091
    %v2093 = vpop.f32.mrb[0].mxu0
    %v2094 = vadd.f32 %v2012, %v2093
    %2095 = vmatprep.mubr.f32.mxu0 0.0
    %2096 = vmatmul.mubr.f32.gmra.mrb[0].mxu0 %v1930
    %v2097 = vpop.f32.mrb[0].mxu0
    %v2098 = vadd.f32 %v2008, %v2097
    %v2099 = vpop.f32.mrb[0].mxu0
    %v2100 = vadd.f32 %v2012, %v2099
    %2101 = vmatprep.mubr.f32.mxu0 0.0
    %2102 = vmatmul.mubr.f32.gmra.mrb[0].mxu0 %v1931
    %v2103 = vpop.f32.mrb[0].mxu0
    %v2104 = vadd.f32 %v2008, %v2103
    %v2105 = vpop.f32.mrb[0].mxu0
    %v2106 = vadd.f32 %v2012, %v2105
    %2107 = vmatprep.mubr.f32.mxu0 0.0
    %2108 = vmatmul.mubr.f32.gmra.mrb[0].mxu0 %v1932
    %v2109 = vpop.f32.mrb[0].mxu0
    %v2110 = vadd.f32 %v2008, %v2109
    %v2111 = vpop.f32.mrb[0].mxu0
    %v2112 = vadd.f32 %v2012, %v2111
    %2113 = vmatprep.mubr.f32.mxu0 0.0
    %2114 = vmatmul.mubr.f32.gmra.mrb[0].mxu0 %v1933
    %v2115 = vpop.f32.mrb[0].mxu0
    %v2116 = vadd.f32 %v2008, %v2115
    %v2117 = vpop.f32.mrb[0].mxu0
    %v2118 = vadd.f32 %v2012, %v2117
    %2119 = vmatprep.mubr.f32.mxu0 0.0
    %2120 = vmatmul.mubr.f32.gmra.mrb[0].mxu0 %v1934
    %v2121 = vpop.f32.mrb[0].mxu0
    %v2122 = vadd.f32 %v2008, %v2121
    %v2123 = vpop.f32.mrb[0].mxu0
    %v2124 = vadd.f32 %v2012, %v2123
    %2125 = vmatprep.mubr.f32.mxu0 0.0
    %2126 = vmatmul.mubr.f32.gmra.mrb[0].mxu0 %v1935
    %v2127 = vpop.f32.mrb[0].mxu0
    %v2128 = vadd.f32 %v2008, %v2127
    %v2129 = vpop.f32.mrb[0].mxu0
    %v2130 = vadd.f32 %v2012, %v2129
    %2131 = vmatprep.mubr.f32.mxu0 0.0
    %2132 = vmatmul.mubr.f32.gmra.mrb[0].mxu0 %v1936
    %v2133 = vpop.f32.mrb[0].mxu0
    %v2134 = vadd.f32 %v2008, %v2133
    %v2135 = vpop.f32.mrb[0].mxu0
    %v2136 = vadd.f32 %v2012, %v2135
    %2137 = vdwg.mxu0
    %2138 = vmatprep.subr.mxu0 %v1941
    %2139 = vmatpush1.msra.mxu0 %v1940
    %2140 = vmatprep.subr.mxu0 %v1945
    %2141 = vmatpush1.msra.mxu0 %v1944
    %2142 = vmatprep.subr.mxu0 %v1949
    %2143 = vmatpush1.msra.mxu0 %v1948
    %2144 = vmatprep.subr.mxu0 %v1953
    %2145 = vmatpush1.msra.mxu0 %v1952
    %2146 = vmatprep.subr.mxu0 %v1957
    %2147 = vmatpush1.msra.mxu0 %v1956
    %2148 = vmatprep.subr.mxu0 %v1961
    %2149 = vmatpush1.msra.mxu0 %v1960
    %2150 = vmatprep.subr.mxu0 %v1965
    %2151 = vmatpush1.msra.mxu0 %v1964
    %2152 = vmatprep.subr.mxu0 %v1969
    %2153 = vmatpush1.msra.mxu0 %v1968
    %2154 = vmatprep.subr.mxu0 %v1973
    %2155 = vmatpush1.msra.mxu0 %v1972
    %2156 = vmatprep.subr.mxu0 %v1977
    %2157 = vmatpush1.msra.mxu0 %v1976
    %2158 = vmatprep.subr.mxu0 %v1981
    %2159 = vmatpush1.msra.mxu0 %v1980
    %2160 = vmatprep.subr.mxu0 %v1985
    %2161 = vmatpush1.msra.mxu0 %v1984
    %2162 = vmatprep.subr.mxu0 %v1989
    %2163 = vmatpush1.msra.mxu0 %v1988
    %2164 = vmatprep.subr.mxu0 %v1993
    %2165 = vmatpush1.msra.mxu0 %v1992
    %2166 = vmatprep.subr.mxu0 %v1997
    %2167 = vmatpush1.msra.mxu0 %v1996
    %2168 = vmatprep.subr.mxu0 %v2001
    %2169 = vmatpush1.msra.mxu0 %v2000
    %2170 = vmatprep.subr.mxu0 0.0
    %2171 = vmatpush1.msra.mxu0 0.0
    %2172 = vmatprep.subr.mxu0 0.0
    %2173 = vmatpush1.msra.mxu0 0.0
    %2174 = vmatprep.subr.mxu0 0.0
    %2175 = vmatpush1.msra.mxu0 0.0
    %2176 = vmatprep.subr.mxu0 0.0
    %2177 = vmatpush1.msra.mxu0 0.0
    %2178 = vmatprep.subr.mxu0 0.0
    %2179 = vmatpush1.msra.mxu0 0.0
    %2180 = vmatprep.subr.mxu0 0.0
    %2181 = vmatpush1.msra.mxu0 0.0
    %2182 = vmatprep.subr.mxu0 0.0
    %2183 = vmatpush1.msra.mxu0 0.0
    %2184 = vmatprep.subr.mxu0 0.0
    %2185 = vmatpush1.msra.mxu0 0.0
    %2186 = vmatprep.subr.mxu0 0.0
    %2187 = vmatpush1.msra.mxu0 0.0
    %2188 = vmatprep.subr.mxu0 0.0
    %2189 = vmatpush1.msra.mxu0 0.0
    %2190 = vmatprep.subr.mxu0 0.0
    %2191 = vmatpush1.msra.mxu0 0.0
    %2192 = vmatprep.subr.mxu0 0.0
    %2193 = vmatpush1.msra.mxu0 0.0
    %2194 = vmatprep.subr.mxu0 0.0
    %2195 = vmatpush1.msra.mxu0 0.0
    %2196 = vmatprep.subr.mxu0 0.0
    %2197 = vmatpush1.msra.mxu0 0.0
    %2198 = vmatprep.subr.mxu0 0.0
    %2199 = vmatpush1.msra.mxu0 0.0
    %2200 = vmatprep.subr.mxu0 0.0
    %2201 = vmatpush1.msra.mxu0 0.0
    %2202 = vmatprep.mubr.f32.mxu0 0.0
    %2203 = vmatmul.mubr.f32.gmra.mrb[0].mxu0 %v1929
    %v2204 = vpop.f32.mrb[0].mxu0
    %v2205 = vadd.f32 %v2016, %v2204
    %v2206 = vpop.f32.mrb[0].mxu0
    %v2207 = vadd.f32 %v2020, %v2206
    %2208 = vmatprep.mubr.f32.mxu0 0.0
    %2209 = vmatmul.mubr.f32.gmra.mrb[0].mxu0 %v1930
    %v2210 = vpop.f32.mrb[0].mxu0
    %v2211 = vadd.f32 %v2016, %v2210
    %v2212 = vpop.f32.mrb[0].mxu0
    %v2213 = vadd.f32 %v2020, %v2212
    %2214 = vmatprep.mubr.f32.mxu0 0.0
    %2215 = vmatmul.mubr.f32.gmra.mrb[0].mxu0 %v1931
    %v2216 = vpop.f32.mrb[0].mxu0
    %v2217 = vadd.f32 %v2016, %v2216
    %v2218 = vpop.f32.mrb[0].mxu0
    %v2219 = vadd.f32 %v2020, %v2218
    %2220 = vmatprep.mubr.f32.mxu0 0.0
    %2221 = vmatmul.mubr.f32.gmra.mrb[0].mxu0 %v1932
    %v2222 = vpop.f32.mrb[0].mxu0
    %v2223 = vadd.f32 %v2016, %v2222
    %v2224 = vpop.f32.mrb[0].mxu0
    %v2225 = vadd.f32 %v2020, %v2224
    %2226 = vmatprep.mubr.f32.mxu0 0.0
    %2227 = vmatmul.mubr.f32.gmra.mrb[0].mxu0 %v1933
    %v2228 = vpop.f32.mrb[0].mxu0
    %v2229 = vadd.f32 %v2016, %v2228
    %v2230 = vpop.f32.mrb[0].mxu0
    %v2231 = vadd.f32 %v2020, %v2230
    %2232 = vmatprep.mubr.f32.mxu0 0.0
    %2233 = vmatmul.mubr.f32.gmra.mrb[0].mxu0 %v1934
    %v2234 = vpop.f32.mrb[0].mxu0
    %v2235 = vadd.f32 %v2016, %v2234
    %v2236 = vpop.f32.mrb[0].mxu0
    %v2237 = vadd.f32 %v2020, %v2236
    %2238 = vmatprep.mubr.f32.mxu0 0.0
    %2239 = vmatmul.mubr.f32.gmra.mrb[0].mxu0 %v1935
    %v2240 = vpop.f32.mrb[0].mxu0
    %v2241 = vadd.f32 %v2016, %v2240
    %v2242 = vpop.f32.mrb[0].mxu0
    %v2243 = vadd.f32 %v2020, %v2242
    %2244 = vmatprep.mubr.f32.mxu0 0.0
    %2245 = vmatmul.mubr.f32.gmra.mrb[0].mxu0 %v1936
    %v2246 = vpop.f32.mrb[0].mxu0
    %v2247 = vadd.f32 %v2016, %v2246
    %v2248 = vpop.f32.mrb[0].mxu0
    %v2249 = vadd.f32 %v2020, %v2248
    %2250 = vdwg.mxu0
    %2251 = vst [vmem:[#allocation2] sm:$0xff] %v2092
    %2252 = vst [vmem:[#allocation2 + $0x8] sm:$0xff] %v2094
    %2253 = vst [vmem:[#allocation2 + $0x10] sm:$0xff] %v2205
    %2254 = vst [vmem:[#allocation2 + $0x18] sm:$0xff] %v2207
    %2255 = vst [vmem:[#allocation2 + $0x20] sm:$0xff] %v2098
    %2256 = vst [vmem:[#allocation2 + $0x28] sm:$0xff] %v2100
    %2257 = vst [vmem:[#allocation2 + $0x30] sm:$0xff] %v2211
    %2258 = vst [vmem:[#allocation2 + $0x38] sm:$0xff] %v2213
    %2259 = vst [vmem:[#allocation2 + $0x40] sm:$0xff] %v2104
    %2260 = vst [vmem:[#allocation2 + $0x48] sm:$0xff] %v2106
    %2261 = vst [vmem:[#allocation2 + $0x50] sm:$0xff] %v2217
    %2262 = vst [vmem:[#allocation2 + $0x58] sm:$0xff] %v2219
    %2263 = vst [vmem:[#allocation2 + $0x60] sm:$0xff] %v2110
    %2264 = vst [vmem:[#allocation2 + $0x68] sm:$0xff] %v2112
    %2265 = vst [vmem:[#allocation2 + $0x70] sm:$0xff] %v2223
    %2266 = vst [vmem:[#allocation2 + $0x78] sm:$0xff] %v2225
    %2267 = vst [vmem:[#allocation2 + $0x80] sm:$0xff] %v2116
    %2268 = vst [vmem:[#allocation2 + $0x88] sm:$0xff] %v2118
    %2269 = vst [vmem:[#allocation2 + $0x90] sm:$0xff] %v2229
    %2270 = vst [vmem:[#allocation2 + $0x98] sm:$0xff] %v2231
    %2271 = vst [vmem:[#allocation2 + $0xa0] sm:$0xff] %v2122
    %2272 = vst [vmem:[#allocation2 + $0xa8] sm:$0xff] %v2124
    %2273 = vst [vmem:[#allocation2 + $0xb0] sm:$0xff] %v2235
    %2274 = vst [vmem:[#allocation2 + $0xb8] sm:$0xff] %v2237
    %2275 = vst [vmem:[#allocation2 + $0xc0] sm:$0xff] %v2128
    %2276 = vst [vmem:[#allocation2 + $0xc8] sm:$0xff] %v2130
    %2277 = vst [vmem:[#allocation2 + $0xd0] sm:$0xff] %v2241
    %2278 = vst [vmem:[#allocation2 + $0xd8] sm:$0xff] %v2243
    %2279 = vst [vmem:[#allocation2 + $0xe0] sm:$0xff] %v2134
    %2280 = vst [vmem:[#allocation2 + $0xe8] sm:$0xff] %v2136
    %2281 = vst [vmem:[#allocation2 + $0xf0] sm:$0xff] %v2247
    %2282 = vst [vmem:[#allocation2 + $0xf8] sm:$0xff] %v2249
    %2283 = vst [vmem:[#allocation4] sm:$0xff] 0.0
    %2284 = vst [vmem:[#allocation5] sm:$0xff] 0.0
    %s2285 = scalar_lea.vmem [#allocation11], 512
    %v2286 = vld [vmem:[%s2285] sm:$0xff]
    %v2287 = vld [vmem:[%s2285 + $0x8] sm:$0xff]
    %v2288 = vld [vmem:[%s2285 + $0x10] sm:$0xff]
    %v2289 = vld [vmem:[%s2285 + $0x18] sm:$0xff]
    %v2290 = vld [vmem:[%s2285 + $0x20] sm:$0xff]
    %v2291 = vld [vmem:[%s2285 + $0x28] sm:$0xff]
    %v2292 = vld [vmem:[%s2285 + $0x30] sm:$0xff]
    %v2293 = vld [vmem:[%s2285 + $0x38] sm:$0xff]
    %v2294 = vld [vmem:[%s2285 + $0x40] sm:$0xff]
    %v2295 = vld [vmem:[%s2285 + $0x48] sm:$0xff]
    %v2296 = vld [vmem:[%s2285 + $0x50] sm:$0xff]
    %v2297 = vld [vmem:[%s2285 + $0x58] sm:$0xff]
    %v2298 = vld [vmem:[%s2285 + $0x60] sm:$0xff]
    %v2299 = vld [vmem:[%s2285 + $0x68] sm:$0xff]
    %v2300 = vld [vmem:[%s2285 + $0x70] sm:$0xff]
    %v2301 = vld [vmem:[%s2285 + $0x78] sm:$0xff]
    %v2302 = vld [vmem:[%s2285 + $0x80] sm:$0xff]
    %v2303 = vld [vmem:[%s2285 + $0x88] sm:$0xff]
    %v2304 = vld [vmem:[%s2285 + $0x90] sm:$0xff]
    %v2305 = vld [vmem:[%s2285 + $0x98] sm:$0xff]
    %v2306 = vld [vmem:[%s2285 + $0xa0] sm:$0xff]
    %v2307 = vld [vmem:[%s2285 + $0xa8] sm:$0xff]
    %v2308 = vld [vmem:[%s2285 + $0xb0] sm:$0xff]
    %v2309 = vld [vmem:[%s2285 + $0xb8] sm:$0xff]
    %v2310 = vld [vmem:[%s2285 + $0xc0] sm:$0xff]
    %v2311 = vld [vmem:[%s2285 + $0xc8] sm:$0xff]
    %v2312 = vld [vmem:[%s2285 + $0xd0] sm:$0xff]
    %v2313 = vld [vmem:[%s2285 + $0xd8] sm:$0xff]
    %v2314 = vld [vmem:[%s2285 + $0xe0] sm:$0xff]
    %v2315 = vld [vmem:[%s2285 + $0xe8] sm:$0xff]
    %v2316 = vld [vmem:[%s2285 + $0xf0] sm:$0xff]
    %v2317 = vld [vmem:[%s2285 + $0xf8] sm:$0xff]
    %v2318 = vld [vmem:[%s2285 + $0x100] sm:$0xff]
    %v2319 = vld [vmem:[%s2285 + $0x108] sm:$0xff]
    %v2320 = vld [vmem:[%s2285 + $0x110] sm:$0xff]
    %v2321 = vld [vmem:[%s2285 + $0x118] sm:$0xff]
    %v2322 = vld [vmem:[%s2285 + $0x120] sm:$0xff]
    %v2323 = vld [vmem:[%s2285 + $0x128] sm:$0xff]
    %v2324 = vld [vmem:[%s2285 + $0x130] sm:$0xff]
    %v2325 = vld [vmem:[%s2285 + $0x138] sm:$0xff]
    %v2326 = vld [vmem:[%s2285 + $0x140] sm:$0xff]
    %v2327 = vld [vmem:[%s2285 + $0x148] sm:$0xff]
    %v2328 = vld [vmem:[%s2285 + $0x150] sm:$0xff]
    %v2329 = vld [vmem:[%s2285 + $0x158] sm:$0xff]
    %v2330 = vld [vmem:[%s2285 + $0x160] sm:$0xff]
    %v2331 = vld [vmem:[%s2285 + $0x168] sm:$0xff]
    %v2332 = vld [vmem:[%s2285 + $0x170] sm:$0xff]
    %v2333 = vld [vmem:[%s2285 + $0x178] sm:$0xff]
    %v2334 = vld [vmem:[%s2285 + $0x180] sm:$0xff]
    %v2335 = vld [vmem:[%s2285 + $0x188] sm:$0xff]
    %v2336 = vld [vmem:[%s2285 + $0x190] sm:$0xff]
    %v2337 = vld [vmem:[%s2285 + $0x198] sm:$0xff]
    %v2338 = vld [vmem:[%s2285 + $0x1a0] sm:$0xff]
    %v2339 = vld [vmem:[%s2285 + $0x1a8] sm:$0xff]
    %v2340 = vld [vmem:[%s2285 + $0x1b0] sm:$0xff]
    %v2341 = vld [vmem:[%s2285 + $0x1b8] sm:$0xff]
    %v2342 = vld [vmem:[%s2285 + $0x1c0] sm:$0xff]
    %v2343 = vld [vmem:[%s2285 + $0x1c8] sm:$0xff]
    %v2344 = vld [vmem:[%s2285 + $0x1d0] sm:$0xff]
    %v2345 = vld [vmem:[%s2285 + $0x1d8] sm:$0xff]
    %v2346 = vld [vmem:[%s2285 + $0x1e0] sm:$0xff]
    %v2347 = vld [vmem:[%s2285 + $0x1e8] sm:$0xff]
    %v2348 = vld [vmem:[%s2285 + $0x1f0] sm:$0xff]
    %v2349 = vld [vmem:[%s2285 + $0x1f8] sm:$0xff]
    %v2350 = vld [vmem:[#allocation2] sm:$0xff]
    %v2351 = vld [vmem:[#allocation2 + $0x8] sm:$0xff]
    %v2352 = vld [vmem:[#allocation2 + $0x10] sm:$0xff]
    %v2353 = vld [vmem:[#allocation2 + $0x18] sm:$0xff]
    %v2354 = vld [vmem:[#allocation4] sm:$0xff]
    %2355 = vmatprep.subr.mxu0 %v2287
    %2356 = vmatpush1.msra.mxu0 %v2286
    %2357 = vmatprep.subr.mxu0 %v2291
    %2358 = vmatpush1.msra.mxu0 %v2290
    %2359 = vmatprep.subr.mxu0 %v2295
    %2360 = vmatpush1.msra.mxu0 %v2294
    %2361 = vmatprep.subr.mxu0 %v2299
    %2362 = vmatpush1.msra.mxu0 %v2298
    %2363 = vmatprep.subr.mxu0 %v2303
    %2364 = vmatpush1.msra.mxu0 %v2302
    %2365 = vmatprep.subr.mxu0 %v2307
    %2366 = vmatpush1.msra.mxu0 %v2306
    %2367 = vmatprep.subr.mxu0 %v2311
    %2368 = vmatpush1.msra.mxu0 %v2310
    %2369 = vmatprep.subr.mxu0 %v2315
    %2370 = vmatpush1.msra.mxu0 %v2314
    %2371 = vmatprep.subr.mxu0 %v2319
    %2372 = vmatpush1.msra.mxu0 %v2318
    %2373 = vmatprep.subr.mxu0 %v2323
    %2374 = vmatpush1.msra.mxu0 %v2322
    %2375 = vmatprep.subr.mxu0 %v2327
    %2376 = vmatpush1.msra.mxu0 %v2326
    %2377 = vmatprep.subr.mxu0 %v2331
    %2378 = vmatpush1.msra.mxu0 %v2330
    %2379 = vmatprep.subr.mxu0 %v2335
    %2380 = vmatpush1.msra.mxu0 %v2334
    %2381 = vmatprep.subr.mxu0 %v2339
    %2382 = vmatpush1.msra.mxu0 %v2338
    %2383 = vmatprep.subr.mxu0 %v2343
    %2384 = vmatpush1.msra.mxu0 %v2342
    %2385 = vmatprep.subr.mxu0 %v2347
    %2386 = vmatpush1.msra.mxu0 %v2346
    %2387 = vmatprep.subr.mxu0 0.0
    %2388 = vmatpush1.msra.mxu0 0.0
    %2389 = vmatprep.subr.mxu0 0.0
    %2390 = vmatpush1.msra.mxu0 0.0
    %2391 = vmatprep.subr.mxu0 0.0
    %2392 = vmatpush1.msra.mxu0 0.0
    %2393 = vmatprep.subr.mxu0 0.0
    %2394 = vmatpush1.msra.mxu0 0.0
    %2395 = vmatprep.subr.mxu0 0.0
    %2396 = vmatpush1.msra.mxu0 0.0
    %2397 = vmatprep.subr.mxu0 0.0
    %2398 = vmatpush1.msra.mxu0 0.0
    %2399 = vmatprep.subr.mxu0 0.0
    %2400 = vmatpush1.msra.mxu0 0.0
    %2401 = vmatprep.subr.mxu0 0.0
    %2402 = vmatpush1.msra.mxu0 0.0
    %2403 = vmatprep.subr.mxu0 0.0
    %2404 = vmatpush1.msra.mxu0 0.0
    %2405 = vmatprep.subr.mxu0 0.0
    %2406 = vmatpush1.msra.mxu0 0.0
    %2407 = vmatprep.subr.mxu0 0.0
    %2408 = vmatpush1.msra.mxu0 0.0
    %2409 = vmatprep.subr.mxu0 0.0
    %2410 = vmatpush1.msra.mxu0 0.0
    %2411 = vmatprep.subr.mxu0 0.0
    %2412 = vmatpush1.msra.mxu0 0.0
    %2413 = vmatprep.subr.mxu0 0.0
    %2414 = vmatpush1.msra.mxu0 0.0
    %2415 = vmatprep.subr.mxu0 0.0
    %2416 = vmatpush1.msra.mxu0 0.0
    %2417 = vmatprep.subr.mxu0 0.0
    %2418 = vmatpush1.msra.mxu0 0.0
    %2419 = vmatprep.mubr.f32.mxu0 0.0
    %2420 = vmatmul.mubr.f32.gmra.mrb[0].mxu0 %v2354
    %v2421 = vpop.f32.mrb[0].mxu0
    %v2422 = vadd.f32 0.0, %v2421
    %v2423 = vpop.f32.mrb[0].mxu0
    %v2424 = vadd.f32 0.0, %v2423
    %2425 = vdwg.mxu0
    %2426 = vmatprep.subr.mxu0 %v2289
    %2427 = vmatpush1.msra.mxu0 %v2288
    %2428 = vmatprep.subr.mxu0 %v2293
    %2429 = vmatpush1.msra.mxu0 %v2292
    %2430 = vmatprep.subr.mxu0 %v2297
    %2431 = vmatpush1.msra.mxu0 %v2296
    %2432 = vmatprep.subr.mxu0 %v2301
    %2433 = vmatpush1.msra.mxu0 %v2300
    %2434 = vmatprep.subr.mxu0 %v2305
    %2435 = vmatpush1.msra.mxu0 %v2304
    %2436 = vmatprep.subr.mxu0 %v2309
    %2437 = vmatpush1.msra.mxu0 %v2308
    %2438 = vmatprep.subr.mxu0 %v2313
    %2439 = vmatpush1.msra.mxu0 %v2312
    %2440 = vmatprep.subr.mxu0 %v2317
    %2441 = vmatpush1.msra.mxu0 %v2316
    %2442 = vmatprep.subr.mxu0 %v2321
    %2443 = vmatpush1.msra.mxu0 %v2320
    %2444 = vmatprep.subr.mxu0 %v2325
    %2445 = vmatpush1.msra.mxu0 %v2324
    %2446 = vmatprep.subr.mxu0 %v2329
    %2447 = vmatpush1.msra.mxu0 %v2328
    %2448 = vmatprep.subr.mxu0 %v2333
    %2449 = vmatpush1.msra.mxu0 %v2332
    %2450 = vmatprep.subr.mxu0 %v2337
    %2451 = vmatpush1.msra.mxu0 %v2336
    %2452 = vmatprep.subr.mxu0 %v2341
    %2453 = vmatpush1.msra.mxu0 %v2340
    %2454 = vmatprep.subr.mxu0 %v2345
    %2455 = vmatpush1.msra.mxu0 %v2344
    %2456 = vmatprep.subr.mxu0 %v2349
    %2457 = vmatpush1.msra.mxu0 %v2348
    %2458 = vmatprep.subr.mxu0 0.0
    %2459 = vmatpush1.msra.mxu0 0.0
    %2460 = vmatprep.subr.mxu0 0.0
    %2461 = vmatpush1.msra.mxu0 0.0
    %2462 = vmatprep.subr.mxu0 0.0
    %2463 = vmatpush1.msra.mxu0 0.0
    %2464 = vmatprep.subr.mxu0 0.0
    %2465 = vmatpush1.msra.mxu0 0.0
    %2466 = vmatprep.subr.mxu0 0.0
    %2467 = vmatpush1.msra.mxu0 0.0
    %2468 = vmatprep.subr.mxu0 0.0
    %2469 = vmatpush1.msra.mxu0 0.0
    %2470 = vmatprep.subr.mxu0 0.0
    %2471 = vmatpush1.msra.mxu0 0.0
    %2472 = vmatprep.subr.mxu0 0.0
    %2473 = vmatpush1.msra.mxu0 0.0
    %2474 = vmatprep.subr.mxu0 0.0
    %2475 = vmatpush1.msra.mxu0 0.0
    %2476 = vmatprep.subr.mxu0 0.0
    %2477 = vmatpush1.msra.mxu0 0.0
    %2478 = vmatprep.subr.mxu0 0.0
    %2479 = vmatpush1.msra.mxu0 0.0
    %2480 = vmatprep.subr.mxu0 0.0
    %2481 = vmatpush1.msra.mxu0 0.0
    %2482 = vmatprep.subr.mxu0 0.0
    %2483 = vmatpush1.msra.mxu0 0.0
    %2484 = vmatprep.subr.mxu0 0.0
    %2485 = vmatpush1.msra.mxu0 0.0
    %2486 = vmatprep.subr.mxu0 0.0
    %2487 = vmatpush1.msra.mxu0 0.0
    %2488 = vmatprep.subr.mxu0 0.0
    %2489 = vmatpush1.msra.mxu0 0.0
    %2490 = vmatprep.mubr.f32.mxu0 0.0
    %2491 = vmatmul.mubr.f32.gmra.mrb[0].mxu0 %v2354
    %v2492 = vpop.f32.mrb[0].mxu0
    %v2493 = vadd.f32 0.0, %v2492
    %v2494 = vpop.f32.mrb[0].mxu0
    %v2495 = vadd.f32 0.0, %v2494
    %2496 = vdwg.mxu0
    %v2497 = vadd.f32 %v2350, %v2422
    %v2498 = vadd.f32 %v2351, %v2424
    %v2499 = vadd.f32 %v2352, %v2493
    %v2500 = vadd.f32 %v2353, %v2495
    %v2501 = vxor.u32 %v2497, 2147483648
    %v2502 = vxor.u32 %v2498, 2147483648
    %v2503 = vxor.u32 %v2499, 2147483648
    %v2504 = vmul.f32 %v2501, 1.442695
    %v2505 = vpow.pop %v2504
    %v2506 = vmul.f32 %v2502, 1.442695
    %v2507 = vpow.pop %v2506
    %v2508 = vmul.f32 %v2503, 1.442695
    %v2509 = vpow.pop %v2508
    %v2510 = vadd.f32 %v2505, 1.0
    %v2511 = vadd.f32 %v2507, 1.0
    %v2512 = vadd.f32 %v2509, 1.0
    %v2513 = vrcp.pop %v2510
    %v2514 = vmul.f32 1.0, %v2513
    %v2515 = vrcp.pop %v2511
    %v2516 = vmul.f32 1.0, %v2515
    %v2517 = vrcp.pop %v2512
    %v2518 = vmul.f32 1.0, %v2517
    %v2519 = vtanh.pop %v2500
    %v2520 = vld [vmem:[#allocation5] sm:$0xff]
    %v2521 = vmul.f32 %v2516, %v2520
    %v2522 = vmul.f32 %v2514, %v2519
    %v2523 = vadd.f32 %v2521, %v2522
    %v2524 = vtanh.pop %v2523
    %v2525 = vmul.f32 %v2518, %v2524
    %2526 = vst [vmem:[#allocation5] sm:$0xff] %v2523
    %2527 = vst [vmem:[#allocation4] sm:$0xff] %v2525
    %v2528 = vld [vmem:[#allocation2 + $0x20] sm:$0xff]
    %v2529 = vld [vmem:[#allocation2 + $0x28] sm:$0xff]
    %v2530 = vld [vmem:[#allocation2 + $0x30] sm:$0xff]
    %v2531 = vld [vmem:[#allocation2 + $0x38] sm:$0xff]
    %v2532 = vld [vmem:[#allocation4] sm:$0xff]
    %2533 = vmatprep.subr.mxu0 %v2287
    %2534 = vmatpush1.msra.mxu0 %v2286
    %2535 = vmatprep.subr.mxu0 %v2291
    %2536 = vmatpush1.msra.mxu0 %v2290
    %2537 = vmatprep.subr.mxu0 %v2295
    %2538 = vmatpush1.msra.mxu0 %v2294
    %2539 = vmatprep.subr.mxu0 %v2299
    %2540 = vmatpush1.msra.mxu0 %v2298
    %2541 = vmatprep.subr.mxu0 %v2303
    %2542 = vmatpush1.msra.mxu0 %v2302
    %2543 = vmatprep.subr.mxu0 %v2307
    %2544 = vmatpush1.msra.mxu0 %v2306
    %2545 = vmatprep.subr.mxu0 %v2311
    %2546 = vmatpush1.msra.mxu0 %v2310
    %2547 = vmatprep.subr.mxu0 %v2315
    %2548 = vmatpush1.msra.mxu0 %v2314
    %2549 = vmatprep.subr.mxu0 %v2319
    %2550 = vmatpush1.msra.mxu0 %v2318
    %2551 = vmatprep.subr.mxu0 %v2323
    %2552 = vmatpush1.msra.mxu0 %v2322
    %2553 = vmatprep.subr.mxu0 %v2327
    %2554 = vmatpush1.msra.mxu0 %v2326
    %2555 = vmatprep.subr.mxu0 %v2331
    %2556 = vmatpush1.msra.mxu0 %v2330
    %2557 = vmatprep.subr.mxu0 %v2335
    %2558 = vmatpush1.msra.mxu0 %v2334
    %2559 = vmatprep.subr.mxu0 %v2339
    %2560 = vmatpush1.msra.mxu0 %v2338
    %2561 = vmatprep.subr.mxu0 %v2343
    %2562 = vmatpush1.msra.mxu0 %v2342
    %2563 = vmatprep.subr.mxu0 %v2347
    %2564 = vmatpush1.msra.mxu0 %v2346
    %2565 = vmatprep.subr.mxu0 0.0
    %2566 = vmatpush1.msra.mxu0 0.0
    %2567 = vmatprep.subr.mxu0 0.0
    %2568 = vmatpush1.msra.mxu0 0.0
    %2569 = vmatprep.subr.mxu0 0.0
    %2570 = vmatpush1.msra.mxu0 0.0
    %2571 = vmatprep.subr.mxu0 0.0
    %2572 = vmatpush1.msra.mxu0 0.0
    %2573 = vmatprep.subr.mxu0 0.0
    %2574 = vmatpush1.msra.mxu0 0.0
    %2575 = vmatprep.subr.mxu0 0.0
    %2576 = vmatpush1.msra.mxu0 0.0
    %2577 = vmatprep.subr.mxu0 0.0
    %2578 = vmatpush1.msra.mxu0 0.0
    %2579 = vmatprep.subr.mxu0 0.0
    %2580 = vmatpush1.msra.mxu0 0.0
    %2581 = vmatprep.subr.mxu0 0.0
    %2582 = vmatpush1.msra.mxu0 0.0
    %2583 = vmatprep.subr.mxu0 0.0
    %2584 = vmatpush1.msra.mxu0 0.0
    %2585 = vmatprep.subr.mxu0 0.0
    %2586 = vmatpush1.msra.mxu0 0.0
    %2587 = vmatprep.subr.mxu0 0.0
    %2588 = vmatpush1.msra.mxu0 0.0
    %2589 = vmatprep.subr.mxu0 0.0
    %2590 = vmatpush1.msra.mxu0 0.0
    %2591 = vmatprep.subr.mxu0 0.0
    %2592 = vmatpush1.msra.mxu0 0.0
    %2593 = vmatprep.subr.mxu0 0.0
    %2594 = vmatpush1.msra.mxu0 0.0
    %2595 = vmatprep.subr.mxu0 0.0
    %2596 = vmatpush1.msra.mxu0 0.0
    %2597 = vmatprep.mubr.f32.mxu0 0.0
    %2598 = vmatmul.mubr.f32.gmra.mrb[0].mxu0 %v2532
    %v2599 = vpop.f32.mrb[0].mxu0
    %v2600 = vadd.f32 0.0, %v2599
    %v2601 = vpop.f32.mrb[0].mxu0
    %v2602 = vadd.f32 0.0, %v2601
    %2603 = vdwg.mxu0
    %2604 = vmatprep.subr.mxu0 %v2289
    %2605 = vmatpush1.msra.mxu0 %v2288
    %2606 = vmatprep.subr.mxu0 %v2293
    %2607 = vmatpush1.msra.mxu0 %v2292
    %2608 = vmatprep.subr.mxu0 %v2297
    %2609 = vmatpush1.msra.mxu0 %v2296
    %2610 = vmatprep.subr.mxu0 %v2301
    %2611 = vmatpush1.msra.mxu0 %v2300
    %2612 = vmatprep.subr.mxu0 %v2305
    %2613 = vmatpush1.msra.mxu0 %v2304
    %2614 = vmatprep.subr.mxu0 %v2309
    %2615 = vmatpush1.msra.mxu0 %v2308
    %2616 = vmatprep.subr.mxu0 %v2313
    %2617 = vmatpush1.msra.mxu0 %v2312
    %2618 = vmatprep.subr.mxu0 %v2317
    %2619 = vmatpush1.msra.mxu0 %v2316
    %2620 = vmatprep.subr.mxu0 %v2321
    %2621 = vmatpush1.msra.mxu0 %v2320
    %2622 = vmatprep.subr.mxu0 %v2325
    %2623 = vmatpush1.msra.mxu0 %v2324
    %2624 = vmatprep.subr.mxu0 %v2329
    %2625 = vmatpush1.msra.mxu0 %v2328
    %2626 = vmatprep.subr.mxu0 %v2333
    %2627 = vmatpush1.msra.mxu0 %v2332
    %2628 = vmatprep.subr.mxu0 %v2337
    %2629 = vmatpush1.msra.mxu0 %v2336
    %2630 = vmatprep.subr.mxu0 %v2341
    %2631 = vmatpush1.msra.mxu0 %v2340
    %2632 = vmatprep.subr.mxu0 %v2345
    %2633 = vmatpush1.msra.mxu0 %v2344
    %2634 = vmatprep.subr.mxu0 %v2349
    %2635 = vmatpush1.msra.mxu0 %v2348
    %2636 = vmatprep.subr.mxu0 0.0
    %2637 = vmatpush1.msra.mxu0 0.0
    %2638 = vmatprep.subr.mxu0 0.0
    %2639 = vmatpush1.msra.mxu0 0.0
    %2640 = vmatprep.subr.mxu0 0.0
    %2641 = vmatpush1.msra.mxu0 0.0
    %2642 = vmatprep.subr.mxu0 0.0
    %2643 = vmatpush1.msra.mxu0 0.0
    %2644 = vmatprep.subr.mxu0 0.0
    %2645 = vmatpush1.msra.mxu0 0.0
    %2646 = vmatprep.subr.mxu0 0.0
    %2647 = vmatpush1.msra.mxu0 0.0
    %2648 = vmatprep.subr.mxu0 0.0
    %2649 = vmatpush1.msra.mxu0 0.0
    %2650 = vmatprep.subr.mxu0 0.0
    %2651 = vmatpush1.msra.mxu0 0.0
    %2652 = vmatprep.subr.mxu0 0.0
    %2653 = vmatpush1.msra.mxu0 0.0
    %2654 = vmatprep.subr.mxu0 0.0
    %2655 = vmatpush1.msra.mxu0 0.0
    %2656 = vmatprep.subr.mxu0 0.0
    %2657 = vmatpush1.msra.mxu0 0.0
    %2658 = vmatprep.subr.mxu0 0.0
    %2659 = vmatpush1.msra.mxu0 0.0
    %2660 = vmatprep.subr.mxu0 0.0
    %2661 = vmatpush1.msra.mxu0 0.0
    %2662 = vmatprep.subr.mxu0 0.0
    %2663 = vmatpush1.msra.mxu0 0.0
    %2664 = vmatprep.subr.mxu0 0.0
    %2665 = vmatpush1.msra.mxu0 0.0
    %2666 = vmatprep.subr.mxu0 0.0
    %2667 = vmatpush1.msra.mxu0 0.0
    %2668 = vmatprep.mubr.f32.mxu0 0.0
    %2669 = vmatmul.mubr.f32.gmra.mrb[0].mxu0 %v2532
    %v2670 = vpop.f32.mrb[0].mxu0
    %v2671 = vadd.f32 0.0, %v2670
    %v2672 = vpop.f32.mrb[0].mxu0
    %v2673 = vadd.f32 0.0, %v2672
    %2674 = vdwg.mxu0
    %v2675 = vadd.f32 %v2528, %v2600
    %v2676 = vadd.f32 %v2529, %v2602
    %v2677 = vadd.f32 %v2530, %v2671
    %v2678 = vadd.f32 %v2531, %v2673
    %v2679 = vxor.u32 %v2675, 2147483648
    %v2680 = vxor.u32 %v2676, 2147483648
    %v2681 = vxor.u32 %v2677, 2147483648
    %v2682 = vmul.f32 %v2679, 1.442695
    %v2683 = vpow.pop %v2682
    %v2684 = vmul.f32 %v2680, 1.442695
    %v2685 = vpow.pop %v2684
    %v2686 = vmul.f32 %v2681, 1.442695
    %v2687 = vpow.pop %v2686
    %v2688 = vadd.f32 %v2683, 1.0
    %v2689 = vadd.f32 %v2685, 1.0
    %v2690 = vadd.f32 %v2687, 1.0
    %v2691 = vrcp.pop %v2688
    %v2692 = vmul.f32 1.0, %v2691
    %v2693 = vrcp.pop %v2689
    %v2694 = vmul.f32 1.0, %v2693
    %v2695 = vrcp.pop %v2690
    %v2696 = vmul.f32 1.0, %v2695
    %v2697 = vtanh.pop %v2678
    %v2698 = vld [vmem:[#allocation5] sm:$0xff]
    %v2699 = vmul.f32 %v2694, %v2698
    %v2700 = vmul.f32 %v2692, %v2697
    %v2701 = vadd.f32 %v2699, %v2700
    %v2702 = vtanh.pop %v2701
    %v2703 = vmul.f32 %v2696, %v2702
    %2704 = vst [vmem:[#allocation5] sm:$0xff] %v2701
    %2705 = vst [vmem:[#allocation4] sm:$0xff] %v2703
    %v2706 = vld [vmem:[#allocation2 + $0x40] sm:$0xff]
    %v2707 = vld [vmem:[#allocation2 + $0x48] sm:$0xff]
    %v2708 = vld [vmem:[#allocation2 + $0x50] sm:$0xff]
    %v2709 = vld [vmem:[#allocation2 + $0x58] sm:$0xff]
    %v2710 = vld [vmem:[#allocation4] sm:$0xff]
    %2711 = vmatprep.subr.mxu0 %v2287
    %2712 = vmatpush1.msra.mxu0 %v2286
    %2713 = vmatprep.subr.mxu0 %v2291
    %2714 = vmatpush1.msra.mxu0 %v2290
    %2715 = vmatprep.subr.mxu0 %v2295
    %2716 = vmatpush1.msra.mxu0 %v2294
    %2717 = vmatprep.subr.mxu0 %v2299
    %2718 = vmatpush1.msra.mxu0 %v2298
    %2719 = vmatprep.subr.mxu0 %v2303
    %2720 = vmatpush1.msra.mxu0 %v2302
    %2721 = vmatprep.subr.mxu0 %v2307
    %2722 = vmatpush1.msra.mxu0 %v2306
    %2723 = vmatprep.subr.mxu0 %v2311
    %2724 = vmatpush1.msra.mxu0 %v2310
    %2725 = vmatprep.subr.mxu0 %v2315
    %2726 = vmatpush1.msra.mxu0 %v2314
    %2727 = vmatprep.subr.mxu0 %v2319
    %2728 = vmatpush1.msra.mxu0 %v2318
    %2729 = vmatprep.subr.mxu0 %v2323
    %2730 = vmatpush1.msra.mxu0 %v2322
    %2731 = vmatprep.subr.mxu0 %v2327
    %2732 = vmatpush1.msra.mxu0 %v2326
    %2733 = vmatprep.subr.mxu0 %v2331
    %2734 = vmatpush1.msra.mxu0 %v2330
    %2735 = vmatprep.subr.mxu0 %v2335
    %2736 = vmatpush1.msra.mxu0 %v2334
    %2737 = vmatprep.subr.mxu0 %v2339
    %2738 = vmatpush1.msra.mxu0 %v2338
    %2739 = vmatprep.subr.mxu0 %v2343
    %2740 = vmatpush1.msra.mxu0 %v2342
    %2741 = vmatprep.subr.mxu0 %v2347
    %2742 = vmatpush1.msra.mxu0 %v2346
    %2743 = vmatprep.subr.mxu0 0.0
    %2744 = vmatpush1.msra.mxu0 0.0
    %2745 = vmatprep.subr.mxu0 0.0
    %2746 = vmatpush1.msra.mxu0 0.0
    %2747 = vmatprep.subr.mxu0 0.0
    %2748 = vmatpush1.msra.mxu0 0.0
    %2749 = vmatprep.subr.mxu0 0.0
    %2750 = vmatpush1.msra.mxu0 0.0
    %2751 = vmatprep.subr.mxu0 0.0
    %2752 = vmatpush1.msra.mxu0 0.0
    %2753 = vmatprep.subr.mxu0 0.0
    %2754 = vmatpush1.msra.mxu0 0.0
    %2755 = vmatprep.subr.mxu0 0.0
    %2756 = vmatpush1.msra.mxu0 0.0
    %2757 = vmatprep.subr.mxu0 0.0
    %2758 = vmatpush1.msra.mxu0 0.0
    %2759 = vmatprep.subr.mxu0 0.0
    %2760 = vmatpush1.msra.mxu0 0.0
    %2761 = vmatprep.subr.mxu0 0.0
    %2762 = vmatpush1.msra.mxu0 0.0
    %2763 = vmatprep.subr.mxu0 0.0
    %2764 = vmatpush1.msra.mxu0 0.0
    %2765 = vmatprep.subr.mxu0 0.0
    %2766 = vmatpush1.msra.mxu0 0.0
    %2767 = vmatprep.subr.mxu0 0.0
    %2768 = vmatpush1.msra.mxu0 0.0
    %2769 = vmatprep.subr.mxu0 0.0
    %2770 = vmatpush1.msra.mxu0 0.0
    %2771 = vmatprep.subr.mxu0 0.0
    %2772 = vmatpush1.msra.mxu0 0.0
    %2773 = vmatprep.subr.mxu0 0.0
    %2774 = vmatpush1.msra.mxu0 0.0
    %2775 = vmatprep.mubr.f32.mxu0 0.0
    %2776 = vmatmul.mubr.f32.gmra.mrb[0].mxu0 %v2710
    %v2777 = vpop.f32.mrb[0].mxu0
    %v2778 = vadd.f32 0.0, %v2777
    %v2779 = vpop.f32.mrb[0].mxu0
    %v2780 = vadd.f32 0.0, %v2779
    %2781 = vdwg.mxu0
    %2782 = vmatprep.subr.mxu0 %v2289
    %2783 = vmatpush1.msra.mxu0 %v2288
    %2784 = vmatprep.subr.mxu0 %v2293
    %2785 = vmatpush1.msra.mxu0 %v2292
    %2786 = vmatprep.subr.mxu0 %v2297
    %2787 = vmatpush1.msra.mxu0 %v2296
    %2788 = vmatprep.subr.mxu0 %v2301
    %2789 = vmatpush1.msra.mxu0 %v2300
    %2790 = vmatprep.subr.mxu0 %v2305
    %2791 = vmatpush1.msra.mxu0 %v2304
    %2792 = vmatprep.subr.mxu0 %v2309
    %2793 = vmatpush1.msra.mxu0 %v2308
    %2794 = vmatprep.subr.mxu0 %v2313
    %2795 = vmatpush1.msra.mxu0 %v2312
    %2796 = vmatprep.subr.mxu0 %v2317
    %2797 = vmatpush1.msra.mxu0 %v2316
    %2798 = vmatprep.subr.mxu0 %v2321
    %2799 = vmatpush1.msra.mxu0 %v2320
    %2800 = vmatprep.subr.mxu0 %v2325
    %2801 = vmatpush1.msra.mxu0 %v2324
    %2802 = vmatprep.subr.mxu0 %v2329
    %2803 = vmatpush1.msra.mxu0 %v2328
    %2804 = vmatprep.subr.mxu0 %v2333
    %2805 = vmatpush1.msra.mxu0 %v2332
    %2806 = vmatprep.subr.mxu0 %v2337
    %2807 = vmatpush1.msra.mxu0 %v2336
    %2808 = vmatprep.subr.mxu0 %v2341
    %2809 = vmatpush1.msra.mxu0 %v2340
    %2810 = vmatprep.subr.mxu0 %v2345
    %2811 = vmatpush1.msra.mxu0 %v2344
    %2812 = vmatprep.subr.mxu0 %v2349
    %2813 = vmatpush1.msra.mxu0 %v2348
    %2814 = vmatprep.subr.mxu0 0.0
    %2815 = vmatpush1.msra.mxu0 0.0
    %2816 = vmatprep.subr.mxu0 0.0
    %2817 = vmatpush1.msra.mxu0 0.0
    %2818 = vmatprep.subr.mxu0 0.0
    %2819 = vmatpush1.msra.mxu0 0.0
    %2820 = vmatprep.subr.mxu0 0.0
    %2821 = vmatpush1.msra.mxu0 0.0
    %2822 = vmatprep.subr.mxu0 0.0
    %2823 = vmatpush1.msra.mxu0 0.0
    %2824 = vmatprep.subr.mxu0 0.0
    %2825 = vmatpush1.msra.mxu0 0.0
    %2826 = vmatprep.subr.mxu0 0.0
    %2827 = vmatpush1.msra.mxu0 0.0
    %2828 = vmatprep.subr.mxu0 0.0
    %2829 = vmatpush1.msra.mxu0 0.0
    %2830 = vmatprep.subr.mxu0 0.0
    %2831 = vmatpush1.msra.mxu0 0.0
    %2832 = vmatprep.subr.mxu0 0.0
    %2833 = vmatpush1.msra.mxu0 0.0
    %2834 = vmatprep.subr.mxu0 0.0
    %2835 = vmatpush1.msra.mxu0 0.0
    %2836 = vmatprep.subr.mxu0 0.0
    %2837 = vmatpush1.msra.mxu0 0.0
    %2838 = vmatprep.subr.mxu0 0.0
    %2839 = vmatpush1.msra.mxu0 0.0
    %2840 = vmatprep.subr.mxu0 0.0
    %2841 = vmatpush1.msra.mxu0 0.0
    %2842 = vmatprep.subr.mxu0 0.0
    %2843 = vmatpush1.msra.mxu0 0.0
    %2844 = vmatprep.subr.mxu0 0.0
    %2845 = vmatpush1.msra.mxu0 0.0
    %2846 = vmatprep.mubr.f32.mxu0 0.0
    %2847 = vmatmul.mubr.f32.gmra.mrb[0].mxu0 %v2710
    %v2848 = vpop.f32.mrb[0].mxu0
    %v2849 = vadd.f32 0.0, %v2848
    %v2850 = vpop.f32.mrb[0].mxu0
    %v2851 = vadd.f32 0.0, %v2850
    %2852 = vdwg.mxu0
    %v2853 = vadd.f32 %v2706, %v2778
    %v2854 = vadd.f32 %v2707, %v2780
    %v2855 = vadd.f32 %v2708, %v2849
    %v2856 = vadd.f32 %v2709, %v2851
    %v2857 = vxor.u32 %v2853, 2147483648
    %v2858 = vxor.u32 %v2854, 2147483648
    %v2859 = vxor.u32 %v2855, 2147483648
    %v2860 = vmul.f32 %v2857, 1.442695
    %v2861 = vpow.pop %v2860
    %v2862 = vmul.f32 %v2858, 1.442695
    %v2863 = vpow.pop %v2862
    %v2864 = vmul.f32 %v2859, 1.442695
    %v2865 = vpow.pop %v2864
    %v2866 = vadd.f32 %v2861, 1.0
    %v2867 = vadd.f32 %v2863, 1.0
    %v2868 = vadd.f32 %v2865, 1.0
    %v2869 = vrcp.pop %v2866
    %v2870 = vmul.f32 1.0, %v2869
    %v2871 = vrcp.pop %v2867
    %v2872 = vmul.f32 1.0, %v2871
    %v2873 = vrcp.pop %v2868
    %v2874 = vmul.f32 1.0, %v2873
    %v2875 = vtanh.pop %v2856
    %v2876 = vld [vmem:[#allocation5] sm:$0xff]
    %v2877 = vmul.f32 %v2872, %v2876
    %v2878 = vmul.f32 %v2870, %v2875
    %v2879 = vadd.f32 %v2877, %v2878
    %v2880 = vtanh.pop %v2879
    %v2881 = vmul.f32 %v2874, %v2880
    %2882 = vst [vmem:[#allocation5] sm:$0xff] %v2879
    %2883 = vst [vmem:[#allocation4] sm:$0xff] %v2881
    %v2884 = vld [vmem:[#allocation2 + $0x60] sm:$0xff]
    %v2885 = vld [vmem:[#allocation2 + $0x68] sm:$0xff]
    %v2886 = vld [vmem:[#allocation2 + $0x70] sm:$0xff]
    %v2887 = vld [vmem:[#allocation2 + $0x78] sm:$0xff]
    %v2888 = vld [vmem:[#allocation4] sm:$0xff]
    %2889 = vmatprep.subr.mxu0 %v2287
    %2890 = vmatpush1.msra.mxu0 %v2286
    %2891 = vmatprep.subr.mxu0 %v2291
    %2892 = vmatpush1.msra.mxu0 %v2290
    %2893 = vmatprep.subr.mxu0 %v2295
    %2894 = vmatpush1.msra.mxu0 %v2294
    %2895 = vmatprep.subr.mxu0 %v2299
    %2896 = vmatpush1.msra.mxu0 %v2298
    %2897 = vmatprep.subr.mxu0 %v2303
    %2898 = vmatpush1.msra.mxu0 %v2302
    %2899 = vmatprep.subr.mxu0 %v2307
    %2900 = vmatpush1.msra.mxu0 %v2306
    %2901 = vmatprep.subr.mxu0 %v2311
    %2902 = vmatpush1.msra.mxu0 %v2310
    %2903 = vmatprep.subr.mxu0 %v2315
    %2904 = vmatpush1.msra.mxu0 %v2314
    %2905 = vmatprep.subr.mxu0 %v2319
    %2906 = vmatpush1.msra.mxu0 %v2318
    %2907 = vmatprep.subr.mxu0 %v2323
    %2908 = vmatpush1.msra.mxu0 %v2322
    %2909 = vmatprep.subr.mxu0 %v2327
    %2910 = vmatpush1.msra.mxu0 %v2326
    %2911 = vmatprep.subr.mxu0 %v2331
    %2912 = vmatpush1.msra.mxu0 %v2330
    %2913 = vmatprep.subr.mxu0 %v2335
    %2914 = vmatpush1.msra.mxu0 %v2334
    %2915 = vmatprep.subr.mxu0 %v2339
    %2916 = vmatpush1.msra.mxu0 %v2338
    %2917 = vmatprep.subr.mxu0 %v2343
    %2918 = vmatpush1.msra.mxu0 %v2342
    %2919 = vmatprep.subr.mxu0 %v2347
    %2920 = vmatpush1.msra.mxu0 %v2346
    %2921 = vmatprep.subr.mxu0 0.0
    %2922 = vmatpush1.msra.mxu0 0.0
    %2923 = vmatprep.subr.mxu0 0.0
    %2924 = vmatpush1.msra.mxu0 0.0
    %2925 = vmatprep.subr.mxu0 0.0
    %2926 = vmatpush1.msra.mxu0 0.0
    %2927 = vmatprep.subr.mxu0 0.0
    %2928 = vmatpush1.msra.mxu0 0.0
    %2929 = vmatprep.subr.mxu0 0.0
    %2930 = vmatpush1.msra.mxu0 0.0
    %2931 = vmatprep.subr.mxu0 0.0
    %2932 = vmatpush1.msra.mxu0 0.0
    %2933 = vmatprep.subr.mxu0 0.0
    %2934 = vmatpush1.msra.mxu0 0.0
    %2935 = vmatprep.subr.mxu0 0.0
    %2936 = vmatpush1.msra.mxu0 0.0
    %2937 = vmatprep.subr.mxu0 0.0
    %2938 = vmatpush1.msra.mxu0 0.0
    %2939 = vmatprep.subr.mxu0 0.0
    %2940 = vmatpush1.msra.mxu0 0.0
    %2941 = vmatprep.subr.mxu0 0.0
    %2942 = vmatpush1.msra.mxu0 0.0
    %2943 = vmatprep.subr.mxu0 0.0
    %2944 = vmatpush1.msra.mxu0 0.0
    %2945 = vmatprep.subr.mxu0 0.0
    %2946 = vmatpush1.msra.mxu0 0.0
    %2947 = vmatprep.subr.mxu0 0.0
    %2948 = vmatpush1.msra.mxu0 0.0
    %2949 = vmatprep.subr.mxu0 0.0
    %2950 = vmatpush1.msra.mxu0 0.0
    %2951 = vmatprep.subr.mxu0 0.0
    %2952 = vmatpush1.msra.mxu0 0.0
    %2953 = vmatprep.mubr.f32.mxu0 0.0
    %2954 = vmatmul.mubr.f32.gmra.mrb[0].mxu0 %v2888
    %v2955 = vpop.f32.mrb[0].mxu0
    %v2956 = vadd.f32 0.0, %v2955
    %v2957 = vpop.f32.mrb[0].mxu0
    %v2958 = vadd.f32 0.0, %v2957
    %2959 = vdwg.mxu0
    %2960 = vmatprep.subr.mxu0 %v2289
    %2961 = vmatpush1.msra.mxu0 %v2288
    %2962 = vmatprep.subr.mxu0 %v2293
    %2963 = vmatpush1.msra.mxu0 %v2292
    %2964 = vmatprep.subr.mxu0 %v2297
    %2965 = vmatpush1.msra.mxu0 %v2296
    %2966 = vmatprep.subr.mxu0 %v2301
    %2967 = vmatpush1.msra.mxu0 %v2300
    %2968 = vmatprep.subr.mxu0 %v2305
    %2969 = vmatpush1.msra.mxu0 %v2304
    %2970 = vmatprep.subr.mxu0 %v2309
    %2971 = vmatpush1.msra.mxu0 %v2308
    %2972 = vmatprep.subr.mxu0 %v2313
    %2973 = vmatpush1.msra.mxu0 %v2312
    %2974 = vmatprep.subr.mxu0 %v2317
    %2975 = vmatpush1.msra.mxu0 %v2316
    %2976 = vmatprep.subr.mxu0 %v2321
    %2977 = vmatpush1.msra.mxu0 %v2320
    %2978 = vmatprep.subr.mxu0 %v2325
    %2979 = vmatpush1.msra.mxu0 %v2324
    %2980 = vmatprep.subr.mxu0 %v2329
    %2981 = vmatpush1.msra.mxu0 %v2328
    %2982 = vmatprep.subr.mxu0 %v2333
    %2983 = vmatpush1.msra.mxu0 %v2332
    %2984 = vmatprep.subr.mxu0 %v2337
    %2985 = vmatpush1.msra.mxu0 %v2336
    %2986 = vmatprep.subr.mxu0 %v2341
    %2987 = vmatpush1.msra.mxu0 %v2340
    %2988 = vmatprep.subr.mxu0 %v2345
    %2989 = vmatpush1.msra.mxu0 %v2344
    %2990 = vmatprep.subr.mxu0 %v2349
    %2991 = vmatpush1.msra.mxu0 %v2348
    %2992 = vmatprep.subr.mxu0 0.0
    %2993 = vmatpush1.msra.mxu0 0.0
    %2994 = vmatprep.subr.mxu0 0.0
    %2995 = vmatpush1.msra.mxu0 0.0
    %2996 = vmatprep.subr.mxu0 0.0
    %2997 = vmatpush1.msra.mxu0 0.0
    %2998 = vmatprep.subr.mxu0 0.0
    %2999 = vmatpush1.msra.mxu0 0.0
    %3000 = vmatprep.subr.mxu0 0.0
    %3001 = vmatpush1.msra.mxu0 0.0
    %3002 = vmatprep.subr.mxu0 0.0
    %3003 = vmatpush1.msra.mxu0 0.0
    %3004 = vmatprep.subr.mxu0 0.0
    %3005 = vmatpush1.msra.mxu0 0.0
    %3006 = vmatprep.subr.mxu0 0.0
    %3007 = vmatpush1.msra.mxu0 0.0
    %3008 = vmatprep.subr.mxu0 0.0
    %3009 = vmatpush1.msra.mxu0 0.0
    %3010 = vmatprep.subr.mxu0 0.0
    %3011 = vmatpush1.msra.mxu0 0.0
    %3012 = vmatprep.subr.mxu0 0.0
    %3013 = vmatpush1.msra.mxu0 0.0
    %3014 = vmatprep.subr.mxu0 0.0
    %3015 = vmatpush1.msra.mxu0 0.0
    %3016 = vmatprep.subr.mxu0 0.0
    %3017 = vmatpush1.msra.mxu0 0.0
    %3018 = vmatprep.subr.mxu0 0.0
    %3019 = vmatpush1.msra.mxu0 0.0
    %3020 = vmatprep.subr.mxu0 0.0
    %3021 = vmatpush1.msra.mxu0 0.0
    %3022 = vmatprep.subr.mxu0 0.0
    %3023 = vmatpush1.msra.mxu0 0.0
    %3024 = vmatprep.mubr.f32.mxu0 0.0
    %3025 = vmatmul.mubr.f32.gmra.mrb[0].mxu0 %v2888
    %v3026 = vpop.f32.mrb[0].mxu0
    %v3027 = vadd.f32 0.0, %v3026
    %v3028 = vpop.f32.mrb[0].mxu0
    %v3029 = vadd.f32 0.0, %v3028
    %3030 = vdwg.mxu0
    %v3031 = vadd.f32 %v2884, %v2956
    %v3032 = vadd.f32 %v2885, %v2958
    %v3033 = vadd.f32 %v2886, %v3027
    %v3034 = vadd.f32 %v2887, %v3029
    %v3035 = vxor.u32 %v3031, 2147483648
    %v3036 = vxor.u32 %v3032, 2147483648
    %v3037 = vxor.u32 %v3033, 2147483648
    %v3038 = vmul.f32 %v3035, 1.442695
    %v3039 = vpow.pop %v3038
    %v3040 = vmul.f32 %v3036, 1.442695
    %v3041 = vpow.pop %v3040
    %v3042 = vmul.f32 %v3037, 1.442695
    %v3043 = vpow.pop %v3042
    %v3044 = vadd.f32 %v3039, 1.0
    %v3045 = vadd.f32 %v3041, 1.0
    %v3046 = vadd.f32 %v3043, 1.0
    %v3047 = vrcp.pop %v3044
    %v3048 = vmul.f32 1.0, %v3047
    %v3049 = vrcp.pop %v3045
    %v3050 = vmul.f32 1.0, %v3049
    %v3051 = vrcp.pop %v3046
    %v3052 = vmul.f32 1.0, %v3051
    %v3053 = vtanh.pop %v3034
    %v3054 = vld [vmem:[#allocation5] sm:$0xff]
    %v3055 = vmul.f32 %v3050, %v3054
    %v3056 = vmul.f32 %v3048, %v3053
    %v3057 = vadd.f32 %v3055, %v3056
    %v3058 = vtanh.pop %v3057
    %v3059 = vmul.f32 %v3052, %v3058
    %3060 = vst [vmem:[#allocation5] sm:$0xff] %v3057
    %3061 = vst [vmem:[#allocation4] sm:$0xff] %v3059
    %v3062 = vld [vmem:[#allocation2 + $0x80] sm:$0xff]
    %v3063 = vld [vmem:[#allocation2 + $0x88] sm:$0xff]
    %v3064 = vld [vmem:[#allocation2 + $0x90] sm:$0xff]
    %v3065 = vld [vmem:[#allocation2 + $0x98] sm:$0xff]
    %v3066 = vld [vmem:[#allocation4] sm:$0xff]
    %3067 = vmatprep.subr.mxu0 %v2287
    %3068 = vmatpush1.msra.mxu0 %v2286
    %3069 = vmatprep.subr.mxu0 %v2291
    %3070 = vmatpush1.msra.mxu0 %v2290
    %3071 = vmatprep.subr.mxu0 %v2295
    %3072 = vmatpush1.msra.mxu0 %v2294
    %3073 = vmatprep.subr.mxu0 %v2299
    %3074 = vmatpush1.msra.mxu0 %v2298
    %3075 = vmatprep.subr.mxu0 %v2303
    %3076 = vmatpush1.msra.mxu0 %v2302
    %3077 = vmatprep.subr.mxu0 %v2307
    %3078 = vmatpush1.msra.mxu0 %v2306
    %3079 = vmatprep.subr.mxu0 %v2311
    %3080 = vmatpush1.msra.mxu0 %v2310
    %3081 = vmatprep.subr.mxu0 %v2315
    %3082 = vmatpush1.msra.mxu0 %v2314
    %3083 = vmatprep.subr.mxu0 %v2319
    %3084 = vmatpush1.msra.mxu0 %v2318
    %3085 = vmatprep.subr.mxu0 %v2323
    %3086 = vmatpush1.msra.mxu0 %v2322
    %3087 = vmatprep.subr.mxu0 %v2327
    %3088 = vmatpush1.msra.mxu0 %v2326
    %3089 = vmatprep.subr.mxu0 %v2331
    %3090 = vmatpush1.msra.mxu0 %v2330
    %3091 = vmatprep.subr.mxu0 %v2335
    %3092 = vmatpush1.msra.mxu0 %v2334
    %3093 = vmatprep.subr.mxu0 %v2339
    %3094 = vmatpush1.msra.mxu0 %v2338
    %3095 = vmatprep.subr.mxu0 %v2343
    %3096 = vmatpush1.msra.mxu0 %v2342
    %3097 = vmatprep.subr.mxu0 %v2347
    %3098 = vmatpush1.msra.mxu0 %v2346
    %3099 = vmatprep.subr.mxu0 0.0
    %3100 = vmatpush1.msra.mxu0 0.0
    %3101 = vmatprep.subr.mxu0 0.0
    %3102 = vmatpush1.msra.mxu0 0.0
    %3103 = vmatprep.subr.mxu0 0.0
    %3104 = vmatpush1.msra.mxu0 0.0
    %3105 = vmatprep.subr.mxu0 0.0
    %3106 = vmatpush1.msra.mxu0 0.0
    %3107 = vmatprep.subr.mxu0 0.0
    %3108 = vmatpush1.msra.mxu0 0.0
    %3109 = vmatprep.subr.mxu0 0.0
    %3110 = vmatpush1.msra.mxu0 0.0
    %3111 = vmatprep.subr.mxu0 0.0
    %3112 = vmatpush1.msra.mxu0 0.0
    %3113 = vmatprep.subr.mxu0 0.0
    %3114 = vmatpush1.msra.mxu0 0.0
    %3115 = vmatprep.subr.mxu0 0.0
    %3116 = vmatpush1.msra.mxu0 0.0
    %3117 = vmatprep.subr.mxu0 0.0
    %3118 = vmatpush1.msra.mxu0 0.0
    %3119 = vmatprep.subr.mxu0 0.0
    %3120 = vmatpush1.msra.mxu0 0.0
    %3121 = vmatprep.subr.mxu0 0.0
    %3122 = vmatpush1.msra.mxu0 0.0
    %3123 = vmatprep.subr.mxu0 0.0
    %3124 = vmatpush1.msra.mxu0 0.0
    %3125 = vmatprep.subr.mxu0 0.0
    %3126 = vmatpush1.msra.mxu0 0.0
    %3127 = vmatprep.subr.mxu0 0.0
    %3128 = vmatpush1.msra.mxu0 0.0
    %3129 = vmatprep.subr.mxu0 0.0
    %3130 = vmatpush1.msra.mxu0 0.0
    %3131 = vmatprep.mubr.f32.mxu0 0.0
    %3132 = vmatmul.mubr.f32.gmra.mrb[0].mxu0 %v3066
    %v3133 = vpop.f32.mrb[0].mxu0
    %v3134 = vadd.f32 0.0, %v3133
    %v3135 = vpop.f32.mrb[0].mxu0
    %v3136 = vadd.f32 0.0, %v3135
    %3137 = vdwg.mxu0
    %3138 = vmatprep.subr.mxu0 %v2289
    %3139 = vmatpush1.msra.mxu0 %v2288
    %3140 = vmatprep.subr.mxu0 %v2293
    %3141 = vmatpush1.msra.mxu0 %v2292
    %3142 = vmatprep.subr.mxu0 %v2297
    %3143 = vmatpush1.msra.mxu0 %v2296
    %3144 = vmatprep.subr.mxu0 %v2301
    %3145 = vmatpush1.msra.mxu0 %v2300
    %3146 = vmatprep.subr.mxu0 %v2305
    %3147 = vmatpush1.msra.mxu0 %v2304
    %3148 = vmatprep.subr.mxu0 %v2309
    %3149 = vmatpush1.msra.mxu0 %v2308
    %3150 = vmatprep.subr.mxu0 %v2313
    %3151 = vmatpush1.msra.mxu0 %v2312
    %3152 = vmatprep.subr.mxu0 %v2317
    %3153 = vmatpush1.msra.mxu0 %v2316
    %3154 = vmatprep.subr.mxu0 %v2321
    %3155 = vmatpush1.msra.mxu0 %v2320
    %3156 = vmatprep.subr.mxu0 %v2325
    %3157 = vmatpush1.msra.mxu0 %v2324
    %3158 = vmatprep.subr.mxu0 %v2329
    %3159 = vmatpush1.msra.mxu0 %v2328
    %3160 = vmatprep.subr.mxu0 %v2333
    %3161 = vmatpush1.msra.mxu0 %v2332
    %3162 = vmatprep.subr.mxu0 %v2337
    %3163 = vmatpush1.msra.mxu0 %v2336
    %3164 = vmatprep.subr.mxu0 %v2341
    %3165 = vmatpush1.msra.mxu0 %v2340
    %3166 = vmatprep.subr.mxu0 %v2345
    %3167 = vmatpush1.msra.mxu0 %v2344
    %3168 = vmatprep.subr.mxu0 %v2349
    %3169 = vmatpush1.msra.mxu0 %v2348
    %3170 = vmatprep.subr.mxu0 0.0
    %3171 = vmatpush1.msra.mxu0 0.0
    %3172 = vmatprep.subr.mxu0 0.0
    %3173 = vmatpush1.msra.mxu0 0.0
    %3174 = vmatprep.subr.mxu0 0.0
    %3175 = vmatpush1.msra.mxu0 0.0
    %3176 = vmatprep.subr.mxu0 0.0
    %3177 = vmatpush1.msra.mxu0 0.0
    %3178 = vmatprep.subr.mxu0 0.0
    %3179 = vmatpush1.msra.mxu0 0.0
    %3180 = vmatprep.subr.mxu0 0.0
    %3181 = vmatpush1.msra.mxu0 0.0
    %3182 = vmatprep.subr.mxu0 0.0
    %3183 = vmatpush1.msra.mxu0 0.0
    %3184 = vmatprep.subr.mxu0 0.0
    %3185 = vmatpush1.msra.mxu0 0.0
    %3186 = vmatprep.subr.mxu0 0.0
    %3187 = vmatpush1.msra.mxu0 0.0
    %3188 = vmatprep.subr.mxu0 0.0
    %3189 = vmatpush1.msra.mxu0 0.0
    %3190 = vmatprep.subr.mxu0 0.0
    %3191 = vmatpush1.msra.mxu0 0.0
    %3192 = vmatprep.subr.mxu0 0.0
    %3193 = vmatpush1.msra.mxu0 0.0
    %3194 = vmatprep.subr.mxu0 0.0
    %3195 = vmatpush1.msra.mxu0 0.0
    %3196 = vmatprep.subr.mxu0 0.0
    %3197 = vmatpush1.msra.mxu0 0.0
    %3198 = vmatprep.subr.mxu0 0.0
    %3199 = vmatpush1.msra.mxu0 0.0
    %3200 = vmatprep.subr.mxu0 0.0
    %3201 = vmatpush1.msra.mxu0 0.0
    %3202 = vmatprep.mubr.f32.mxu0 0.0
    %3203 = vmatmul.mubr.f32.gmra.mrb[0].mxu0 %v3066
    %v3204 = vpop.f32.mrb[0].mxu0
    %v3205 = vadd.f32 0.0, %v3204
    %v3206 = vpop.f32.mrb[0].mxu0
    %v3207 = vadd.f32 0.0, %v3206
    %3208 = vdwg.mxu0
    %v3209 = vadd.f32 %v3062, %v3134
    %v3210 = vadd.f32 %v3063, %v3136
    %v3211 = vadd.f32 %v3064, %v3205
    %v3212 = vadd.f32 %v3065, %v3207
    %v3213 = vxor.u32 %v3209, 2147483648
    %v3214 = vxor.u32 %v3210, 2147483648
    %v3215 = vxor.u32 %v3211, 2147483648
    %v3216 = vmul.f32 %v3213, 1.442695
    %v3217 = vpow.pop %v3216
    %v3218 = vmul.f32 %v3214, 1.442695
    %v3219 = vpow.pop %v3218
    %v3220 = vmul.f32 %v3215, 1.442695
    %v3221 = vpow.pop %v3220
    %v3222 = vadd.f32 %v3217, 1.0
    %v3223 = vadd.f32 %v3219, 1.0
    %v3224 = vadd.f32 %v3221, 1.0
    %v3225 = vrcp.pop %v3222
    %v3226 = vmul.f32 1.0, %v3225
    %v3227 = vrcp.pop %v3223
    %v3228 = vmul.f32 1.0, %v3227
    %v3229 = vrcp.pop %v3224
    %v3230 = vmul.f32 1.0, %v3229
    %v3231 = vtanh.pop %v3212
    %v3232 = vld [vmem:[#allocation5] sm:$0xff]
    %v3233 = vmul.f32 %v3228, %v3232
    %v3234 = vmul.f32 %v3226, %v3231
    %v3235 = vadd.f32 %v3233, %v3234
    %v3236 = vtanh.pop %v3235
    %v3237 = vmul.f32 %v3230, %v3236
    %3238 = vst [vmem:[#allocation5] sm:$0xff] %v3235
    %3239 = vst [vmem:[#allocation4] sm:$0xff] %v3237
    %v3240 = vld [vmem:[#allocation2 + $0xa0] sm:$0xff]
    %v3241 = vld [vmem:[#allocation2 + $0xa8] sm:$0xff]
    %v3242 = vld [vmem:[#allocation2 + $0xb0] sm:$0xff]
    %v3243 = vld [vmem:[#allocation2 + $0xb8] sm:$0xff]
    %v3244 = vld [vmem:[#allocation4] sm:$0xff]
    %3245 = vmatprep.subr.mxu0 %v2287
    %3246 = vmatpush1.msra.mxu0 %v2286
    %3247 = vmatprep.subr.mxu0 %v2291
    %3248 = vmatpush1.msra.mxu0 %v2290
    %3249 = vmatprep.subr.mxu0 %v2295
    %3250 = vmatpush1.msra.mxu0 %v2294
    %3251 = vmatprep.subr.mxu0 %v2299
    %3252 = vmatpush1.msra.mxu0 %v2298
    %3253 = vmatprep.subr.mxu0 %v2303
    %3254 = vmatpush1.msra.mxu0 %v2302
    %3255 = vmatprep.subr.mxu0 %v2307
    %3256 = vmatpush1.msra.mxu0 %v2306
    %3257 = vmatprep.subr.mxu0 %v2311
    %3258 = vmatpush1.msra.mxu0 %v2310
    %3259 = vmatprep.subr.mxu0 %v2315
    %3260 = vmatpush1.msra.mxu0 %v2314
    %3261 = vmatprep.subr.mxu0 %v2319
    %3262 = vmatpush1.msra.mxu0 %v2318
    %3263 = vmatprep.subr.mxu0 %v2323
    %3264 = vmatpush1.msra.mxu0 %v2322
    %3265 = vmatprep.subr.mxu0 %v2327
    %3266 = vmatpush1.msra.mxu0 %v2326
    %3267 = vmatprep.subr.mxu0 %v2331
    %3268 = vmatpush1.msra.mxu0 %v2330
    %3269 = vmatprep.subr.mxu0 %v2335
    %3270 = vmatpush1.msra.mxu0 %v2334
    %3271 = vmatprep.subr.mxu0 %v2339
    %3272 = vmatpush1.msra.mxu0 %v2338
    %3273 = vmatprep.subr.mxu0 %v2343
    %3274 = vmatpush1.msra.mxu0 %v2342
    %3275 = vmatprep.subr.mxu0 %v2347
    %3276 = vmatpush1.msra.mxu0 %v2346
    %3277 = vmatprep.subr.mxu0 0.0
    %3278 = vmatpush1.msra.mxu0 0.0
    %3279 = vmatprep.subr.mxu0 0.0
    %3280 = vmatpush1.msra.mxu0 0.0
    %3281 = vmatprep.subr.mxu0 0.0
    %3282 = vmatpush1.msra.mxu0 0.0
    %3283 = vmatprep.subr.mxu0 0.0
    %3284 = vmatpush1.msra.mxu0 0.0
    %3285 = vmatprep.subr.mxu0 0.0
    %3286 = vmatpush1.msra.mxu0 0.0
    %3287 = vmatprep.subr.mxu0 0.0
    %3288 = vmatpush1.msra.mxu0 0.0
    %3289 = vmatprep.subr.mxu0 0.0
    %3290 = vmatpush1.msra.mxu0 0.0
    %3291 = vmatprep.subr.mxu0 0.0
    %3292 = vmatpush1.msra.mxu0 0.0
    %3293 = vmatprep.subr.mxu0 0.0
    %3294 = vmatpush1.msra.mxu0 0.0
    %3295 = vmatprep.subr.mxu0 0.0
    %3296 = vmatpush1.msra.mxu0 0.0
    %3297 = vmatprep.subr.mxu0 0.0
    %3298 = vmatpush1.msra.mxu0 0.0
    %3299 = vmatprep.subr.mxu0 0.0
    %3300 = vmatpush1.msra.mxu0 0.0
    %3301 = vmatprep.subr.mxu0 0.0
    %3302 = vmatpush1.msra.mxu0 0.0
    %3303 = vmatprep.subr.mxu0 0.0
    %3304 = vmatpush1.msra.mxu0 0.0
    %3305 = vmatprep.subr.mxu0 0.0
    %3306 = vmatpush1.msra.mxu0 0.0
    %3307 = vmatprep.subr.mxu0 0.0
    %3308 = vmatpush1.msra.mxu0 0.0
    %3309 = vmatprep.mubr.f32.mxu0 0.0
    %3310 = vmatmul.mubr.f32.gmra.mrb[0].mxu0 %v3244
    %v3311 = vpop.f32.mrb[0].mxu0
    %v3312 = vadd.f32 0.0, %v3311
    %v3313 = vpop.f32.mrb[0].mxu0
    %v3314 = vadd.f32 0.0, %v3313
    %3315 = vdwg.mxu0
    %3316 = vmatprep.subr.mxu0 %v2289
    %3317 = vmatpush1.msra.mxu0 %v2288
    %3318 = vmatprep.subr.mxu0 %v2293
    %3319 = vmatpush1.msra.mxu0 %v2292
    %3320 = vmatprep.subr.mxu0 %v2297
    %3321 = vmatpush1.msra.mxu0 %v2296
    %3322 = vmatprep.subr.mxu0 %v2301
    %3323 = vmatpush1.msra.mxu0 %v2300
    %3324 = vmatprep.subr.mxu0 %v2305
    %3325 = vmatpush1.msra.mxu0 %v2304
    %3326 = vmatprep.subr.mxu0 %v2309
    %3327 = vmatpush1.msra.mxu0 %v2308
    %3328 = vmatprep.subr.mxu0 %v2313
    %3329 = vmatpush1.msra.mxu0 %v2312
    %3330 = vmatprep.subr.mxu0 %v2317
    %3331 = vmatpush1.msra.mxu0 %v2316
    %3332 = vmatprep.subr.mxu0 %v2321
    %3333 = vmatpush1.msra.mxu0 %v2320
    %3334 = vmatprep.subr.mxu0 %v2325
    %3335 = vmatpush1.msra.mxu0 %v2324
    %3336 = vmatprep.subr.mxu0 %v2329
    %3337 = vmatpush1.msra.mxu0 %v2328
    %3338 = vmatprep.subr.mxu0 %v2333
    %3339 = vmatpush1.msra.mxu0 %v2332
    %3340 = vmatprep.subr.mxu0 %v2337
    %3341 = vmatpush1.msra.mxu0 %v2336
    %3342 = vmatprep.subr.mxu0 %v2341
    %3343 = vmatpush1.msra.mxu0 %v2340
    %3344 = vmatprep.subr.mxu0 %v2345
    %3345 = vmatpush1.msra.mxu0 %v2344
    %3346 = vmatprep.subr.mxu0 %v2349
    %3347 = vmatpush1.msra.mxu0 %v2348
    %3348 = vmatprep.subr.mxu0 0.0
    %3349 = vmatpush1.msra.mxu0 0.0
    %3350 = vmatprep.subr.mxu0 0.0
    %3351 = vmatpush1.msra.mxu0 0.0
    %3352 = vmatprep.subr.mxu0 0.0
    %3353 = vmatpush1.msra.mxu0 0.0
    %3354 = vmatprep.subr.mxu0 0.0
    %3355 = vmatpush1.msra.mxu0 0.0
    %3356 = vmatprep.subr.mxu0 0.0
    %3357 = vmatpush1.msra.mxu0 0.0
    %3358 = vmatprep.subr.mxu0 0.0
    %3359 = vmatpush1.msra.mxu0 0.0
    %3360 = vmatprep.subr.mxu0 0.0
    %3361 = vmatpush1.msra.mxu0 0.0
    %3362 = vmatprep.subr.mxu0 0.0
    %3363 = vmatpush1.msra.mxu0 0.0
    %3364 = vmatprep.subr.mxu0 0.0
    %3365 = vmatpush1.msra.mxu0 0.0
    %3366 = vmatprep.subr.mxu0 0.0
    %3367 = vmatpush1.msra.mxu0 0.0
    %3368 = vmatprep.subr.mxu0 0.0
    %3369 = vmatpush1.msra.mxu0 0.0
    %3370 = vmatprep.subr.mxu0 0.0
    %3371 = vmatpush1.msra.mxu0 0.0
    %3372 = vmatprep.subr.mxu0 0.0
    %3373 = vmatpush1.msra.mxu0 0.0
    %3374 = vmatprep.subr.mxu0 0.0
    %3375 = vmatpush1.msra.mxu0 0.0
    %3376 = vmatprep.subr.mxu0 0.0
    %3377 = vmatpush1.msra.mxu0 0.0
    %3378 = vmatprep.subr.mxu0 0.0
    %3379 = vmatpush1.msra.mxu0 0.0
    %3380 = vmatprep.mubr.f32.mxu0 0.0
    %3381 = vmatmul.mubr.f32.gmra.mrb[0].mxu0 %v3244
    %v3382 = vpop.f32.mrb[0].mxu0
    %v3383 = vadd.f32 0.0, %v3382
    %v3384 = vpop.f32.mrb[0].mxu0
    %v3385 = vadd.f32 0.0, %v3384
    %3386 = vdwg.mxu0
    %v3387 = vadd.f32 %v3240, %v3312
    %v3388 = vadd.f32 %v3241, %v3314
    %v3389 = vadd.f32 %v3242, %v3383
    %v3390 = vadd.f32 %v3243, %v3385
    %v3391 = vxor.u32 %v3387, 2147483648
    %v3392 = vxor.u32 %v3388, 2147483648
    %v3393 = vxor.u32 %v3389, 2147483648
    %v3394 = vmul.f32 %v3391, 1.442695
    %v3395 = vpow.pop %v3394
    %v3396 = vmul.f32 %v3392, 1.442695
    %v3397 = vpow.pop %v3396
    %v3398 = vmul.f32 %v3393, 1.442695
    %v3399 = vpow.pop %v3398
    %v3400 = vadd.f32 %v3395, 1.0
    %v3401 = vadd.f32 %v3397, 1.0
    %v3402 = vadd.f32 %v3399, 1.0
    %v3403 = vrcp.pop %v3400
    %v3404 = vmul.f32 1.0, %v3403
    %v3405 = vrcp.pop %v3401
    %v3406 = vmul.f32 1.0, %v3405
    %v3407 = vrcp.pop %v3402
    %v3408 = vmul.f32 1.0, %v3407
    %v3409 = vtanh.pop %v3390
    %v3410 = vld [vmem:[#allocation5] sm:$0xff]
    %v3411 = vmul.f32 %v3406, %v3410
    %v3412 = vmul.f32 %v3404, %v3409
    %v3413 = vadd.f32 %v3411, %v3412
    %v3414 = vtanh.pop %v3413
    %v3415 = vmul.f32 %v3408, %v3414
    %3416 = vst [vmem:[#allocation5] sm:$0xff] %v3413
    %3417 = vst [vmem:[#allocation4] sm:$0xff] %v3415
    %v3418 = vld [vmem:[#allocation2 + $0xc0] sm:$0xff]
    %v3419 = vld [vmem:[#allocation2 + $0xc8] sm:$0xff]
    %v3420 = vld [vmem:[#allocation2 + $0xd0] sm:$0xff]
    %v3421 = vld [vmem:[#allocation2 + $0xd8] sm:$0xff]
    %v3422 = vld [vmem:[#allocation4] sm:$0xff]
    %3423 = vmatprep.subr.mxu0 %v2287
    %3424 = vmatpush1.msra.mxu0 %v2286
    %3425 = vmatprep.subr.mxu0 %v2291
    %3426 = vmatpush1.msra.mxu0 %v2290
    %3427 = vmatprep.subr.mxu0 %v2295
    %3428 = vmatpush1.msra.mxu0 %v2294
    %3429 = vmatprep.subr.mxu0 %v2299
    %3430 = vmatpush1.msra.mxu0 %v2298
    %3431 = vmatprep.subr.mxu0 %v2303
    %3432 = vmatpush1.msra.mxu0 %v2302
    %3433 = vmatprep.subr.mxu0 %v2307
    %3434 = vmatpush1.msra.mxu0 %v2306
    %3435 = vmatprep.subr.mxu0 %v2311
    %3436 = vmatpush1.msra.mxu0 %v2310
    %3437 = vmatprep.subr.mxu0 %v2315
    %3438 = vmatpush1.msra.mxu0 %v2314
    %3439 = vmatprep.subr.mxu0 %v2319
    %3440 = vmatpush1.msra.mxu0 %v2318
    %3441 = vmatprep.subr.mxu0 %v2323
    %3442 = vmatpush1.msra.mxu0 %v2322
    %3443 = vmatprep.subr.mxu0 %v2327
    %3444 = vmatpush1.msra.mxu0 %v2326
    %3445 = vmatprep.subr.mxu0 %v2331
    %3446 = vmatpush1.msra.mxu0 %v2330
    %3447 = vmatprep.subr.mxu0 %v2335
    %3448 = vmatpush1.msra.mxu0 %v2334
    %3449 = vmatprep.subr.mxu0 %v2339
    %3450 = vmatpush1.msra.mxu0 %v2338
    %3451 = vmatprep.subr.mxu0 %v2343
    %3452 = vmatpush1.msra.mxu0 %v2342
    %3453 = vmatprep.subr.mxu0 %v2347
    %3454 = vmatpush1.msra.mxu0 %v2346
    %3455 = vmatprep.subr.mxu0 0.0
    %3456 = vmatpush1.msra.mxu0 0.0
    %3457 = vmatprep.subr.mxu0 0.0
    %3458 = vmatpush1.msra.mxu0 0.0
    %3459 = vmatprep.subr.mxu0 0.0
    %3460 = vmatpush1.msra.mxu0 0.0
    %3461 = vmatprep.subr.mxu0 0.0
    %3462 = vmatpush1.msra.mxu0 0.0
    %3463 = vmatprep.subr.mxu0 0.0
    %3464 = vmatpush1.msra.mxu0 0.0
    %3465 = vmatprep.subr.mxu0 0.0
    %3466 = vmatpush1.msra.mxu0 0.0
    %3467 = vmatprep.subr.mxu0 0.0
    %3468 = vmatpush1.msra.mxu0 0.0
    %3469 = vmatprep.subr.mxu0 0.0
    %3470 = vmatpush1.msra.mxu0 0.0
    %3471 = vmatprep.subr.mxu0 0.0
    %3472 = vmatpush1.msra.mxu0 0.0
    %3473 = vmatprep.subr.mxu0 0.0
    %3474 = vmatpush1.msra.mxu0 0.0
    %3475 = vmatprep.subr.mxu0 0.0
    %3476 = vmatpush1.msra.mxu0 0.0
    %3477 = vmatprep.subr.mxu0 0.0
    %3478 = vmatpush1.msra.mxu0 0.0
    %3479 = vmatprep.subr.mxu0 0.0
    %3480 = vmatpush1.msra.mxu0 0.0
    %3481 = vmatprep.subr.mxu0 0.0
    %3482 = vmatpush1.msra.mxu0 0.0
    %3483 = vmatprep.subr.mxu0 0.0
    %3484 = vmatpush1.msra.mxu0 0.0
    %3485 = vmatprep.subr.mxu0 0.0
    %3486 = vmatpush1.msra.mxu0 0.0
    %3487 = vmatprep.mubr.f32.mxu0 0.0
    %3488 = vmatmul.mubr.f32.gmra.mrb[0].mxu0 %v3422
    %v3489 = vpop.f32.mrb[0].mxu0
    %v3490 = vadd.f32 0.0, %v3489
    %v3491 = vpop.f32.mrb[0].mxu0
    %v3492 = vadd.f32 0.0, %v3491
    %3493 = vdwg.mxu0
    %3494 = vmatprep.subr.mxu0 %v2289
    %3495 = vmatpush1.msra.mxu0 %v2288
    %3496 = vmatprep.subr.mxu0 %v2293
    %3497 = vmatpush1.msra.mxu0 %v2292
    %3498 = vmatprep.subr.mxu0 %v2297
    %3499 = vmatpush1.msra.mxu0 %v2296
    %3500 = vmatprep.subr.mxu0 %v2301
    %3501 = vmatpush1.msra.mxu0 %v2300
    %3502 = vmatprep.subr.mxu0 %v2305
    %3503 = vmatpush1.msra.mxu0 %v2304
    %3504 = vmatprep.subr.mxu0 %v2309
    %3505 = vmatpush1.msra.mxu0 %v2308
    %3506 = vmatprep.subr.mxu0 %v2313
    %3507 = vmatpush1.msra.mxu0 %v2312
    %3508 = vmatprep.subr.mxu0 %v2317
    %3509 = vmatpush1.msra.mxu0 %v2316
    %3510 = vmatprep.subr.mxu0 %v2321
    %3511 = vmatpush1.msra.mxu0 %v2320
    %3512 = vmatprep.subr.mxu0 %v2325
    %3513 = vmatpush1.msra.mxu0 %v2324
    %3514 = vmatprep.subr.mxu0 %v2329
    %3515 = vmatpush1.msra.mxu0 %v2328
    %3516 = vmatprep.subr.mxu0 %v2333
    %3517 = vmatpush1.msra.mxu0 %v2332
    %3518 = vmatprep.subr.mxu0 %v2337
    %3519 = vmatpush1.msra.mxu0 %v2336
    %3520 = vmatprep.subr.mxu0 %v2341
    %3521 = vmatpush1.msra.mxu0 %v2340
    %3522 = vmatprep.subr.mxu0 %v2345
    %3523 = vmatpush1.msra.mxu0 %v2344
    %3524 = vmatprep.subr.mxu0 %v2349
    %3525 = vmatpush1.msra.mxu0 %v2348
    %3526 = vmatprep.subr.mxu0 0.0
    %3527 = vmatpush1.msra.mxu0 0.0
    %3528 = vmatprep.subr.mxu0 0.0
    %3529 = vmatpush1.msra.mxu0 0.0
    %3530 = vmatprep.subr.mxu0 0.0
    %3531 = vmatpush1.msra.mxu0 0.0
    %3532 = vmatprep.subr.mxu0 0.0
    %3533 = vmatpush1.msra.mxu0 0.0
    %3534 = vmatprep.subr.mxu0 0.0
    %3535 = vmatpush1.msra.mxu0 0.0
    %3536 = vmatprep.subr.mxu0 0.0
    %3537 = vmatpush1.msra.mxu0 0.0
    %3538 = vmatprep.subr.mxu0 0.0
    %3539 = vmatpush1.msra.mxu0 0.0
    %3540 = vmatprep.subr.mxu0 0.0
    %3541 = vmatpush1.msra.mxu0 0.0
    %3542 = vmatprep.subr.mxu0 0.0
    %3543 = vmatpush1.msra.mxu0 0.0
    %3544 = vmatprep.subr.mxu0 0.0
    %3545 = vmatpush1.msra.mxu0 0.0
    %3546 = vmatprep.subr.mxu0 0.0
    %3547 = vmatpush1.msra.mxu0 0.0
    %3548 = vmatprep.subr.mxu0 0.0
    %3549 = vmatpush1.msra.mxu0 0.0
    %3550 = vmatprep.subr.mxu0 0.0
    %3551 = vmatpush1.msra.mxu0 0.0
    %3552 = vmatprep.subr.mxu0 0.0
    %3553 = vmatpush1.msra.mxu0 0.0
    %3554 = vmatprep.subr.mxu0 0.0
    %3555 = vmatpush1.msra.mxu0 0.0
    %3556 = vmatprep.subr.mxu0 0.0
    %3557 = vmatpush1.msra.mxu0 0.0
    %3558 = vmatprep.mubr.f32.mxu0 0.0
    %3559 = vmatmul.mubr.f32.gmra.mrb[0].mxu0 %v3422
    %v3560 = vpop.f32.mrb[0].mxu0
    %v3561 = vadd.f32 0.0, %v3560
    %v3562 = vpop.f32.mrb[0].mxu0
    %v3563 = vadd.f32 0.0, %v3562
    %3564 = vdwg.mxu0
    %v3565 = vadd.f32 %v3418, %v3490
    %v3566 = vadd.f32 %v3419, %v3492
    %v3567 = vadd.f32 %v3420, %v3561
    %v3568 = vadd.f32 %v3421, %v3563
    %v3569 = vxor.u32 %v3565, 2147483648
    %v3570 = vxor.u32 %v3566, 2147483648
    %v3571 = vxor.u32 %v3567, 2147483648
    %v3572 = vmul.f32 %v3569, 1.442695
    %v3573 = vpow.pop %v3572
    %v3574 = vmul.f32 %v3570, 1.442695
    %v3575 = vpow.pop %v3574
    %v3576 = vmul.f32 %v3571, 1.442695
    %v3577 = vpow.pop %v3576
    %v3578 = vadd.f32 %v3573, 1.0
    %v3579 = vadd.f32 %v3575, 1.0
    %v3580 = vadd.f32 %v3577, 1.0
    %v3581 = vrcp.pop %v3578
    %v3582 = vmul.f32 1.0, %v3581
    %v3583 = vrcp.pop %v3579
    %v3584 = vmul.f32 1.0, %v3583
    %v3585 = vrcp.pop %v3580
    %v3586 = vmul.f32 1.0, %v3585
    %v3587 = vtanh.pop %v3568
    %v3588 = vld [vmem:[#allocation5] sm:$0xff]
    %v3589 = vmul.f32 %v3584, %v3588
    %v3590 = vmul.f32 %v3582, %v3587
    %v3591 = vadd.f32 %v3589, %v3590
    %v3592 = vtanh.pop %v3591
    %v3593 = vmul.f32 %v3586, %v3592
    %3594 = vst [vmem:[#allocation5] sm:$0xff] %v3591
    %3595 = vst [vmem:[#allocation4] sm:$0xff] %v3593
    %v3596 = vld [vmem:[#allocation2 + $0xe0] sm:$0xff]
    %v3597 = vld [vmem:[#allocation2 + $0xe8] sm:$0xff]
    %v3598 = vld [vmem:[#allocation2 + $0xf0] sm:$0xff]
    %v3599 = vld [vmem:[#allocation2 + $0xf8] sm:$0xff]
    %v3600 = vld [vmem:[#allocation4] sm:$0xff]
    %3601 = vmatprep.subr.mxu0 %v2287
    %3602 = vmatpush1.msra.mxu0 %v2286
    %3603 = vmatprep.subr.mxu0 %v2291
    %3604 = vmatpush1.msra.mxu0 %v2290
    %3605 = vmatprep.subr.mxu0 %v2295
    %3606 = vmatpush1.msra.mxu0 %v2294
    %3607 = vmatprep.subr.mxu0 %v2299
    %3608 = vmatpush1.msra.mxu0 %v2298
    %3609 = vmatprep.subr.mxu0 %v2303
    %3610 = vmatpush1.msra.mxu0 %v2302
    %3611 = vmatprep.subr.mxu0 %v2307
    %3612 = vmatpush1.msra.mxu0 %v2306
    %3613 = vmatprep.subr.mxu0 %v2311
    %3614 = vmatpush1.msra.mxu0 %v2310
    %3615 = vmatprep.subr.mxu0 %v2315
    %3616 = vmatpush1.msra.mxu0 %v2314
    %3617 = vmatprep.subr.mxu0 %v2319
    %3618 = vmatpush1.msra.mxu0 %v2318
    %3619 = vmatprep.subr.mxu0 %v2323
    %3620 = vmatpush1.msra.mxu0 %v2322
    %3621 = vmatprep.subr.mxu0 %v2327
    %3622 = vmatpush1.msra.mxu0 %v2326
    %3623 = vmatprep.subr.mxu0 %v2331
    %3624 = vmatpush1.msra.mxu0 %v2330
    %3625 = vmatprep.subr.mxu0 %v2335
    %3626 = vmatpush1.msra.mxu0 %v2334
    %3627 = vmatprep.subr.mxu0 %v2339
    %3628 = vmatpush1.msra.mxu0 %v2338
    %3629 = vmatprep.subr.mxu0 %v2343
    %3630 = vmatpush1.msra.mxu0 %v2342
    %3631 = vmatprep.subr.mxu0 %v2347
    %3632 = vmatpush1.msra.mxu0 %v2346
    %3633 = vmatprep.subr.mxu0 0.0
    %3634 = vmatpush1.msra.mxu0 0.0
    %3635 = vmatprep.subr.mxu0 0.0
    %3636 = vmatpush1.msra.mxu0 0.0
    %3637 = vmatprep.subr.mxu0 0.0
    %3638 = vmatpush1.msra.mxu0 0.0
    %3639 = vmatprep.subr.mxu0 0.0
    %3640 = vmatpush1.msra.mxu0 0.0
    %3641 = vmatprep.subr.mxu0 0.0
    %3642 = vmatpush1.msra.mxu0 0.0
    %3643 = vmatprep.subr.mxu0 0.0
    %3644 = vmatpush1.msra.mxu0 0.0
    %3645 = vmatprep.subr.mxu0 0.0
    %3646 = vmatpush1.msra.mxu0 0.0
    %3647 = vmatprep.subr.mxu0 0.0
    %3648 = vmatpush1.msra.mxu0 0.0
    %3649 = vmatprep.subr.mxu0 0.0
    %3650 = vmatpush1.msra.mxu0 0.0
    %3651 = vmatprep.subr.mxu0 0.0
    %3652 = vmatpush1.msra.mxu0 0.0
    %3653 = vmatprep.subr.mxu0 0.0
    %3654 = vmatpush1.msra.mxu0 0.0
    %3655 = vmatprep.subr.mxu0 0.0
    %3656 = vmatpush1.msra.mxu0 0.0
    %3657 = vmatprep.subr.mxu0 0.0
    %3658 = vmatpush1.msra.mxu0 0.0
    %3659 = vmatprep.subr.mxu0 0.0
    %3660 = vmatpush1.msra.mxu0 0.0
    %3661 = vmatprep.subr.mxu0 0.0
    %3662 = vmatpush1.msra.mxu0 0.0
    %3663 = vmatprep.subr.mxu0 0.0
    %3664 = vmatpush1.msra.mxu0 0.0
    %3665 = vmatprep.mubr.f32.mxu0 0.0
    %3666 = vmatmul.mubr.f32.gmra.mrb[0].mxu0 %v3600
    %v3667 = vpop.f32.mrb[0].mxu0
    %v3668 = vadd.f32 0.0, %v3667
    %v3669 = vpop.f32.mrb[0].mxu0
    %v3670 = vadd.f32 0.0, %v3669
    %3671 = vdwg.mxu0
    %3672 = vmatprep.subr.mxu0 %v2289
    %3673 = vmatpush1.msra.mxu0 %v2288
    %3674 = vmatprep.subr.mxu0 %v2293
    %3675 = vmatpush1.msra.mxu0 %v2292
    %3676 = vmatprep.subr.mxu0 %v2297
    %3677 = vmatpush1.msra.mxu0 %v2296
    %3678 = vmatprep.subr.mxu0 %v2301
    %3679 = vmatpush1.msra.mxu0 %v2300
    %3680 = vmatprep.subr.mxu0 %v2305
    %3681 = vmatpush1.msra.mxu0 %v2304
    %3682 = vmatprep.subr.mxu0 %v2309
    %3683 = vmatpush1.msra.mxu0 %v2308
    %3684 = vmatprep.subr.mxu0 %v2313
    %3685 = vmatpush1.msra.mxu0 %v2312
    %3686 = vmatprep.subr.mxu0 %v2317
    %3687 = vmatpush1.msra.mxu0 %v2316
    %3688 = vmatprep.subr.mxu0 %v2321
    %3689 = vmatpush1.msra.mxu0 %v2320
    %3690 = vmatprep.subr.mxu0 %v2325
    %3691 = vmatpush1.msra.mxu0 %v2324
    %3692 = vmatprep.subr.mxu0 %v2329
    %3693 = vmatpush1.msra.mxu0 %v2328
    %3694 = vmatprep.subr.mxu0 %v2333
    %3695 = vmatpush1.msra.mxu0 %v2332
    %3696 = vmatprep.subr.mxu0 %v2337
    %3697 = vmatpush1.msra.mxu0 %v2336
    %3698 = vmatprep.subr.mxu0 %v2341
    %3699 = vmatpush1.msra.mxu0 %v2340
    %3700 = vmatprep.subr.mxu0 %v2345
    %3701 = vmatpush1.msra.mxu0 %v2344
    %3702 = vmatprep.subr.mxu0 %v2349
    %3703 = vmatpush1.msra.mxu0 %v2348
    %3704 = vmatprep.subr.mxu0 0.0
    %3705 = vmatpush1.msra.mxu0 0.0
    %3706 = vmatprep.subr.mxu0 0.0
    %3707 = vmatpush1.msra.mxu0 0.0
    %3708 = vmatprep.subr.mxu0 0.0
    %3709 = vmatpush1.msra.mxu0 0.0
    %3710 = vmatprep.subr.mxu0 0.0
    %3711 = vmatpush1.msra.mxu0 0.0
    %3712 = vmatprep.subr.mxu0 0.0
    %3713 = vmatpush1.msra.mxu0 0.0
    %3714 = vmatprep.subr.mxu0 0.0
    %3715 = vmatpush1.msra.mxu0 0.0
    %3716 = vmatprep.subr.mxu0 0.0
    %3717 = vmatpush1.msra.mxu0 0.0
    %3718 = vmatprep.subr.mxu0 0.0
    %3719 = vmatpush1.msra.mxu0 0.0
    %3720 = vmatprep.subr.mxu0 0.0
    %3721 = vmatpush1.msra.mxu0 0.0
    %3722 = vmatprep.subr.mxu0 0.0
    %3723 = vmatpush1.msra.mxu0 0.0
    %3724 = vmatprep.subr.mxu0 0.0
    %3725 = vmatpush1.msra.mxu0 0.0
    %3726 = vmatprep.subr.mxu0 0.0
    %3727 = vmatpush1.msra.mxu0 0.0
    %3728 = vmatprep.subr.mxu0 0.0
    %3729 = vmatpush1.msra.mxu0 0.0
    %3730 = vmatprep.subr.mxu0 0.0
    %3731 = vmatpush1.msra.mxu0 0.0
    %3732 = vmatprep.subr.mxu0 0.0
    %3733 = vmatpush1.msra.mxu0 0.0
    %3734 = vmatprep.subr.mxu0 0.0
    %3735 = vmatpush1.msra.mxu0 0.0
    %3736 = vmatprep.mubr.f32.mxu0 0.0
    %3737 = vmatmul.mubr.f32.gmra.mrb[0].mxu0 %v3600
    %v3738 = vpop.f32.mrb[0].mxu0
    %v3739 = vadd.f32 0.0, %v3738
    %v3740 = vpop.f32.mrb[0].mxu0
    %v3741 = vadd.f32 0.0, %v3740
    %3742 = vdwg.mxu0
    %v3743 = vadd.f32 %v3596, %v3668
    %v3744 = vadd.f32 %v3597, %v3670
    %v3745 = vadd.f32 %v3598, %v3739
    %v3746 = vadd.f32 %v3599, %v3741
    %v3747 = vxor.u32 %v3743, 2147483648
    %v3748 = vxor.u32 %v3744, 2147483648
    %v3749 = vxor.u32 %v3745, 2147483648
    %v3750 = vmul.f32 %v3747, 1.442695
    %v3751 = vpow.pop %v3750
    %v3752 = vmul.f32 %v3748, 1.442695
    %v3753 = vpow.pop %v3752
    %v3754 = vmul.f32 %v3749, 1.442695
    %v3755 = vpow.pop %v3754
    %v3756 = vadd.f32 %v3751, 1.0
    %v3757 = vadd.f32 %v3753, 1.0
    %v3758 = vadd.f32 %v3755, 1.0
    %v3759 = vrcp.pop %v3756
    %v3760 = vmul.f32 1.0, %v3759
    %v3761 = vrcp.pop %v3757
    %v3762 = vmul.f32 1.0, %v3761
    %v3763 = vrcp.pop %v3758
    %v3764 = vmul.f32 1.0, %v3763
    %v3765 = vtanh.pop %v3746
    %v3766 = vld [vmem:[#allocation5] sm:$0xff]
    %v3767 = vmul.f32 %v3762, %v3766
    %v3768 = vmul.f32 %v3760, %v3765
    %v3769 = vadd.f32 %v3767, %v3768
    %v3770 = vtanh.pop %v3769
    %v3771 = vmul.f32 %v3764, %v3770
    %3772 = vst [vmem:[#allocation5] sm:$0xff] %v3769
    %3773 = vst [vmem:[#allocation4] sm:$0xff] %v3771
    %v3774 = vld [vmem:[#allocation4] sm:$0xff]
    %v3775 = vld [vmem:[#allocation12] sm:$0xff]
    %v3776 = vld [vmem:[#allocation12 + $0x8] sm:$0xff]
    %v3777 = vld [vmem:[#allocation12 + $0x10] sm:$0xff]
    %v3778 = vld [vmem:[#allocation12 + $0x18] sm:$0xff]
    %v3779 = vld [vmem:[#allocation12 + $0x20] sm:$0xff]
    %v3780 = vld [vmem:[#allocation12 + $0x28] sm:$0xff]
    %v3781 = vld [vmem:[#allocation12 + $0x30] sm:$0xff]
    %v3782 = vld [vmem:[#allocation12 + $0x38] sm:$0xff]
    %v3783 = vld [vmem:[#allocation12 + $0x40] sm:$0xff]
    %v3784 = vld [vmem:[#allocation12 + $0x48] sm:$0xff]
    %v3785 = vld [vmem:[#allocation12 + $0x50] sm:$0xff]
    %v3786 = vld [vmem:[#allocation12 + $0x58] sm:$0xff]
    %v3787 = vld [vmem:[#allocation12 + $0x60] sm:$0xff]
    %v3788 = vld [vmem:[#allocation12 + $0x68] sm:$0xff]
    %v3789 = vld [vmem:[#allocation12 + $0x70] sm:$0xff]
    %v3790 = vld [vmem:[#allocation12 + $0x78] sm:$0xff]
    %v3791 = vld [vmem:[%s5] sm:$0x1]
    %v3793 = vlaneseq
    %v3794 = vshrl.u32 %v3793, 7
    %v3795 = vsub.s32 0, %v3794
    %v3796 = vrot.slane %v3791, %v3795
    %3798 = vmatprep.subr.mxu0 0.0
    %3799 = vmatpush1.msra.mxu0 %v3775
    %3800 = vmatprep.subr.mxu0 0.0
    %3801 = vmatpush1.msra.mxu0 %v3776
    %3802 = vmatprep.subr.mxu0 0.0
    %3803 = vmatpush1.msra.mxu0 %v3777
    %3804 = vmatprep.subr.mxu0 0.0
    %3805 = vmatpush1.msra.mxu0 %v3778
    %3806 = vmatprep.subr.mxu0 0.0
    %3807 = vmatpush1.msra.mxu0 %v3779
    %3808 = vmatprep.subr.mxu0 0.0
    %3809 = vmatpush1.msra.mxu0 %v3780
    %3810 = vmatprep.subr.mxu0 0.0
    %3811 = vmatpush1.msra.mxu0 %v3781
    %3812 = vmatprep.subr.mxu0 0.0
    %3813 = vmatpush1.msra.mxu0 %v3782
    %3814 = vmatprep.subr.mxu0 0.0
    %3815 = vmatpush1.msra.mxu0 %v3783
    %3816 = vmatprep.subr.mxu0 0.0
    %3817 = vmatpush1.msra.mxu0 %v3784
    %3818 = vmatprep.subr.mxu0 0.0
    %3819 = vmatpush1.msra.mxu0 %v3785
    %3820 = vmatprep.subr.mxu0 0.0
    %3821 = vmatpush1.msra.mxu0 %v3786
    %3822 = vmatprep.subr.mxu0 0.0
    %3823 = vmatpush1.msra.mxu0 %v3787
    %3824 = vmatprep.subr.mxu0 0.0
    %3825 = vmatpush1.msra.mxu0 %v3788
    %3826 = vmatprep.subr.mxu0 0.0
    %3827 = vmatpush1.msra.mxu0 %v3789
    %3828 = vmatprep.subr.mxu0 0.0
    %3829 = vmatpush1.msra.mxu0 %v3790
    %3830 = vmatprep.subr.mxu0 0.0
    %3831 = vmatpush1.msra.mxu0 0.0
    %3832 = vmatprep.subr.mxu0 0.0
    %3833 = vmatpush1.msra.mxu0 0.0
    %3834 = vmatprep.subr.mxu0 0.0
    %3835 = vmatpush1.msra.mxu0 0.0
    %3836 = vmatprep.subr.mxu0 0.0
    %3837 = vmatpush1.msra.mxu0 0.0
    %3838 = vmatprep.subr.mxu0 0.0
    %3839 = vmatpush1.msra.mxu0 0.0
    %3840 = vmatprep.subr.mxu0 0.0
    %3841 = vmatpush1.msra.mxu0 0.0
    %3842 = vmatprep.subr.mxu0 0.0
    %3843 = vmatpush1.msra.mxu0 0.0
    %3844 = vmatprep.subr.mxu0 0.0
    %3845 = vmatpush1.msra.mxu0 0.0
    %3846 = vmatprep.subr.mxu0 0.0
    %3847 = vmatpush1.msra.mxu0 0.0
    %3848 = vmatprep.subr.mxu0 0.0
    %3849 = vmatpush1.msra.mxu0 0.0
    %3850 = vmatprep.subr.mxu0 0.0
    %3851 = vmatpush1.msra.mxu0 0.0
    %3852 = vmatprep.subr.mxu0 0.0
    %3853 = vmatpush1.msra.mxu0 0.0
    %3854 = vmatprep.subr.mxu0 0.0
    %3855 = vmatpush1.msra.mxu0 0.0
    %3856 = vmatprep.subr.mxu0 0.0
    %3857 = vmatpush1.msra.mxu0 0.0
    %3858 = vmatprep.subr.mxu0 0.0
    %3859 = vmatpush1.msra.mxu0 0.0
    %3860 = vmatprep.subr.mxu0 0.0
    %3861 = vmatpush1.msra.mxu0 0.0
    %3862 = vmatprep.mubr.f32.mxu0 0.0
    %3863 = vmatmul.mubr.f32.gmra.mrb[0].mxu0 %v3774
    %v3864 = vpop.f32.mrb[0].mxu0
    %v3865 = vadd.f32 %v3796, %v3864
    %v3866 = vpop.f32.mrb[0].mxu0
    %3867 = vdwg.mxu0
    %3868 = vst [vmem:[#allocation14] sm:$0xff] %v3865
    // Predicated region
    $region42: #{tpu_custom_call.1} parent=1 // pred_check
      _
    $region43: #{tpu_custom_call.1} parent=1 // pred_check_branch
      %3870 = sbr.rel (0) target = $region45
    $region44: #{tpu_custom_call.1} parent=1 // pred_region
      %s3872 = ssub.s32 128, 128
      %3873 = vsyncadd [#allocation8], %s3872
      %s3875 = sshll.u32 [#allocation14], 4
      %s3876 = int_to_ptr.vmem [resolvable:$true] %s3875
      %3878 = dma.vmem_to_hbm [thread:$0]  %s3876, 128, %s6, [#allocation8]
    $region45: #{tpu_custom_call.1} parent=1 // pred_fallthru
      _
    // Predicated region
    $region46: #{tpu_custom_call.1} parent=1 // pred_check
      _
    $region47: #{tpu_custom_call.1} parent=1 // pred_check_branch
      %3880 = sbr.rel (0) target = $region49
    $region48: #{tpu_custom_call.1} parent=1 // pred_region
      %3881 = dma.done [#allocation8], 128
    $region49: #{tpu_custom_call.1} parent=1 // pred_fallthru
      _
    %3882 = vsyncpa [#allocation7], 1
    %3883 = vsyncpa [#allocation10], 1
    %3884 = vsyncpa [#allocation13], 1
    %3885 = vsyncpa [#allocation8], 1

</llo_original>
